<compile_context>
chip_gen: v7x
topology: tpu7x:2x2x1
jax: 0.10.0
libtpu: 0.0.40
codegen_flags: <defaults>
</compile_context>

<pallas_src>
import functools

import jax
import jax.numpy as jnp
import numpy as np
from jax.experimental import pallas as pl
from jax.experimental.pallas import tpu as pltpu

EPS = 1e-5  # BatchNorm3d default eps


# --------------------------------------------------------------------------- kernels
def _conv1_stats_kernel(x_ref, w_ref, h_ref, s_ref, q_ref):
    # x: (1,1,Cin,HW) bf16   w: (Cout,Cin) bf16   h/s/q: f32 outputs
    h = jnp.dot(w_ref[...], x_ref[0, 0], preferred_element_type=jnp.float32)
    h_ref[0, 0] = h
    s_ref[0, 0] = jnp.sum(h, axis=-1, keepdims=True)
    q_ref[0, 0] = jnp.sum(h * h, axis=-1, keepdims=True)


def _conv2_stats_kernel(hm_ref, hc_ref, hp_ref, ss_ref, w2_ref, msk_ref,
                        h2_ref, s_ref, q_ref, *, W):
    # hm/hc/hp: (1,1,Cout,HW) f32 pre-BN1 conv1 planes at depths d-1, d, d+1 (clamped)
    # ss: (Cout,2) f32 packed [scale, shift] for BN1; w2: (27,Cout,Cout) bf16 tap mats
    # msk: (9,HW) f32 in-plane boundary masks; h2/s/q: outputs
    HW = hc_ref.shape[3]
    scale = ss_ref[:, 0:1]
    shift = ss_ref[:, 1:2]

    def bn_relu(ref):
        return jnp.maximum(ref[0, 0] * scale + shift, 0.0)

    planes = (bn_relu(hm_ref), bn_relu(hc_ref), bn_relu(hp_ref))
    mask_rows = [msk_ref[j:j + 1, :] for j in range(9)]  # hoisted out of the tap loop

    acc_by_kd = []
    for kd in range(3):
        plane = planes[kd]
        acc = None
        for kh in range(3):
            for kw in range(3):
                tap = kd * 9 + kh * 3 + kw
                off = (kh - 1) * W + (kw - 1)
                if off == 0:
                    shifted = plane
                else:
                    # shifted[:, p] = plane[:, (p + off) % HW]  (wrap masked below)
                    shifted = pltpu.roll(plane, shift=(-off) % HW, axis=1)
                if kh == 1 and kw == 1:
                    masked = shifted
                else:
                    masked = shifted * mask_rows[kh * 3 + kw]
                contrib = jnp.dot(w2_ref[tap], masked.astype(jnp.bfloat16),
                                  preferred_element_type=jnp.float32)
                acc = contrib if acc is None else acc + contrib
        acc_by_kd.append(acc)

    d = pl.program_id(1)
    keep_lo = jnp.where(d > 0, 1.0, 0.0)                       # kd=0 valid iff d>0
    keep_hi = jnp.where(d < pl.num_programs(1) - 1, 1.0, 0.0)  # kd=2 valid iff d<D-1
    h2 = acc_by_kd[1] + keep_lo * acc_by_kd[0] + keep_hi * acc_by_kd[2]

    h2_ref[0, 0] = h2
    s_ref[0, 0] = jnp.sum(h2, axis=-1, keepdims=True)
    q_ref[0, 0] = jnp.sum(h2 * h2, axis=-1, keepdims=True)


def _bn_relu_kernel(h_ref, ss_ref, o_ref):
    scale = ss_ref[:, 0:1]
    shift = ss_ref[:, 1:2]
    o_ref[0, 0] = jnp.maximum(h_ref[0, 0] * scale + shift, 0.0)


# --------------------------------------------------------------------------- wrapper
def _affine_from_stats(s, q, count, gamma, beta):
    """Fold batch stats (sum, sumsq) into per-channel scale/shift, packed (C,2)."""
    mu = s / count
    var = q / count - mu * mu                      # biased variance (BN training mode)
    scale = gamma * jax.lax.rsqrt(var + EPS)
    shift = beta - mu * scale
    return jnp.stack([scale, shift], axis=-1).astype(jnp.float32)


def bottleneck_forward(x_ncdhw, params):
    """Pallas forward of BottleneckLayer (training-mode BatchNorm). NCDHW in/out."""
    w1, b1, g1, be1, w2, b2, g2, be2 = params
    del b1, b2  # cancelled exactly by training-mode BN mean subtraction (dead work)
    N, Cin, D, H, W = x_ncdhw.shape
    Cout = w1.shape[0]
    HW = H * W
    M = N * D * HW

    cparams = pltpu.CompilerParams(
        dimension_semantics=("parallel", "parallel"),   # megacore sharding on v7x
        vmem_limit_bytes=32 * 1024 * 1024,              # explicit, fits all chips
    )

    # NCDHW -> (N, D, Cin, H*W): spatial plane on the 128-lane axis.
    x_t = jnp.transpose(x_ncdhw, (0, 2, 1, 3, 4)).reshape(N, D, Cin, HW)
    x_t = x_t.astype(jnp.bfloat16)                                   # bf16 MXU operand
    w1m = w1[:, :, 0, 0, 0].astype(jnp.bfloat16)                     # (Cout, Cin)
    # (Cout, Cin, 3,3,3) -> (27, Cout, Cin): one channel-mixing matrix per tap.
    w2t = jnp.transpose(w2, (2, 3, 4, 0, 1)).reshape(27, Cout, Cout).astype(jnp.bfloat16)

    # Boundary masks for the 9 in-plane (kh, kw) taps, flattened over H*W.
    hh = jnp.arange(H).reshape(H, 1)
    ww = jnp.arange(W).reshape(1, W)
    masks = []
    for kh in range(3):
        for kw in range(3):
            valid = ((hh + kh - 1 >= 0) & (hh + kh - 1 < H)
                     & (ww + kw - 1 >= 0) & (ww + kw - 1 < W))
            masks.append(valid.reshape(HW))
    masks = jnp.stack(masks).astype(jnp.float32)                     # (9, HW)

    plane_spec = pl.BlockSpec((1, 1, Cout, HW), lambda n, d: (n, d, 0, 0))
    stat_spec = pl.BlockSpec((1, 1, Cout, 1), lambda n, d: (n, d, 0, 0))
    plane_shape = jax.ShapeDtypeStruct((N, D, Cout, HW), jnp.float32)
    stat_shape = jax.ShapeDtypeStruct((N, D, Cout, 1), jnp.float32)

    # --- kernel 1: conv1 (1x1x1) + partial BN1 stats ---------------------------------
    h1, s1, q1 = pl.pallas_call(
        _conv1_stats_kernel,
        grid=(N, D),
        in_specs=[
            pl.BlockSpec((1, 1, Cin, HW), lambda n, d: (n, d, 0, 0)),
            pl.BlockSpec((Cout, Cin), lambda n, d: (0, 0)),
        ],
        out_specs=[plane_spec, stat_spec, stat_spec],
        out_shape=[plane_shape, stat_shape, stat_shape],
        compiler_params=cparams,
    )(x_t, w1m)

    ss1 = _affine_from_stats(jnp.sum(s1, axis=(0, 1, 3)),
                             jnp.sum(q1, axis=(0, 1, 3)), M, g1, be1)

    # --- kernel 2: BN1+ReLU on the fly, 3x3x3 conv as 27 tap matmuls, BN2 stats ------
    h2, s2, q2 = pl.pallas_call(
        functools.partial(_conv2_stats_kernel, W=W),
        grid=(N, D),
        in_specs=[
            pl.BlockSpec((1, 1, Cout, HW),
                         lambda n, d: (n, jnp.maximum(d - 1, 0), 0, 0)),
            pl.BlockSpec((1, 1, Cout, HW), lambda n, d: (n, d, 0, 0)),
            pl.BlockSpec((1, 1, Cout, HW),
                         lambda n, d: (n, jnp.minimum(d + 1, D - 1), 0, 0)),
            pl.BlockSpec((Cout, 2), lambda n, d: (0, 0)),
            pl.BlockSpec((27, Cout, Cout), lambda n, d: (0, 0, 0)),
            pl.BlockSpec((9, HW), lambda n, d: (0, 0)),
        ],
        out_specs=[plane_spec, stat_spec, stat_spec],
        out_shape=[plane_shape, stat_shape, stat_shape],
        compiler_params=cparams,
    )(h1, h1, h1, ss1, w2t, masks)

    ss2 = _affine_from_stats(jnp.sum(s2, axis=(0, 1, 3)),
                             jnp.sum(q2, axis=(0, 1, 3)), M, g2, be2)

    # --- kernel 3: BN2 + ReLU ---------------------------------------------------------
    y2 = pl.pallas_call(
        _bn_relu_kernel,
        grid=(N, D),
        in_specs=[plane_spec, pl.BlockSpec((Cout, 2), lambda n, d: (0, 0))],
        out_specs=plane_spec,
        out_shape=plane_shape,
        compiler_params=cparams,
    )(h2, ss2)

    # (N, D, Cout, H, W) -> NCDHW
    return jnp.transpose(y2.reshape(N, D, Cout, H, W), (0, 2, 1, 3, 4))


# ------------------------------------------------------------------------- reference
def reference_forward(x, params):
    """Pure-JAX (lax.conv, f32 HIGHEST) reference, biases included."""
    w1, b1, g1, be1, w2, b2, g2, be2 = params

    def bn_relu(h, g, b):
        mu = jnp.mean(h, axis=(0, 2, 3, 4), keepdims=True)
        var = jnp.mean(jnp.square(h - mu), axis=(0, 2, 3, 4), keepdims=True)
        y = (h - mu) * jax.lax.rsqrt(var + EPS)
        y = y * g.reshape(1, -1, 1, 1, 1) + b.reshape(1, -1, 1, 1, 1)
        return jnp.maximum(y, 0.0)

    dn1 = jax.lax.conv_dimension_numbers(x.shape, w1.shape, ("NCDHW", "OIDHW", "NCDHW"))
    h = jax.lax.conv_general_dilated(
        x, w1, (1, 1, 1), "VALID", dimension_numbers=dn1,
        precision=jax.lax.Precision.HIGHEST) + b1.reshape(1, -1, 1, 1, 1)
    h = bn_relu(h, g1, be1)
    dn2 = jax.lax.conv_dimension_numbers(h.shape, w2.shape, ("NCDHW", "OIDHW", "NCDHW"))
    h = jax.lax.conv_general_dilated(
        h, w2, (1, 1, 1), ((1, 1), (1, 1), (1, 1)), dimension_numbers=dn2,
        precision=jax.lax.Precision.HIGHEST) + b2.reshape(1, -1, 1, 1, 1)
    return bn_relu(h, g2, be2)


# ------------------------------------------------------------------------------ main
if __name__ == "__main__":
    N, Cin, Cout, D, H, W = 2, 4, 8, 4, 16, 16

    key = jax.random.PRNGKey(0)
    kx, k1, k2, k3, k4, k5, k6 = jax.random.split(key, 7)

    x = jax.random.normal(kx, (N, Cin, D, H, W), dtype=jnp.float32)

    # Parameters (PyTorch shapes), deterministic synthetic init.
    w1 = jax.random.normal(k1, (Cout, Cin, 1, 1, 1), dtype=jnp.float32) * 0.2
    b1 = jax.random.normal(k2, (Cout,), dtype=jnp.float32) * 0.1
    w2 = jax.random.normal(k3, (Cout, Cout, 3, 3, 3), dtype=jnp.float32) * 0.1
    b2 = jax.random.normal(k4, (Cout,), dtype=jnp.float32) * 0.1
    g1 = 1.0 + 0.1 * jax.random.normal(k5, (Cout,), dtype=jnp.float32)
    be1 = jnp.zeros((Cout,), dtype=jnp.float32)
    g2 = 1.0 + 0.1 * jax.random.normal(k6, (Cout,), dtype=jnp.float32)
    be2 = jnp.zeros((Cout,), dtype=jnp.float32)
    params = (w1, b1, g1, be1, w2, b2, g2, be2)

    out = jax.block_until_ready(jax.jit(bottleneck_forward)(x, params))
    ref = jax.block_until_ready(reference_forward(x, params))

    assert out.shape == (N, Cout, D, H, W)
    # bf16 MXU operands (f32 accumulation) vs the f32/HIGHEST reference give ~1e-2
    # level differences after batch-norm rescaling; tolerance chosen accordingly.
    np.testing.assert_allclose(np.asarray(out), np.asarray(ref), rtol=5e-2, atol=5e-2)
    # TODO(synk): BatchNorm running_mean/running_var buffer updates (module training
    # state) are not modeled; only the training-mode forward output is reproduced.
    print("KERNEL_OK")
</pallas_src>

<mosaic_0001>
module attributes {stable_mosaic.version = 11 : i64} {
  func.func @_conv1_stats_kernel(%arg0: i32, %arg1: i32, %arg2: memref<1x1x4x256xbf16, #tpu.memory_space<vmem>>, %arg3: memref<8x4xbf16, #tpu.memory_space<vmem>>, %arg4: memref<1x1x8x256xf32, #tpu.memory_space<vmem>>, %arg5: memref<1x1x8x1xf32, #tpu.memory_space<vmem>>, %arg6: memref<1x1x8x1xf32, #tpu.memory_space<vmem>>) attributes {dimension_semantics = [#tpu.dimension_semantics<parallel>, #tpu.dimension_semantics<parallel>], iteration_bounds = array<i64: 2, 4>, scalar_prefetch = 0 : i64, scratch_operands = 0 : i64, tpu.core_type = #tpu.core_type<tc>, window_params = [{transform_indices = @transform_0, window_bounds = array<i64: 1, 1, 4, 256>}, {pipeline_mode = #tpu.pipeline_mode<synchronous>, transform_indices = @transform_1, window_bounds = array<i64: 8, 4>}, {transform_indices = @transform_2, window_bounds = array<i64: 1, 1, 8, 256>}, {transform_indices = @transform_3, window_bounds = array<i64: 1, 1, 8, 1>}, {transform_indices = @transform_4, window_bounds = array<i64: 1, 1, 8, 1>}]} {
    %c0 = arith.constant 0 : index
    %c0_0 = arith.constant 0 : index
    %0 = vector.load %arg3[%c0, %c0_0] : memref<8x4xbf16, #tpu.memory_space<vmem>>, vector<8x4xbf16>
    %c0_1 = arith.constant 0 : index
    %c0_2 = arith.constant 0 : index
    %c0_3 = arith.constant 0 : index
    %c0_4 = arith.constant 0 : index
    %1 = vector.load %arg2[%c0_1, %c0_2, %c0_3, %c0_4] : memref<1x1x4x256xbf16, #tpu.memory_space<vmem>>, vector<1x1x4x256xbf16>
    %2 = vector.shape_cast %1 : vector<1x1x4x256xbf16> to vector<4x256xbf16>
    %cst = arith.constant dense<0.000000e+00> : vector<8x256xf32>
    %3 = tpu.matmul %0, %2, %cst {dimension_numbers = #tpu.dot_dimension_numbers<[1], [0], [0], [1], [0, 0, 1, 1], [], []>} : vector<8x4xbf16>, vector<4x256xbf16>, vector<8x256xf32> -> vector<8x256xf32>
    %c0_5 = arith.constant 0 : index
    %c0_6 = arith.constant 0 : index
    %c0_7 = arith.constant 0 : index
    %c0_8 = arith.constant 0 : index
    %4 = vector.load %arg4[%c0_5, %c0_6, %c0_7, %c0_8] : memref<1x1x8x256xf32, #tpu.memory_space<vmem>>, vector<1x1x8x256xf32>
    %5 = vector.shape_cast %4 : vector<1x1x8x256xf32> to vector<8x256xf32>
    %6 = vector.shape_cast %3 : vector<8x256xf32> to vector<1x1x8x256xf32>
    tpu.vector_store %arg4[%c0_5, %c0_6, %c0_7, %c0_8], %6 {strides = array<i32>} : memref<1x1x8x256xf32, #tpu.memory_space<vmem>>, vector<1x1x8x256xf32>,
    %cst_9 = arith.constant dense<0.000000e+00> : vector<8xf32>
    %7 = vector.multi_reduction <add>, %3, %cst_9 [1] : vector<8x256xf32> to vector<8xf32>
    %8 = vector.shape_cast %7 : vector<8xf32> to vector<8x1xf32>
    %c0_10 = arith.constant 0 : index
    %c0_11 = arith.constant 0 : index
    %c0_12 = arith.constant 0 : index
    %c0_13 = arith.constant 0 : index
    %9 = vector.load %arg5[%c0_10, %c0_11, %c0_12, %c0_13] : memref<1x1x8x1xf32, #tpu.memory_space<vmem>>, vector<1x1x8x1xf32>
    %10 = vector.shape_cast %9 : vector<1x1x8x1xf32> to vector<8x1xf32>
    %11 = vector.shape_cast %8 : vector<8x1xf32> to vector<1x1x8x1xf32>
    tpu.vector_store %arg5[%c0_10, %c0_11, %c0_12, %c0_13], %11 {strides = array<i32>} : memref<1x1x8x1xf32, #tpu.memory_space<vmem>>, vector<1x1x8x1xf32>,
    %12 = arith.mulf %3, %3 : vector<8x256xf32>
    %cst_14 = arith.constant dense<0.000000e+00> : vector<8xf32>
    %13 = vector.multi_reduction <add>, %12, %cst_14 [1] : vector<8x256xf32> to vector<8xf32>
    %14 = vector.shape_cast %13 : vector<8xf32> to vector<8x1xf32>
    %c0_15 = arith.constant 0 : index
    %c0_16 = arith.constant 0 : index
    %c0_17 = arith.constant 0 : index
    %c0_18 = arith.constant 0 : index
    %15 = vector.load %arg6[%c0_15, %c0_16, %c0_17, %c0_18] : memref<1x1x8x1xf32, #tpu.memory_space<vmem>>, vector<1x1x8x1xf32>
    %16 = vector.shape_cast %15 : vector<1x1x8x1xf32> to vector<8x1xf32>
    %17 = vector.shape_cast %14 : vector<8x1xf32> to vector<1x1x8x1xf32>
    tpu.vector_store %arg6[%c0_15, %c0_16, %c0_17, %c0_18], %17 {strides = array<i32>} : memref<1x1x8x1xf32, #tpu.memory_space<vmem>>, vector<1x1x8x1xf32>,
    return
  }
  func.func @transform_0(%arg0: i32, %arg1: i32) -> (i32, i32, i32, i32) {
    %c0_i32 = arith.constant 0 : i32
    %c0_i32_0 = arith.constant 0 : i32
    %c0_i32_1 = arith.constant 0 : i32
    return %arg0, %arg1, %c0_i32, %c0_i32_0 : i32, i32, i32, i32
  }
  func.func @transform_1(%arg0: i32, %arg1: i32) -> (i32, i32) {
    %c0_i32 = arith.constant 0 : i32
    %c0_i32_0 = arith.constant 0 : i32
    %c0_i32_1 = arith.constant 0 : i32
    return %c0_i32, %c0_i32_0 : i32, i32
  }
  func.func @transform_2(%arg0: i32, %arg1: i32) -> (i32, i32, i32, i32) {
    %c0_i32 = arith.constant 0 : i32
    %c0_i32_0 = arith.constant 0 : i32
    %c0_i32_1 = arith.constant 0 : i32
    return %arg0, %arg1, %c0_i32, %c0_i32_0 : i32, i32, i32, i32
  }
  func.func @transform_3(%arg0: i32, %arg1: i32) -> (i32, i32, i32, i32) {
    %c0_i32 = arith.constant 0 : i32
    %c0_i32_0 = arith.constant 0 : i32
    %c0_i32_1 = arith.constant 0 : i32
    return %arg0, %arg1, %c0_i32, %c0_i32_0 : i32, i32, i32, i32
  }
  func.func @transform_4(%arg0: i32, %arg1: i32) -> (i32, i32, i32, i32) {
    %c0_i32 = arith.constant 0 : i32
    %c0_i32_0 = arith.constant 0 : i32
    %c0_i32_1 = arith.constant 0 : i32
    return %arg0, %arg1, %c0_i32, %c0_i32_0 : i32, i32, i32, i32
  }
}

module attributes {stable_mosaic.version = 11 : i64} {
  func.func @_bn_relu_kernel(%arg0: i32, %arg1: i32, %arg2: memref<1x1x8x256xf32, #tpu.memory_space<vmem>>, %arg3: memref<8x2xf32, #tpu.memory_space<vmem>>, %arg4: memref<1x1x8x256xf32, #tpu.memory_space<vmem>>) attributes {dimension_semantics = [#tpu.dimension_semantics<parallel>, #tpu.dimension_semantics<parallel>], iteration_bounds = array<i64: 2, 4>, scalar_prefetch = 0 : i64, scratch_operands = 0 : i64, tpu.core_type = #tpu.core_type<tc>, window_params = [{transform_indices = @transform_0, window_bounds = array<i64: 1, 1, 8, 256>}, {pipeline_mode = #tpu.pipeline_mode<synchronous>, transform_indices = @transform_1, window_bounds = array<i64: 8, 2>}, {transform_indices = @transform_2, window_bounds = array<i64: 1, 1, 8, 256>}]} {
    %c0 = arith.constant 0 : index
    %c0_0 = arith.constant 0 : index
    %0 = vector.load %arg3[%c0, %c0_0] : memref<8x2xf32, #tpu.memory_space<vmem>>, vector<8x1xf32>
    %c0_1 = arith.constant 0 : index
    %c1 = arith.constant 1 : index
    %1 = vector.load %arg3[%c0_1, %c1] : memref<8x2xf32, #tpu.memory_space<vmem>>, vector<8x1xf32>
    %c0_2 = arith.constant 0 : index
    %c0_3 = arith.constant 0 : index
    %c0_4 = arith.constant 0 : index
    %c0_5 = arith.constant 0 : index
    %2 = vector.load %arg2[%c0_2, %c0_3, %c0_4, %c0_5] : memref<1x1x8x256xf32, #tpu.memory_space<vmem>>, vector<1x1x8x256xf32>
    %3 = vector.shape_cast %2 : vector<1x1x8x256xf32> to vector<8x256xf32>
    %4 = vector.broadcast %0 : vector<8x1xf32> to vector<8x256xf32>
    %5 = arith.mulf %3, %4 : vector<8x256xf32>
    %6 = vector.broadcast %1 : vector<8x1xf32> to vector<8x256xf32>
    %7 = arith.addf %5, %6 : vector<8x256xf32>
    %cst = arith.constant 0.000000e+00 : f32
    %8 = vector.broadcast %cst : f32 to vector<8x256xf32>
    %9 = arith.maximumf %7, %8 : vector<8x256xf32>
    %c0_6 = arith.constant 0 : index
    %c0_7 = arith.constant 0 : index
    %c0_8 = arith.constant 0 : index
    %c0_9 = arith.constant 0 : index
    %10 = vector.load %arg4[%c0_6, %c0_7, %c0_8, %c0_9] : memref<1x1x8x256xf32, #tpu.memory_space<vmem>>, vector<1x1x8x256xf32>
    %11 = vector.shape_cast %10 : vector<1x1x8x256xf32> to vector<8x256xf32>
    %12 = vector.shape_cast %9 : vector<8x256xf32> to vector<1x1x8x256xf32>
    tpu.vector_store %arg4[%c0_6, %c0_7, %c0_8, %c0_9], %12 {strides = array<i32>} : memref<1x1x8x256xf32, #tpu.memory_space<vmem>>, vector<1x1x8x256xf32>,
    return
  }
  func.func @transform_0(%arg0: i32, %arg1: i32) -> (i32, i32, i32, i32) {
    %c0_i32 = arith.constant 0 : i32
    %c0_i32_0 = arith.constant 0 : i32
    %c0_i32_1 = arith.constant 0 : i32
    return %arg0, %arg1, %c0_i32, %c0_i32_0 : i32, i32, i32, i32
  }
  func.func @transform_1(%arg0: i32, %arg1: i32) -> (i32, i32) {
    %c0_i32 = arith.constant 0 : i32
    %c0_i32_0 = arith.constant 0 : i32
    %c0_i32_1 = arith.constant 0 : i32
    return %c0_i32, %c0_i32_0 : i32, i32
  }
  func.func @transform_2(%arg0: i32, %arg1: i32) -> (i32, i32, i32, i32) {
    %c0_i32 = arith.constant 0 : i32
    %c0_i32_0 = arith.constant 0 : i32
    %c0_i32_1 = arith.constant 0 : i32
    return %arg0, %arg1, %c0_i32, %c0_i32_0 : i32, i32, i32, i32
  }
}

module attributes {stable_mosaic.version = 11 : i64} {
  func.func @_conv2_stats_kernel(%arg0: i32, %arg1: i32, %arg2: memref<1x1x8x256xf32, #tpu.memory_space<vmem>>, %arg3: memref<1x1x8x256xf32, #tpu.memory_space<vmem>>, %arg4: memref<1x1x8x256xf32, #tpu.memory_space<vmem>>, %arg5: memref<8x2xf32, #tpu.memory_space<vmem>>, %arg6: memref<27x8x8xbf16, #tpu.memory_space<vmem>>, %arg7: memref<9x256xf32, #tpu.memory_space<vmem>>, %arg8: memref<1x1x8x256xf32, #tpu.memory_space<vmem>>, %arg9: memref<1x1x8x1xf32, #tpu.memory_space<vmem>>, %arg10: memref<1x1x8x1xf32, #tpu.memory_space<vmem>>) attributes {dimension_semantics = [#tpu.dimension_semantics<parallel>, #tpu.dimension_semantics<parallel>], iteration_bounds = array<i64: 2, 4>, scalar_prefetch = 0 : i64, scratch_operands = 0 : i64, tpu.core_type = #tpu.core_type<tc>, window_params = [{transform_indices = @transform_0, window_bounds = array<i64: 1, 1, 8, 256>}, {transform_indices = @transform_1, window_bounds = array<i64: 1, 1, 8, 256>}, {transform_indices = @transform_2, window_bounds = array<i64: 1, 1, 8, 256>}, {pipeline_mode = #tpu.pipeline_mode<synchronous>, transform_indices = @transform_3, window_bounds = array<i64: 8, 2>}, {pipeline_mode = #tpu.pipeline_mode<synchronous>, transform_indices = @transform_4, window_bounds = array<i64: 27, 8, 8>}, {pipeline_mode = #tpu.pipeline_mode<synchronous>, transform_indices = @transform_5, window_bounds = array<i64: 9, 256>}, {transform_indices = @transform_6, window_bounds = array<i64: 1, 1, 8, 256>}, {transform_indices = @transform_7, window_bounds = array<i64: 1, 1, 8, 1>}, {transform_indices = @transform_8, window_bounds = array<i64: 1, 1, 8, 1>}]} {
    %c0 = arith.constant 0 : index
    %c0_0 = arith.constant 0 : index
    %0 = vector.load %arg5[%c0, %c0_0] : memref<8x2xf32, #tpu.memory_space<vmem>>, vector<8x1xf32>
    %c0_1 = arith.constant 0 : index
    %c1 = arith.constant 1 : index
    %1 = vector.load %arg5[%c0_1, %c1] : memref<8x2xf32, #tpu.memory_space<vmem>>, vector<8x1xf32>
    %c0_2 = arith.constant 0 : index
    %c0_3 = arith.constant 0 : index
    %c0_4 = arith.constant 0 : index
    %c0_5 = arith.constant 0 : index
    %2 = vector.load %arg2[%c0_2, %c0_3, %c0_4, %c0_5] : memref<1x1x8x256xf32, #tpu.memory_space<vmem>>, vector<1x1x8x256xf32>
    %3 = vector.shape_cast %2 : vector<1x1x8x256xf32> to vector<8x256xf32>
    %4 = vector.broadcast %0 : vector<8x1xf32> to vector<8x256xf32>
    %5 = arith.mulf %3, %4 : vector<8x256xf32>
    %6 = vector.broadcast %1 : vector<8x1xf32> to vector<8x256xf32>
    %7 = arith.addf %5, %6 : vector<8x256xf32>
    %cst = arith.constant 0.000000e+00 : f32
    %8 = vector.broadcast %cst : f32 to vector<8x256xf32>
    %9 = arith.maximumf %7, %8 : vector<8x256xf32>
    %c0_6 = arith.constant 0 : index
    %c0_7 = arith.constant 0 : index
    %c0_8 = arith.constant 0 : index
    %c0_9 = arith.constant 0 : index
    %10 = vector.load %arg3[%c0_6, %c0_7, %c0_8, %c0_9] : memref<1x1x8x256xf32, #tpu.memory_space<vmem>>, vector<1x1x8x256xf32>
    %11 = vector.shape_cast %10 : vector<1x1x8x256xf32> to vector<8x256xf32>
    %12 = vector.broadcast %0 : vector<8x1xf32> to vector<8x256xf32>
    %13 = arith.mulf %11, %12 : vector<8x256xf32>
    %14 = vector.broadcast %1 : vector<8x1xf32> to vector<8x256xf32>
    %15 = arith.addf %13, %14 : vector<8x256xf32>
    %cst_10 = arith.constant 0.000000e+00 : f32
    %16 = vector.broadcast %cst_10 : f32 to vector<8x256xf32>
    %17 = arith.maximumf %15, %16 : vector<8x256xf32>
    %c0_11 = arith.constant 0 : index
    %c0_12 = arith.constant 0 : index
    %c0_13 = arith.constant 0 : index
    %c0_14 = arith.constant 0 : index
    %18 = vector.load %arg4[%c0_11, %c0_12, %c0_13, %c0_14] : memref<1x1x8x256xf32, #tpu.memory_space<vmem>>, vector<1x1x8x256xf32>
    %19 = vector.shape_cast %18 : vector<1x1x8x256xf32> to vector<8x256xf32>
    %20 = vector.broadcast %0 : vector<8x1xf32> to vector<8x256xf32>
    %21 = arith.mulf %19, %20 : vector<8x256xf32>
    %22 = vector.broadcast %1 : vector<8x1xf32> to vector<8x256xf32>
    %23 = arith.addf %21, %22 : vector<8x256xf32>
    %cst_15 = arith.constant 0.000000e+00 : f32
    %24 = vector.broadcast %cst_15 : f32 to vector<8x256xf32>
    %25 = arith.maximumf %23, %24 : vector<8x256xf32>
    %c0_16 = arith.constant 0 : index
    %c0_17 = arith.constant 0 : index
    %26 = vector.load %arg7[%c0_16, %c0_17] : memref<9x256xf32, #tpu.memory_space<vmem>>, vector<1x256xf32>
    %c1_18 = arith.constant 1 : index
    %c0_19 = arith.constant 0 : index
    %27 = vector.load %arg7[%c1_18, %c0_19] : memref<9x256xf32, #tpu.memory_space<vmem>>, vector<1x256xf32>
    %c2 = arith.constant 2 : index
    %c0_20 = arith.constant 0 : index
    %28 = vector.load %arg7[%c2, %c0_20] : memref<9x256xf32, #tpu.memory_space<vmem>>, vector<1x256xf32>
    %c3 = arith.constant 3 : index
    %c0_21 = arith.constant 0 : index
    %29 = vector.load %arg7[%c3, %c0_21] : memref<9x256xf32, #tpu.memory_space<vmem>>, vector<1x256xf32>
    %c5 = arith.constant 5 : index
    %c0_22 = arith.constant 0 : index
    %30 = vector.load %arg7[%c5, %c0_22] : memref<9x256xf32, #tpu.memory_space<vmem>>, vector<1x256xf32>
    %c6 = arith.constant 6 : index
    %c0_23 = arith.constant 0 : index
    %31 = vector.load %arg7[%c6, %c0_23] : memref<9x256xf32, #tpu.memory_space<vmem>>, vector<1x256xf32>
    %c7 = arith.constant 7 : index
    %c0_24 = arith.constant 0 : index
    %32 = vector.load %arg7[%c7, %c0_24] : memref<9x256xf32, #tpu.memory_space<vmem>>, vector<1x256xf32>
    %c8 = arith.constant 8 : index
    %c0_25 = arith.constant 0 : index
    %33 = vector.load %arg7[%c8, %c0_25] : memref<9x256xf32, #tpu.memory_space<vmem>>, vector<1x256xf32>
    %c17_i32 = arith.constant 17 : i32
    %34 = tpu.dynamic_rotate %9 by %c17_i32 dim 1 : vector<8x256xf32>, i32 -> vector<8x256xf32>
    %35 = vector.broadcast %26 : vector<1x256xf32> to vector<8x256xf32>
    %36 = arith.mulf %34, %35 : vector<8x256xf32>
    %c0_26 = arith.constant 0 : index
    %c0_27 = arith.constant 0 : index
    %c0_28 = arith.constant 0 : index
    %37 = vector.load %arg6[%c0_26, %c0_27, %c0_28] : memref<27x8x8xbf16, #tpu.memory_space<vmem>>, vector<1x8x8xbf16>
    %38 = vector.shape_cast %37 : vector<1x8x8xbf16> to vector<8x8xbf16>
    %39 = arith.truncf %36 : vector<8x256xf32> to vector<8x256xbf16>
    %cst_29 = arith.constant dense<0.000000e+00> : vector<8x256xf32>
    %40 = tpu.matmul %38, %39, %cst_29 {dimension_numbers = #tpu.dot_dimension_numbers<[1], [0], [0], [1], [0, 0, 1, 1], [], []>} : vector<8x8xbf16>, vector<8x256xbf16>, vector<8x256xf32> -> vector<8x256xf32>
    %c16_i32 = arith.constant 16 : i32
    %41 = tpu.dynamic_rotate %9 by %c16_i32 dim 1 : vector<8x256xf32>, i32 -> vector<8x256xf32>
    %42 = vector.broadcast %27 : vector<1x256xf32> to vector<8x256xf32>
    %43 = arith.mulf %41, %42 : vector<8x256xf32>
    %c1_30 = arith.constant 1 : index
    %c0_31 = arith.constant 0 : index
    %c0_32 = arith.constant 0 : index
    %44 = vector.load %arg6[%c1_30, %c0_31, %c0_32] : memref<27x8x8xbf16, #tpu.memory_space<vmem>>, vector<1x8x8xbf16>
    %45 = vector.shape_cast %44 : vector<1x8x8xbf16> to vector<8x8xbf16>
    %46 = arith.truncf %43 : vector<8x256xf32> to vector<8x256xbf16>
    %cst_33 = arith.constant dense<0.000000e+00> : vector<8x256xf32>
    %47 = tpu.matmul %45, %46, %cst_33 {dimension_numbers = #tpu.dot_dimension_numbers<[1], [0], [0], [1], [0, 0, 1, 1], [], []>} : vector<8x8xbf16>, vector<8x256xbf16>, vector<8x256xf32> -> vector<8x256xf32>
    %48 = arith.addf %40, %47 : vector<8x256xf32>
    %c15_i32 = arith.constant 15 : i32
    %49 = tpu.dynamic_rotate %9 by %c15_i32 dim 1 : vector<8x256xf32>, i32 -> vector<8x256xf32>
    %50 = vector.broadcast %28 : vector<1x256xf32> to vector<8x256xf32>
    %51 = arith.mulf %49, %50 : vector<8x256xf32>
    %c2_34 = arith.constant 2 : index
    %c0_35 = arith.constant 0 : index
    %c0_36 = arith.constant 0 : index
    %52 = vector.load %arg6[%c2_34, %c0_35, %c0_36] : memref<27x8x8xbf16, #tpu.memory_space<vmem>>, vector<1x8x8xbf16>
    %53 = vector.shape_cast %52 : vector<1x8x8xbf16> to vector<8x8xbf16>
    %54 = arith.truncf %51 : vector<8x256xf32> to vector<8x256xbf16>
    %cst_37 = arith.constant dense<0.000000e+00> : vector<8x256xf32>
    %55 = tpu.matmul %53, %54, %cst_37 {dimension_numbers = #tpu.dot_dimension_numbers<[1], [0], [0], [1], [0, 0, 1, 1], [], []>} : vector<8x8xbf16>, vector<8x256xbf16>, vector<8x256xf32> -> vector<8x256xf32>
    %56 = arith.addf %48, %55 : vector<8x256xf32>
    %c1_i32 = arith.constant 1 : i32
    %57 = tpu.dynamic_rotate %9 by %c1_i32 dim 1 : vector<8x256xf32>, i32 -> vector<8x256xf32>
    %58 = vector.broadcast %29 : vector<1x256xf32> to vector<8x256xf32>
    %59 = arith.mulf %57, %58 : vector<8x256xf32>
    %c3_38 = arith.constant 3 : index
    %c0_39 = arith.constant 0 : index
    %c0_40 = arith.constant 0 : index
    %60 = vector.load %arg6[%c3_38, %c0_39, %c0_40] : memref<27x8x8xbf16, #tpu.memory_space<vmem>>, vector<1x8x8xbf16>
    %61 = vector.shape_cast %60 : vector<1x8x8xbf16> to vector<8x8xbf16>
    %62 = arith.truncf %59 : vector<8x256xf32> to vector<8x256xbf16>
    %cst_41 = arith.constant dense<0.000000e+00> : vector<8x256xf32>
    %63 = tpu.matmul %61, %62, %cst_41 {dimension_numbers = #tpu.dot_dimension_numbers<[1], [0], [0], [1], [0, 0, 1, 1], [], []>} : vector<8x8xbf16>, vector<8x256xbf16>, vector<8x256xf32> -> vector<8x256xf32>
    %64 = arith.addf %56, %63 : vector<8x256xf32>
    %c4 = arith.constant 4 : index
    %c0_42 = arith.constant 0 : index
    %c0_43 = arith.constant 0 : index
    %65 = vector.load %arg6[%c4, %c0_42, %c0_43] : memref<27x8x8xbf16, #tpu.memory_space<vmem>>, vector<1x8x8xbf16>
    %66 = vector.shape_cast %65 : vector<1x8x8xbf16> to vector<8x8xbf16>
    %67 = arith.truncf %9 : vector<8x256xf32> to vector<8x256xbf16>
    %cst_44 = arith.constant dense<0.000000e+00> : vector<8x256xf32>
    %68 = tpu.matmul %66, %67, %cst_44 {dimension_numbers = #tpu.dot_dimension_numbers<[1], [0], [0], [1], [0, 0, 1, 1], [], []>} : vector<8x8xbf16>, vector<8x256xbf16>, vector<8x256xf32> -> vector<8x256xf32>
    %69 = arith.addf %64, %68 : vector<8x256xf32>
    %c255_i32 = arith.constant 255 : i32
    %70 = tpu.dynamic_rotate %9 by %c255_i32 dim 1 : vector<8x256xf32>, i32 -> vector<8x256xf32>
    %71 = vector.broadcast %30 : vector<1x256xf32> to vector<8x256xf32>
    %72 = arith.mulf %70, %71 : vector<8x256xf32>
    %c5_45 = arith.constant 5 : index
    %c0_46 = arith.constant 0 : index
    %c0_47 = arith.constant 0 : index
    %73 = vector.load %arg6[%c5_45, %c0_46, %c0_47] : memref<27x8x8xbf16, #tpu.memory_space<vmem>>, vector<1x8x8xbf16>
    %74 = vector.shape_cast %73 : vector<1x8x8xbf16> to vector<8x8xbf16>
    %75 = arith.truncf %72 : vector<8x256xf32> to vector<8x256xbf16>
    %cst_48 = arith.constant dense<0.000000e+00> : vector<8x256xf32>
    %76 = tpu.matmul %74, %75, %cst_48 {dimension_numbers = #tpu.dot_dimension_numbers<[1], [0], [0], [1], [0, 0, 1, 1], [], []>} : vector<8x8xbf16>, vector<8x256xbf16>, vector<8x256xf32> -> vector<8x256xf32>
    %77 = arith.addf %69, %76 : vector<8x256xf32>
    %c241_i32 = arith.constant 241 : i32
    %78 = tpu.dynamic_rotate %9 by %c241_i32 dim 1 : vector<8x256xf32>, i32 -> vector<8x256xf32>
    %79 = vector.broadcast %31 : vector<1x256xf32> to vector<8x256xf32>
    %80 = arith.mulf %78, %79 : vector<8x256xf32>
    %c6_49 = arith.constant 6 : index
    %c0_50 = arith.constant 0 : index
    %c0_51 = arith.constant 0 : index
    %81 = vector.load %arg6[%c6_49, %c0_50, %c0_51] : memref<27x8x8xbf16, #tpu.memory_space<vmem>>, vector<1x8x8xbf16>
    %82 = vector.shape_cast %81 : vector<1x8x8xbf16> to vector<8x8xbf16>
    %83 = arith.truncf %80 : vector<8x256xf32> to vector<8x256xbf16>
    %cst_52 = arith.constant dense<0.000000e+00> : vector<8x256xf32>
    %84 = tpu.matmul %82, %83, %cst_52 {dimension_numbers = #tpu.dot_dimension_numbers<[1], [0], [0], [1], [0, 0, 1, 1], [], []>} : vector<8x8xbf16>, vector<8x256xbf16>, vector<8x256xf32> -> vector<8x256xf32>
    %85 = arith.addf %77, %84 : vector<8x256xf32>
    %c240_i32 = arith.constant 240 : i32
    %86 = tpu.dynamic_rotate %9 by %c240_i32 dim 1 : vector<8x256xf32>, i32 -> vector<8x256xf32>
    %87 = vector.broadcast %32 : vector<1x256xf32> to vector<8x256xf32>
    %88 = arith.mulf %86, %87 : vector<8x256xf32>
    %c7_53 = arith.constant 7 : index
    %c0_54 = arith.constant 0 : index
    %c0_55 = arith.constant 0 : index
    %89 = vector.load %arg6[%c7_53, %c0_54, %c0_55] : memref<27x8x8xbf16, #tpu.memory_space<vmem>>, vector<1x8x8xbf16>
    %90 = vector.shape_cast %89 : vector<1x8x8xbf16> to vector<8x8xbf16>
    %91 = arith.truncf %88 : vector<8x256xf32> to vector<8x256xbf16>
    %cst_56 = arith.constant dense<0.000000e+00> : vector<8x256xf32>
    %92 = tpu.matmul %90, %91, %cst_56 {dimension_numbers = #tpu.dot_dimension_numbers<[1], [0], [0], [1], [0, 0, 1, 1], [], []>} : vector<8x8xbf16>, vector<8x256xbf16>, vector<8x256xf32> -> vector<8x256xf32>
    %93 = arith.addf %85, %92 : vector<8x256xf32>
    %c239_i32 = arith.constant 239 : i32
    %94 = tpu.dynamic_rotate %9 by %c239_i32 dim 1 : vector<8x256xf32>, i32 -> vector<8x256xf32>
    %95 = vector.broadcast %33 : vector<1x256xf32> to vector<8x256xf32>
    %96 = arith.mulf %94, %95 : vector<8x256xf32>
    %c8_57 = arith.constant 8 : index
    %c0_58 = arith.constant 0 : index
    %c0_59 = arith.constant 0 : index
    %97 = vector.load %arg6[%c8_57, %c0_58, %c0_59] : memref<27x8x8xbf16, #tpu.memory_space<vmem>>, vector<1x8x8xbf16>
    %98 = vector.shape_cast %97 : vector<1x8x8xbf16> to vector<8x8xbf16>
    %99 = arith.truncf %96 : vector<8x256xf32> to vector<8x256xbf16>
    %cst_60 = arith.constant dense<0.000000e+00> : vector<8x256xf32>
    %100 = tpu.matmul %98, %99, %cst_60 {dimension_numbers = #tpu.dot_dimension_numbers<[1], [0], [0], [1], [0, 0, 1, 1], [], []>} : vector<8x8xbf16>, vector<8x256xbf16>, vector<8x256xf32> -> vector<8x256xf32>
    %101 = arith.addf %93, %100 : vector<8x256xf32>
    %c17_i32_61 = arith.constant 17 : i32
    %102 = tpu.dynamic_rotate %17 by %c17_i32_61 dim 1 : vector<8x256xf32>, i32 -> vector<8x256xf32>
    %103 = vector.broadcast %26 : vector<1x256xf32> to vector<8x256xf32>
    %104 = arith.mulf %102, %103 : vector<8x256xf32>
    %c9 = arith.constant 9 : index
    %c0_62 = arith.constant 0 : index
    %c0_63 = arith.constant 0 : index
    %105 = vector.load %arg6[%c9, %c0_62, %c0_63] : memref<27x8x8xbf16, #tpu.memory_space<vmem>>, vector<1x8x8xbf16>
    %106 = vector.shape_cast %105 : vector<1x8x8xbf16> to vector<8x8xbf16>
    %107 = arith.truncf %104 : vector<8x256xf32> to vector<8x256xbf16>
    %cst_64 = arith.constant dense<0.000000e+00> : vector<8x256xf32>
    %108 = tpu.matmul %106, %107, %cst_64 {dimension_numbers = #tpu.dot_dimension_numbers<[1], [0], [0], [1], [0, 0, 1, 1], [], []>} : vector<8x8xbf16>, vector<8x256xbf16>, vector<8x256xf32> -> vector<8x256xf32>
    %c16_i32_65 = arith.constant 16 : i32
    %109 = tpu.dynamic_rotate %17 by %c16_i32_65 dim 1 : vector<8x256xf32>, i32 -> vector<8x256xf32>
    %110 = vector.broadcast %27 : vector<1x256xf32> to vector<8x256xf32>
    %111 = arith.mulf %109, %110 : vector<8x256xf32>
    %c10 = arith.constant 10 : index
    %c0_66 = arith.constant 0 : index
    %c0_67 = arith.constant 0 : index
    %112 = vector.load %arg6[%c10, %c0_66, %c0_67] : memref<27x8x8xbf16, #tpu.memory_space<vmem>>, vector<1x8x8xbf16>
    %113 = vector.shape_cast %112 : vector<1x8x8xbf16> to vector<8x8xbf16>
    %114 = arith.truncf %111 : vector<8x256xf32> to vector<8x256xbf16>
    %cst_68 = arith.constant dense<0.000000e+00> : vector<8x256xf32>
    %115 = tpu.matmul %113, %114, %cst_68 {dimension_numbers = #tpu.dot_dimension_numbers<[1], [0], [0], [1], [0, 0, 1, 1], [], []>} : vector<8x8xbf16>, vector<8x256xbf16>, vector<8x256xf32> -> vector<8x256xf32>
    %116 = arith.addf %108, %115 : vector<8x256xf32>
    %c15_i32_69 = arith.constant 15 : i32
    %117 = tpu.dynamic_rotate %17 by %c15_i32_69 dim 1 : vector<8x256xf32>, i32 -> vector<8x256xf32>
    %118 = vector.broadcast %28 : vector<1x256xf32> to vector<8x256xf32>
    %119 = arith.mulf %117, %118 : vector<8x256xf32>
    %c11 = arith.constant 11 : index
    %c0_70 = arith.constant 0 : index
    %c0_71 = arith.constant 0 : index
    %120 = vector.load %arg6[%c11, %c0_70, %c0_71] : memref<27x8x8xbf16, #tpu.memory_space<vmem>>, vector<1x8x8xbf16>
    %121 = vector.shape_cast %120 : vector<1x8x8xbf16> to vector<8x8xbf16>
    %122 = arith.truncf %119 : vector<8x256xf32> to vector<8x256xbf16>
    %cst_72 = arith.constant dense<0.000000e+00> : vector<8x256xf32>
    %123 = tpu.matmul %121, %122, %cst_72 {dimension_numbers = #tpu.dot_dimension_numbers<[1], [0], [0], [1], [0, 0, 1, 1], [], []>} : vector<8x8xbf16>, vector<8x256xbf16>, vector<8x256xf32> -> vector<8x256xf32>
    %124 = arith.addf %116, %123 : vector<8x256xf32>
    %c1_i32_73 = arith.constant 1 : i32
    %125 = tpu.dynamic_rotate %17 by %c1_i32_73 dim 1 : vector<8x256xf32>, i32 -> vector<8x256xf32>
    %126 = vector.broadcast %29 : vector<1x256xf32> to vector<8x256xf32>
    %127 = arith.mulf %125, %126 : vector<8x256xf32>
    %c12 = arith.constant 12 : index
    %c0_74 = arith.constant 0 : index
    %c0_75 = arith.constant 0 : index
    %128 = vector.load %arg6[%c12, %c0_74, %c0_75] : memref<27x8x8xbf16, #tpu.memory_space<vmem>>, vector<1x8x8xbf16>
    %129 = vector.shape_cast %128 : vector<1x8x8xbf16> to vector<8x8xbf16>
    %130 = arith.truncf %127 : vector<8x256xf32> to vector<8x256xbf16>
    %cst_76 = arith.constant dense<0.000000e+00> : vector<8x256xf32>
    %131 = tpu.matmul %129, %130, %cst_76 {dimension_numbers = #tpu.dot_dimension_numbers<[1], [0], [0], [1], [0, 0, 1, 1], [], []>} : vector<8x8xbf16>, vector<8x256xbf16>, vector<8x256xf32> -> vector<8x256xf32>
    %132 = arith.addf %124, %131 : vector<8x256xf32>
    %c13 = arith.constant 13 : index
    %c0_77 = arith.constant 0 : index
    %c0_78 = arith.constant 0 : index
    %133 = vector.load %arg6[%c13, %c0_77, %c0_78] : memref<27x8x8xbf16, #tpu.memory_space<vmem>>, vector<1x8x8xbf16>
    %134 = vector.shape_cast %133 : vector<1x8x8xbf16> to vector<8x8xbf16>
    %135 = arith.truncf %17 : vector<8x256xf32> to vector<8x256xbf16>
    %cst_79 = arith.constant dense<0.000000e+00> : vector<8x256xf32>
    %136 = tpu.matmul %134, %135, %cst_79 {dimension_numbers = #tpu.dot_dimension_numbers<[1], [0], [0], [1], [0, 0, 1, 1], [], []>} : vector<8x8xbf16>, vector<8x256xbf16>, vector<8x256xf32> -> vector<8x256xf32>
    %137 = arith.addf %132, %136 : vector<8x256xf32>
    %c255_i32_80 = arith.constant 255 : i32
    %138 = tpu.dynamic_rotate %17 by %c255_i32_80 dim 1 : vector<8x256xf32>, i32 -> vector<8x256xf32>
    %139 = vector.broadcast %30 : vector<1x256xf32> to vector<8x256xf32>
    %140 = arith.mulf %138, %139 : vector<8x256xf32>
    %c14 = arith.constant 14 : index
    %c0_81 = arith.constant 0 : index
    %c0_82 = arith.constant 0 : index
    %141 = vector.load %arg6[%c14, %c0_81, %c0_82] : memref<27x8x8xbf16, #tpu.memory_space<vmem>>, vector<1x8x8xbf16>
    %142 = vector.shape_cast %141 : vector<1x8x8xbf16> to vector<8x8xbf16>
    %143 = arith.truncf %140 : vector<8x256xf32> to vector<8x256xbf16>
    %cst_83 = arith.constant dense<0.000000e+00> : vector<8x256xf32>
    %144 = tpu.matmul %142, %143, %cst_83 {dimension_numbers = #tpu.dot_dimension_numbers<[1], [0], [0], [1], [0, 0, 1, 1], [], []>} : vector<8x8xbf16>, vector<8x256xbf16>, vector<8x256xf32> -> vector<8x256xf32>
    %145 = arith.addf %137, %144 : vector<8x256xf32>
    %c241_i32_84 = arith.constant 241 : i32
    %146 = tpu.dynamic_rotate %17 by %c241_i32_84 dim 1 : vector<8x256xf32>, i32 -> vector<8x256xf32>
    %147 = vector.broadcast %31 : vector<1x256xf32> to vector<8x256xf32>
    %148 = arith.mulf %146, %147 : vector<8x256xf32>
    %c15 = arith.constant 15 : index
    %c0_85 = arith.constant 0 : index
    %c0_86 = arith.constant 0 : index
    %149 = vector.load %arg6[%c15, %c0_85, %c0_86] : memref<27x8x8xbf16, #tpu.memory_space<vmem>>, vector<1x8x8xbf16>
    %150 = vector.shape_cast %149 : vector<1x8x8xbf16> to vector<8x8xbf16>
    %151 = arith.truncf %148 : vector<8x256xf32> to vector<8x256xbf16>
    %cst_87 = arith.constant dense<0.000000e+00> : vector<8x256xf32>
    %152 = tpu.matmul %150, %151, %cst_87 {dimension_numbers = #tpu.dot_dimension_numbers<[1], [0], [0], [1], [0, 0, 1, 1], [], []>} : vector<8x8xbf16>, vector<8x256xbf16>, vector<8x256xf32> -> vector<8x256xf32>
    %153 = arith.addf %145, %152 : vector<8x256xf32>
    %c240_i32_88 = arith.constant 240 : i32
    %154 = tpu.dynamic_rotate %17 by %c240_i32_88 dim 1 : vector<8x256xf32>, i32 -> vector<8x256xf32>
    %155 = vector.broadcast %32 : vector<1x256xf32> to vector<8x256xf32>
    %156 = arith.mulf %154, %155 : vector<8x256xf32>
    %c16 = arith.constant 16 : index
    %c0_89 = arith.constant 0 : index
    %c0_90 = arith.constant 0 : index
    %157 = vector.load %arg6[%c16, %c0_89, %c0_90] : memref<27x8x8xbf16, #tpu.memory_space<vmem>>, vector<1x8x8xbf16>
    %158 = vector.shape_cast %157 : vector<1x8x8xbf16> to vector<8x8xbf16>
    %159 = arith.truncf %156 : vector<8x256xf32> to vector<8x256xbf16>
    %cst_91 = arith.constant dense<0.000000e+00> : vector<8x256xf32>
    %160 = tpu.matmul %158, %159, %cst_91 {dimension_numbers = #tpu.dot_dimension_numbers<[1], [0], [0], [1], [0, 0, 1, 1], [], []>} : vector<8x8xbf16>, vector<8x256xbf16>, vector<8x256xf32> -> vector<8x256xf32>
    %161 = arith.addf %153, %160 : vector<8x256xf32>
    %c239_i32_92 = arith.constant 239 : i32
    %162 = tpu.dynamic_rotate %17 by %c239_i32_92 dim 1 : vector<8x256xf32>, i32 -> vector<8x256xf32>
    %163 = vector.broadcast %33 : vector<1x256xf32> to vector<8x256xf32>
    %164 = arith.mulf %162, %163 : vector<8x256xf32>
    %c17 = arith.constant 17 : index
    %c0_93 = arith.constant 0 : index
    %c0_94 = arith.constant 0 : index
    %165 = vector.load %arg6[%c17, %c0_93, %c0_94] : memref<27x8x8xbf16, #tpu.memory_space<vmem>>, vector<1x8x8xbf16>
    %166 = vector.shape_cast %165 : vector<1x8x8xbf16> to vector<8x8xbf16>
    %167 = arith.truncf %164 : vector<8x256xf32> to vector<8x256xbf16>
    %cst_95 = arith.constant dense<0.000000e+00> : vector<8x256xf32>
    %168 = tpu.matmul %166, %167, %cst_95 {dimension_numbers = #tpu.dot_dimension_numbers<[1], [0], [0], [1], [0, 0, 1, 1], [], []>} : vector<8x8xbf16>, vector<8x256xbf16>, vector<8x256xf32> -> vector<8x256xf32>
    %169 = arith.addf %161, %168 : vector<8x256xf32>
    %c17_i32_96 = arith.constant 17 : i32
    %170 = tpu.dynamic_rotate %25 by %c17_i32_96 dim 1 : vector<8x256xf32>, i32 -> vector<8x256xf32>
    %171 = vector.broadcast %26 : vector<1x256xf32> to vector<8x256xf32>
    %172 = arith.mulf %170, %171 : vector<8x256xf32>
    %c18 = arith.constant 18 : index
    %c0_97 = arith.constant 0 : index
    %c0_98 = arith.constant 0 : index
    %173 = vector.load %arg6[%c18, %c0_97, %c0_98] : memref<27x8x8xbf16, #tpu.memory_space<vmem>>, vector<1x8x8xbf16>
    %174 = vector.shape_cast %173 : vector<1x8x8xbf16> to vector<8x8xbf16>
    %175 = arith.truncf %172 : vector<8x256xf32> to vector<8x256xbf16>
    %cst_99 = arith.constant dense<0.000000e+00> : vector<8x256xf32>
    %176 = tpu.matmul %174, %175, %cst_99 {dimension_numbers = #tpu.dot_dimension_numbers<[1], [0], [0], [1], [0, 0, 1, 1], [], []>} : vector<8x8xbf16>, vector<8x256xbf16>, vector<8x256xf32> -> vector<8x256xf32>
    %c16_i32_100 = arith.constant 16 : i32
    %177 = tpu.dynamic_rotate %25 by %c16_i32_100 dim 1 : vector<8x256xf32>, i32 -> vector<8x256xf32>
    %178 = vector.broadcast %27 : vector<1x256xf32> to vector<8x256xf32>
    %179 = arith.mulf %177, %178 : vector<8x256xf32>
    %c19 = arith.constant 19 : index
    %c0_101 = arith.constant 0 : index
    %c0_102 = arith.constant 0 : index
    %180 = vector.load %arg6[%c19, %c0_101, %c0_102] : memref<27x8x8xbf16, #tpu.memory_space<vmem>>, vector<1x8x8xbf16>
    %181 = vector.shape_cast %180 : vector<1x8x8xbf16> to vector<8x8xbf16>
    %182 = arith.truncf %179 : vector<8x256xf32> to vector<8x256xbf16>
    %cst_103 = arith.constant dense<0.000000e+00> : vector<8x256xf32>
    %183 = tpu.matmul %181, %182, %cst_103 {dimension_numbers = #tpu.dot_dimension_numbers<[1], [0], [0], [1], [0, 0, 1, 1], [], []>} : vector<8x8xbf16>, vector<8x256xbf16>, vector<8x256xf32> -> vector<8x256xf32>
    %184 = arith.addf %176, %183 : vector<8x256xf32>
    %c15_i32_104 = arith.constant 15 : i32
    %185 = tpu.dynamic_rotate %25 by %c15_i32_104 dim 1 : vector<8x256xf32>, i32 -> vector<8x256xf32>
    %186 = vector.broadcast %28 : vector<1x256xf32> to vector<8x256xf32>
    %187 = arith.mulf %185, %186 : vector<8x256xf32>
    %c20 = arith.constant 20 : index
    %c0_105 = arith.constant 0 : index
    %c0_106 = arith.constant 0 : index
    %188 = vector.load %arg6[%c20, %c0_105, %c0_106] : memref<27x8x8xbf16, #tpu.memory_space<vmem>>, vector<1x8x8xbf16>
    %189 = vector.shape_cast %188 : vector<1x8x8xbf16> to vector<8x8xbf16>
    %190 = arith.truncf %187 : vector<8x256xf32> to vector<8x256xbf16>
    %cst_107 = arith.constant dense<0.000000e+00> : vector<8x256xf32>
    %191 = tpu.matmul %189, %190, %cst_107 {dimension_numbers = #tpu.dot_dimension_numbers<[1], [0], [0], [1], [0, 0, 1, 1], [], []>} : vector<8x8xbf16>, vector<8x256xbf16>, vector<8x256xf32> -> vector<8x256xf32>
    %192 = arith.addf %184, %191 : vector<8x256xf32>
    %c1_i32_108 = arith.constant 1 : i32
    %193 = tpu.dynamic_rotate %25 by %c1_i32_108 dim 1 : vector<8x256xf32>, i32 -> vector<8x256xf32>
    %194 = vector.broadcast %29 : vector<1x256xf32> to vector<8x256xf32>
    %195 = arith.mulf %193, %194 : vector<8x256xf32>
    %c21 = arith.constant 21 : index
    %c0_109 = arith.constant 0 : index
    %c0_110 = arith.constant 0 : index
    %196 = vector.load %arg6[%c21, %c0_109, %c0_110] : memref<27x8x8xbf16, #tpu.memory_space<vmem>>, vector<1x8x8xbf16>
    %197 = vector.shape_cast %196 : vector<1x8x8xbf16> to vector<8x8xbf16>
    %198 = arith.truncf %195 : vector<8x256xf32> to vector<8x256xbf16>
    %cst_111 = arith.constant dense<0.000000e+00> : vector<8x256xf32>
    %199 = tpu.matmul %197, %198, %cst_111 {dimension_numbers = #tpu.dot_dimension_numbers<[1], [0], [0], [1], [0, 0, 1, 1], [], []>} : vector<8x8xbf16>, vector<8x256xbf16>, vector<8x256xf32> -> vector<8x256xf32>
    %200 = arith.addf %192, %199 : vector<8x256xf32>
    %c22 = arith.constant 22 : index
    %c0_112 = arith.constant 0 : index
    %c0_113 = arith.constant 0 : index
    %201 = vector.load %arg6[%c22, %c0_112, %c0_113] : memref<27x8x8xbf16, #tpu.memory_space<vmem>>, vector<1x8x8xbf16>
    %202 = vector.shape_cast %201 : vector<1x8x8xbf16> to vector<8x8xbf16>
    %203 = arith.truncf %25 : vector<8x256xf32> to vector<8x256xbf16>
    %cst_114 = arith.constant dense<0.000000e+00> : vector<8x256xf32>
    %204 = tpu.matmul %202, %203, %cst_114 {dimension_numbers = #tpu.dot_dimension_numbers<[1], [0], [0], [1], [0, 0, 1, 1], [], []>} : vector<8x8xbf16>, vector<8x256xbf16>, vector<8x256xf32> -> vector<8x256xf32>
    %205 = arith.addf %200, %204 : vector<8x256xf32>
    %c255_i32_115 = arith.constant 255 : i32
    %206 = tpu.dynamic_rotate %25 by %c255_i32_115 dim 1 : vector<8x256xf32>, i32 -> vector<8x256xf32>
    %207 = vector.broadcast %30 : vector<1x256xf32> to vector<8x256xf32>
    %208 = arith.mulf %206, %207 : vector<8x256xf32>
    %c23 = arith.constant 23 : index
    %c0_116 = arith.constant 0 : index
    %c0_117 = arith.constant 0 : index
    %209 = vector.load %arg6[%c23, %c0_116, %c0_117] : memref<27x8x8xbf16, #tpu.memory_space<vmem>>, vector<1x8x8xbf16>
    %210 = vector.shape_cast %209 : vector<1x8x8xbf16> to vector<8x8xbf16>
    %211 = arith.truncf %208 : vector<8x256xf32> to vector<8x256xbf16>
    %cst_118 = arith.constant dense<0.000000e+00> : vector<8x256xf32>
    %212 = tpu.matmul %210, %211, %cst_118 {dimension_numbers = #tpu.dot_dimension_numbers<[1], [0], [0], [1], [0, 0, 1, 1], [], []>} : vector<8x8xbf16>, vector<8x256xbf16>, vector<8x256xf32> -> vector<8x256xf32>
    %213 = arith.addf %205, %212 : vector<8x256xf32>
    %c241_i32_119 = arith.constant 241 : i32
    %214 = tpu.dynamic_rotate %25 by %c241_i32_119 dim 1 : vector<8x256xf32>, i32 -> vector<8x256xf32>
    %215 = vector.broadcast %31 : vector<1x256xf32> to vector<8x256xf32>
    %216 = arith.mulf %214, %215 : vector<8x256xf32>
    %c24 = arith.constant 24 : index
    %c0_120 = arith.constant 0 : index
    %c0_121 = arith.constant 0 : index
    %217 = vector.load %arg6[%c24, %c0_120, %c0_121] : memref<27x8x8xbf16, #tpu.memory_space<vmem>>, vector<1x8x8xbf16>
    %218 = vector.shape_cast %217 : vector<1x8x8xbf16> to vector<8x8xbf16>
    %219 = arith.truncf %216 : vector<8x256xf32> to vector<8x256xbf16>
    %cst_122 = arith.constant dense<0.000000e+00> : vector<8x256xf32>
    %220 = tpu.matmul %218, %219, %cst_122 {dimension_numbers = #tpu.dot_dimension_numbers<[1], [0], [0], [1], [0, 0, 1, 1], [], []>} : vector<8x8xbf16>, vector<8x256xbf16>, vector<8x256xf32> -> vector<8x256xf32>
    %221 = arith.addf %213, %220 : vector<8x256xf32>
    %c240_i32_123 = arith.constant 240 : i32
    %222 = tpu.dynamic_rotate %25 by %c240_i32_123 dim 1 : vector<8x256xf32>, i32 -> vector<8x256xf32>
    %223 = vector.broadcast %32 : vector<1x256xf32> to vector<8x256xf32>
    %224 = arith.mulf %222, %223 : vector<8x256xf32>
    %c25 = arith.constant 25 : index
    %c0_124 = arith.constant 0 : index
    %c0_125 = arith.constant 0 : index
    %225 = vector.load %arg6[%c25, %c0_124, %c0_125] : memref<27x8x8xbf16, #tpu.memory_space<vmem>>, vector<1x8x8xbf16>
    %226 = vector.shape_cast %225 : vector<1x8x8xbf16> to vector<8x8xbf16>
    %227 = arith.truncf %224 : vector<8x256xf32> to vector<8x256xbf16>
    %cst_126 = arith.constant dense<0.000000e+00> : vector<8x256xf32>
    %228 = tpu.matmul %226, %227, %cst_126 {dimension_numbers = #tpu.dot_dimension_numbers<[1], [0], [0], [1], [0, 0, 1, 1], [], []>} : vector<8x8xbf16>, vector<8x256xbf16>, vector<8x256xf32> -> vector<8x256xf32>
    %229 = arith.addf %221, %228 : vector<8x256xf32>
    %c239_i32_127 = arith.constant 239 : i32
    %230 = tpu.dynamic_rotate %25 by %c239_i32_127 dim 1 : vector<8x256xf32>, i32 -> vector<8x256xf32>
    %231 = vector.broadcast %33 : vector<1x256xf32> to vector<8x256xf32>
    %232 = arith.mulf %230, %231 : vector<8x256xf32>
    %c26 = arith.constant 26 : index
    %c0_128 = arith.constant 0 : index
    %c0_129 = arith.constant 0 : index
    %233 = vector.load %arg6[%c26, %c0_128, %c0_129] : memref<27x8x8xbf16, #tpu.memory_space<vmem>>, vector<1x8x8xbf16>
    %234 = vector.shape_cast %233 : vector<1x8x8xbf16> to vector<8x8xbf16>
    %235 = arith.truncf %232 : vector<8x256xf32> to vector<8x256xbf16>
    %cst_130 = arith.constant dense<0.000000e+00> : vector<8x256xf32>
    %236 = tpu.matmul %234, %235, %cst_130 {dimension_numbers = #tpu.dot_dimension_numbers<[1], [0], [0], [1], [0, 0, 1, 1], [], []>} : vector<8x8xbf16>, vector<8x256xbf16>, vector<8x256xf32> -> vector<8x256xf32>
    %237 = arith.addf %229, %236 : vector<8x256xf32>
    %c0_i32 = arith.constant 0 : i32
    %238 = arith.cmpi sgt, %arg1, %c0_i32 : i32
    %cst_131 = arith.constant 1.000000e+00 : f32
    %cst_132 = arith.constant 0.000000e+00 : f32
    %239 = arith.select %238, %cst_131, %cst_132 : f32
    %c3_i32 = arith.constant 3 : i32
    %240 = arith.cmpi slt, %arg1, %c3_i32 : i32
    %cst_133 = arith.constant 1.000000e+00 : f32
    %cst_134 = arith.constant 0.000000e+00 : f32
    %241 = arith.select %240, %cst_133, %cst_134 : f32
    %242 = vector.broadcast %239 : f32 to vector<8x256xf32>
    %243 = arith.mulf %242, %101 : vector<8x256xf32>
    %244 = arith.addf %169, %243 : vector<8x256xf32>
    %245 = vector.broadcast %241 : f32 to vector<8x256xf32>
    %246 = arith.mulf %245, %237 : vector<8x256xf32>
    %247 = arith.addf %244, %246 : vector<8x256xf32>
    %c0_135 = arith.constant 0 : index
    %c0_136 = arith.constant 0 : index
    %c0_137 = arith.constant 0 : index
    %c0_138 = arith.constant 0 : index
    %248 = vector.load %arg8[%c0_135, %c0_136, %c0_137, %c0_138] : memref<1x1x8x256xf32, #tpu.memory_space<vmem>>, vector<1x1x8x256xf32>
    %249 = vector.shape_cast %248 : vector<1x1x8x256xf32> to vector<8x256xf32>
    %250 = vector.shape_cast %247 : vector<8x256xf32> to vector<1x1x8x256xf32>
    tpu.vector_store %arg8[%c0_135, %c0_136, %c0_137, %c0_138], %250 {strides = array<i32>} : memref<1x1x8x256xf32, #tpu.memory_space<vmem>>, vector<1x1x8x256xf32>,
    %cst_139 = arith.constant dense<0.000000e+00> : vector<8xf32>
    %251 = vector.multi_reduction <add>, %247, %cst_139 [1] : vector<8x256xf32> to vector<8xf32>
    %252 = vector.shape_cast %251 : vector<8xf32> to vector<8x1xf32>
    %c0_140 = arith.constant 0 : index
    %c0_141 = arith.constant 0 : index
    %c0_142 = arith.constant 0 : index
    %c0_143 = arith.constant 0 : index
    %253 = vector.load %arg9[%c0_140, %c0_141, %c0_142, %c0_143] : memref<1x1x8x1xf32, #tpu.memory_space<vmem>>, vector<1x1x8x1xf32>
    %254 = vector.shape_cast %253 : vector<1x1x8x1xf32> to vector<8x1xf32>
    %255 = vector.shape_cast %252 : vector<8x1xf32> to vector<1x1x8x1xf32>
    tpu.vector_store %arg9[%c0_140, %c0_141, %c0_142, %c0_143], %255 {strides = array<i32>} : memref<1x1x8x1xf32, #tpu.memory_space<vmem>>, vector<1x1x8x1xf32>,
    %256 = arith.mulf %247, %247 : vector<8x256xf32>
    %cst_144 = arith.constant dense<0.000000e+00> : vector<8xf32>
    %257 = vector.multi_reduction <add>, %256, %cst_144 [1] : vector<8x256xf32> to vector<8xf32>
    %258 = vector.shape_cast %257 : vector<8xf32> to vector<8x1xf32>
    %c0_145 = arith.constant 0 : index
    %c0_146 = arith.constant 0 : index
    %c0_147 = arith.constant 0 : index
    %c0_148 = arith.constant 0 : index
    %259 = vector.load %arg10[%c0_145, %c0_146, %c0_147, %c0_148] : memref<1x1x8x1xf32, #tpu.memory_space<vmem>>, vector<1x1x8x1xf32>
    %260 = vector.shape_cast %259 : vector<1x1x8x1xf32> to vector<8x1xf32>
    %261 = vector.shape_cast %258 : vector<8x1xf32> to vector<1x1x8x1xf32>
    tpu.vector_store %arg10[%c0_145, %c0_146, %c0_147, %c0_148], %261 {strides = array<i32>} : memref<1x1x8x1xf32, #tpu.memory_space<vmem>>, vector<1x1x8x1xf32>,
    return
  }
  func.func @transform_0(%arg0: i32, %arg1: i32) -> (i32, i32, i32, i32) {
    %c1_i32 = arith.constant 1 : i32
    %0 = arith.subi %arg1, %c1_i32 : i32
    %c0_i32 = arith.constant 0 : i32
    %1 = arith.maxsi %0, %c0_i32 : i32
    %c0_i32_0 = arith.constant 0 : i32
    %c0_i32_1 = arith.constant 0 : i32
    %c0_i32_2 = arith.constant 0 : i32
    return %arg0, %1, %c0_i32_0, %c0_i32_1 : i32, i32, i32, i32
  }
  func.func @transform_1(%arg0: i32, %arg1: i32) -> (i32, i32, i32, i32) {
    %c0_i32 = arith.constant 0 : i32
    %c0_i32_0 = arith.constant 0 : i32
    %c0_i32_1 = arith.constant 0 : i32
    return %arg0, %arg1, %c0_i32, %c0_i32_0 : i32, i32, i32, i32
  }
  func.func @transform_2(%arg0: i32, %arg1: i32) -> (i32, i32, i32, i32) {
    %c1_i32 = arith.constant 1 : i32
    %0 = arith.addi %arg1, %c1_i32 : i32
    %c3_i32 = arith.constant 3 : i32
    %1 = arith.minsi %0, %c3_i32 : i32
    %c0_i32 = arith.constant 0 : i32
    %c0_i32_0 = arith.constant 0 : i32
    %c0_i32_1 = arith.constant 0 : i32
    return %arg0, %1, %c0_i32, %c0_i32_0 : i32, i32, i32, i32
  }
  func.func @transform_3(%arg0: i32, %arg1: i32) -> (i32, i32) {
    %c0_i32 = arith.constant 0 : i32
    %c0_i32_0 = arith.constant 0 : i32
    %c0_i32_1 = arith.constant 0 : i32
    return %c0_i32, %c0_i32_0 : i32, i32
  }
  func.func @transform_4(%arg0: i32, %arg1: i32) -> (i32, i32, i32) {
    %c0_i32 = arith.constant 0 : i32
    %c0_i32_0 = arith.constant 0 : i32
    %c0_i32_1 = arith.constant 0 : i32
    %c0_i32_2 = arith.constant 0 : i32
    return %c0_i32, %c0_i32_0, %c0_i32_1 : i32, i32, i32
  }
  func.func @transform_5(%arg0: i32, %arg1: i32) -> (i32, i32) {
    %c0_i32 = arith.constant 0 : i32
    %c0_i32_0 = arith.constant 0 : i32
    %c0_i32_1 = arith.constant 0 : i32
    return %c0_i32, %c0_i32_0 : i32, i32
  }
  func.func @transform_6(%arg0: i32, %arg1: i32) -> (i32, i32, i32, i32) {
    %c0_i32 = arith.constant 0 : i32
    %c0_i32_0 = arith.constant 0 : i32
    %c0_i32_1 = arith.constant 0 : i32
    return %arg0, %arg1, %c0_i32, %c0_i32_0 : i32, i32, i32, i32
  }
  func.func @transform_7(%arg0: i32, %arg1: i32) -> (i32, i32, i32, i32) {
    %c0_i32 = arith.constant 0 : i32
    %c0_i32_0 = arith.constant 0 : i32
    %c0_i32_1 = arith.constant 0 : i32
    return %arg0, %arg1, %c0_i32, %c0_i32_0 : i32, i32, i32, i32
  }
  func.func @transform_8(%arg0: i32, %arg1: i32) -> (i32, i32, i32, i32) {
    %c0_i32 = arith.constant 0 : i32
    %c0_i32_0 = arith.constant 0 : i32
    %c0_i32_1 = arith.constant 0 : i32
    return %arg0, %arg1, %c0_i32, %c0_i32_0 : i32, i32, i32, i32
  }
}

</mosaic_0001>

<llo_original>
// kernel: bottleneck_forward.3
$region0: #{bottleneck_forward.3}
  #allocation0 [shape = 'u32[]', space=smem, size = 0x4, offset = 0x4, fixed_abs, tag = 'smem constant byte address 0x4 - core index']
  #allocation1 [shape = 'u32[144,128]{1,0:T(1,128)}', space=vmem, size = 0x12000, scoped, tag = 'internal scratch']
  %s0 = inlined_call_operand.vmem [shape: bf16[2,4,4,256], index: 0, kind: input, shape index: {}]
  %s1 = inlined_call_operand.vmem [shape: bf16[8,4], index: 1, kind: input, shape index: {}]
  %s2 = inlined_call_operand.vmem [shape: f32[2,4,8,256], index: 2, kind: output, shape index: {0}]
  %s3 = inlined_call_operand.vmem [shape: f32[2,4,8,1], index: 3, kind: output, shape index: {1}]
  %s4 = inlined_call_operand.vmem [shape: f32[2,4,8,1], index: 4, kind: output, shape index: {2}]
  %5 = xla_tuple %s2, %s3, %s4
  %s6 = sld [smem:[#allocation0]]
  $region57: #{bottleneck_forward.3} parent=0
    _
  %s8 = ssub.s32 1, %s6
  %s9 = scalar_select 0, %s8, %s6
  loop: start=0, step=1, limit=10
  $region2: #{bottleneck_forward.3} parent=0 // loop_pre_header
    _
  $region3: #{bottleneck_forward.3} parent=0 // loop_header
    %s11 = sphi 0, %s15
    %p12 = scmp.ge.s32.totalorder %s11, 10
    %s18 = sphi 0, %s30
    %s19 = sphi 0, %s26
    %s20 = sphi 0, %s18
    %s21 = sphi 0, %s19
    %s22 = sphi 0, %s20
    %s23 = sphi 0, %s21
    %s35 = sphi 0, %s37
    %s38 = sphi 0, %s35
    %s39 = sphi 0, %s38
    %s55 = sphi 0, %s39
    %s59 = sphi 0, %s59
    %s61 = sphi 0, %s59
    %s62 = sphi 0, %s61
    %s76 = sphi 0, %s62
    %s84 = sphi 0, %s86
    %s87 = sphi 0, %s84
    %s88 = sphi 0, %s87
    %s104 = sphi 0, %s88
    %s112 = sphi 0, %s114
    %s115 = sphi 0, %s112
    %s116 = sphi 0, %s115
    %s132 = sphi 0, %s116
    %s140 = sphi 0, %s142
    %s143 = sphi 0, %s140
    %s144 = sphi 0, %s143
    %s160 = sphi 0, %s144
  $region4: #{bottleneck_forward.3} parent=0 // loop_header_branch
    %14 = sbr.rel (%p12) target = $region8
  $region5: #{bottleneck_forward.3} parent=0 // loop_body
    %s16 = ssub.s32 %s11, 1
    %s17 = ssub.s32 %s11, 2
    %s24 = sadd.s32 1, %s19
    %p25 = scmp.ge.s32.totalorder %s24, 4
    %s26 = scalar_select %p25, 0, %s24
    %s27 = sadd.s32 1, %s18
    %s28 = scalar_select %p25, %s27, %s18
    %p29 = scmp.ge.s32.totalorder %s28, 2
    %s30 = scalar_select %p29, 0, %s28
    %s31 = ssub.s32 %s18, %s30
    %s32 = ssub.s32 %s19, %s26
    %s33 = sor.u32 %s31, %s32
    %p34 = scmp.eq.s32.totalorder %s33, 0
    %s36 = sadd.s32 %s35, 1
    %s37 = scalar_select %p34, %s35, %s36
    %p40 = pneg %p34
    %p41 = scmp.eq.s32.totalorder %s11, 7
    %p42 = por %p40, %p41
    %p43 = scmp.ne.s32.totalorder %s35, %s38
    %p44 = scmp.eq.s32.totalorder %s11, 0
    %p45 = por %p43, %p44
    %p46 = scmp.ne.s32.totalorder %s35, %s38
    %p47 = scmp.eq.s32.totalorder %s16, 7
    %p48 = por %p46, %p47
    %p49 = scmp.ne.s32.totalorder %s38, %s39
    %p50 = scmp.eq.s32.totalorder %s16, 0
    %p51 = por %p49, %p50
    %p52 = scmp.ne.s32.totalorder %s38, %s39
    %p53 = scmp.eq.s32.totalorder %s17, 7
    %p54 = por %p52, %p53
    %p56 = scmp.ne.s32.totalorder %s39, %s55
    %p57 = scmp.eq.s32.totalorder %s17, 0
    %p58 = por %p56, %p57
    %s60 = sadd.s32 %s59, 1
    %p63 = scmp.eq.s32.totalorder %s11, 7
    %p64 = scmp.ne.s32.totalorder %s59, %s61
    %p65 = scmp.eq.s32.totalorder %s11, 0
    %p66 = por %p64, %p65
    %p67 = scmp.ne.s32.totalorder %s59, %s61
    %p68 = scmp.eq.s32.totalorder %s16, 7
    %p69 = por %p67, %p68
    %p70 = scmp.ne.s32.totalorder %s61, %s62
    %p71 = scmp.eq.s32.totalorder %s16, 0
    %p72 = por %p70, %p71
    %p73 = scmp.ne.s32.totalorder %s61, %s62
    %p74 = scmp.eq.s32.totalorder %s17, 7
    %p75 = por %p73, %p74
    %p77 = scmp.ne.s32.totalorder %s62, %s76
    %p78 = scmp.eq.s32.totalorder %s17, 0
    %p79 = por %p77, %p78
    %s80 = ssub.s32 %s18, %s30
    %s81 = ssub.s32 %s19, %s26
    %s82 = sor.u32 %s80, %s81
    %p83 = scmp.eq.s32.totalorder %s82, 0
    %s85 = sadd.s32 %s84, 1
    %s86 = scalar_select %p83, %s84, %s85
    %p89 = pneg %p83
    %p90 = scmp.eq.s32.totalorder %s11, 7
    %p91 = por %p89, %p90
    %p92 = scmp.ne.s32.totalorder %s84, %s87
    %p93 = scmp.eq.s32.totalorder %s11, 0
    %p94 = por %p92, %p93
    %p95 = scmp.ne.s32.totalorder %s84, %s87
    %p96 = scmp.eq.s32.totalorder %s16, 7
    %p97 = por %p95, %p96
    %p98 = scmp.ne.s32.totalorder %s87, %s88
    %p99 = scmp.eq.s32.totalorder %s16, 0
    %p100 = por %p98, %p99
    %p101 = scmp.ne.s32.totalorder %s87, %s88
    %p102 = scmp.eq.s32.totalorder %s17, 7
    %p103 = por %p101, %p102
    %p105 = scmp.ne.s32.totalorder %s88, %s104
    %p106 = scmp.eq.s32.totalorder %s17, 0
    %p107 = por %p105, %p106
    %s108 = ssub.s32 %s18, %s30
    %s109 = ssub.s32 %s19, %s26
    %s110 = sor.u32 %s108, %s109
    %p111 = scmp.eq.s32.totalorder %s110, 0
    %s113 = sadd.s32 %s112, 1
    %s114 = scalar_select %p111, %s112, %s113
    %p117 = pneg %p111
    %p118 = scmp.eq.s32.totalorder %s11, 7
    %p119 = por %p117, %p118
    %p120 = scmp.ne.s32.totalorder %s112, %s115
    %p121 = scmp.eq.s32.totalorder %s11, 0
    %p122 = por %p120, %p121
    %p123 = scmp.ne.s32.totalorder %s112, %s115
    %p124 = scmp.eq.s32.totalorder %s16, 7
    %p125 = por %p123, %p124
    %p126 = scmp.ne.s32.totalorder %s115, %s116
    %p127 = scmp.eq.s32.totalorder %s16, 0
    %p128 = por %p126, %p127
    %p129 = scmp.ne.s32.totalorder %s115, %s116
    %p130 = scmp.eq.s32.totalorder %s17, 7
    %p131 = por %p129, %p130
    %p133 = scmp.ne.s32.totalorder %s116, %s132
    %p134 = scmp.eq.s32.totalorder %s17, 0
    %p135 = por %p133, %p134
    %s136 = ssub.s32 %s18, %s30
    %s137 = ssub.s32 %s19, %s26
    %s138 = sor.u32 %s136, %s137
    %p139 = scmp.eq.s32.totalorder %s138, 0
    %s141 = sadd.s32 %s140, 1
    %s142 = scalar_select %p139, %s140, %s141
    %p145 = pneg %p139
    %p146 = scmp.eq.s32.totalorder %s11, 7
    %p147 = por %p145, %p146
    %p148 = scmp.ne.s32.totalorder %s140, %s143
    %p149 = scmp.eq.s32.totalorder %s11, 0
    %p150 = por %p148, %p149
    %p151 = scmp.ne.s32.totalorder %s140, %s143
    %p152 = scmp.eq.s32.totalorder %s16, 7
    %p153 = por %p151, %p152
    %p154 = scmp.ne.s32.totalorder %s143, %s144
    %p155 = scmp.eq.s32.totalorder %s16, 0
    %p156 = por %p154, %p155
    %p157 = scmp.ne.s32.totalorder %s143, %s144
    %p158 = scmp.eq.s32.totalorder %s17, 7
    %p159 = por %p157, %p158
    %p161 = scmp.ne.s32.totalorder %s144, %s160
    %p162 = scmp.eq.s32.totalorder %s17, 0
    %p163 = por %p161, %p162
    %p164 = scmp.le.s32.totalorder 1, %s11
    %p165 = scmp.lt.s32.totalorder %s11, 9
    %p166 = pnand %p164, %p165
    %p167 = pneg %p166
    // Predicated region
    $region9: #{bottleneck_forward.3} parent=5 // pred_check
      _
    $region10: #{bottleneck_forward.3} parent=5 // pred_check_branch
      %169 = sbr.rel (%p166) target = $region12
    $region11: #{bottleneck_forward.3} parent=5 // pred_region
      %s170 = ssub.s32 %s11, 1
      // Predicated region
      $region13: #{bottleneck_forward.3} parent=11 // pred_check
        %p171 = pneg %p72
      $region14: #{bottleneck_forward.3} parent=11 // pred_check_branch
        %173 = sbr.rel (%p171) target = $region16
      $region15: #{bottleneck_forward.3} parent=11 // pred_region
        _
      $region16: #{bottleneck_forward.3} parent=11 // pred_fallthru
        _
    $region12: #{bottleneck_forward.3} parent=5 // pred_fallthru
      _
    %p174 = scmp.lt.s32.totalorder %s11, 8
    // Predicated region
    $region17: #{bottleneck_forward.3} parent=5 // pred_check
      %p175 = pneg %p174
    $region18: #{bottleneck_forward.3} parent=5 // pred_check_branch
      %177 = sbr.rel (%p175) target = $region20
    $region19: #{bottleneck_forward.3} parent=5 // pred_region
      // Predicated region
      $region21: #{bottleneck_forward.3} parent=19 // pred_check
        %p178 = pneg %p45
      $region22: #{bottleneck_forward.3} parent=19 // pred_check_branch
        %180 = sbr.rel (%p178) target = $region24
      $region23: #{bottleneck_forward.3} parent=19 // pred_region
        %p181 = scmp.lt.s32.totalorder %s18, 1
        %s182 = scalar_select %p181, %s18, 1
        %p183 = scmp.lt.s32.totalorder %s19, 3
        %s184 = scalar_select %p183, %s19, 3
        %s185 = smul.addr %s184, 2
        %s186 = smul.addr %s182, 8
        %s187 = sadd.s32 %s185, %s186
        %s188 = smul.addr %s187, 2
        %s189 = scalar_lea.vmem %s0, %s188
      $region24: #{bottleneck_forward.3} parent=19 // pred_fallthru
        _
    $region20: #{bottleneck_forward.3} parent=5 // pred_fallthru
      _
    %p190 = scmp.le.s32.totalorder 1, %s11
    %p191 = scmp.lt.s32.totalorder %s11, 9
    %p192 = pnand %p190, %p191
    %p193 = pneg %p192
    // Predicated region
    $region25: #{bottleneck_forward.3} parent=5 // pred_check
      _
    $region26: #{bottleneck_forward.3} parent=5 // pred_check_branch
      %195 = sbr.rel (%p192) target = $region28
    $region27: #{bottleneck_forward.3} parent=5 // pred_region
      %s196 = ssub.s32 %s11, 1
      %p197 = scmp.lt.s32.totalorder %s20, 1
      %s198 = scalar_select %p197, %s20, 1
      %p199 = scmp.lt.s32.totalorder %s21, 3
      %s200 = scalar_select %p199, %s21, 3
      %s201 = smul.addr %s200, 2
      %s202 = smul.addr %s198, 8
      %s203 = sadd.s32 %s201, %s202
      %s204 = smul.addr %s203, 2
      %s205 = scalar_lea.vmem %s0, %s204
      %p206 = pneg %p51
      %p207 = pneg %p48
      %p208 = pneg %p72
      %p209 = pneg %p69
      %p210 = pneg %p100
      %p211 = pneg %p97
      %p212 = scmp.lt.s32.totalorder %s20, 1
      %s213 = scalar_select %p212, %s20, 1
      %p214 = scmp.lt.s32.totalorder %s21, 3
      %s215 = scalar_select %p214, %s21, 3
      %s216 = smul.addr %s215, 2
      %s217 = smul.addr %s213, 8
      %s218 = sadd.s32 %s216, %s217
      %s219 = smul.addr %s218, 8
      %s220 = scalar_lea.vmem %s2, %s219
      %p221 = pneg %p128
      %p222 = pneg %p125
      %p223 = scmp.lt.s32.totalorder %s20, 1
      %s224 = scalar_select %p223, %s20, 1
      %p225 = scmp.lt.s32.totalorder %s21, 3
      %s226 = scalar_select %p225, %s21, 3
      %s227 = smul.addr %s224, 4
      %s228 = sadd.s32 %s226, %s227
      %s229 = smul.addr %s228, 8
      %s230 = scalar_lea.vmem %s3, %s229
      %p231 = pneg %p156
      %p232 = pneg %p153
      %p233 = scmp.lt.s32.totalorder %s20, 1
      %s234 = scalar_select %p233, %s20, 1
      %p235 = scmp.lt.s32.totalorder %s21, 3
      %s236 = scalar_select %p235, %s21, 3
      %s237 = smul.addr %s234, 4
      %s238 = sadd.s32 %s236, %s237
      %s239 = smul.addr %s238, 8
      %s240 = scalar_lea.vmem %s4, %s239
      %p241 = scmp.lt.s32.totalorder %s20, 1
      %s242 = scalar_select %p241, %s20, 1
      %p243 = scmp.lt.s32.totalorder %s21, 3
      %s244 = scalar_select %p243, %s21, 3
      %s245 = smul.addr %s244, 2
      %s246 = smul.addr %s242, 8
      %s247 = sadd.s32 %s245, %s246
      %s248 = smul.addr %s247, 2
      %s249 = scalar_lea.vmem %s0, %s248
      %p250 = scmp.lt.s32.totalorder %s20, 1
      %s251 = scalar_select %p250, %s20, 1
      %p252 = scmp.lt.s32.totalorder %s21, 3
      %s253 = scalar_select %p252, %s21, 3
      %s254 = smul.addr %s253, 2
      %s255 = smul.addr %s251, 8
      %s256 = sadd.s32 %s254, %s255
      %s257 = smul.addr %s256, 8
      %s258 = scalar_lea.vmem %s2, %s257
      %p259 = scmp.lt.s32.totalorder %s20, 1
      %s260 = scalar_select %p259, %s20, 1
      %p261 = scmp.lt.s32.totalorder %s21, 3
      %s262 = scalar_select %p261, %s21, 3
      %s263 = smul.addr %s260, 4
      %s264 = sadd.s32 %s262, %s263
      %s265 = smul.addr %s264, 8
      %s266 = scalar_lea.vmem %s3, %s265
      %p267 = scmp.lt.s32.totalorder %s20, 1
      %s268 = scalar_select %p267, %s20, 1
      %p269 = scmp.lt.s32.totalorder %s21, 3
      %s270 = scalar_select %p269, %s21, 3
      %s271 = smul.addr %s268, 4
      %s272 = sadd.s32 %s270, %s271
      %s273 = smul.addr %s272, 8
      %s274 = scalar_lea.vmem %s4, %s273
      %v276 = vld [vmem:[%s1] sm:$0xf]
      %v277 = vld [vmem:[%s249] sm:$0xf]
      %v280 = vunpack.c.l.s4 1983009808
      %v281 = vunpack.c.0.s8 %v280
      %v282 = vlaneseq
      %v283 = vshrl.u32 %v282, 7
      %v284 = vsub.s32 %v281, %v283
      %v285 = vrot.slane %v277, %v284
      %v286 = vcombine.high %v285, %v285
      %vm287 = vcmask 31744
      %v289 = vsel %vm287, %v276, 0
      %vm291 = vcmask 1041408
      %v293 = vsel %vm291, %v285, 0
      %v296 = vsel %vm291, %v286, 0
      %298 = vmatprep.subr.bf16.mxu0 %v296
      %299 = vmatpush1.bf16.msra.mxu0 %v293
      %300 = vmatprep.subr.bf16.mxu0 0
      %301 = vmatpush1.bf16.msra.mxu0 0
      %302 = vmatprep.subr.bf16.mxu0 0
      %303 = vmatpush1.bf16.msra.mxu0 0
      %304 = vmatprep.subr.bf16.mxu0 0
      %305 = vmatpush1.bf16.msra.mxu0 0
      %306 = vmatprep.subr.bf16.mxu0 0
      %307 = vmatpush1.bf16.msra.mxu0 0
      %308 = vmatprep.subr.bf16.mxu0 0
      %309 = vmatpush1.bf16.msra.mxu0 0
      %310 = vmatprep.subr.bf16.mxu0 0
      %311 = vmatpush1.bf16.msra.mxu0 0
      %312 = vmatprep.subr.bf16.mxu0 0
      %313 = vmatpush1.bf16.msra.mxu0 0
      %314 = vmatprep.subr.bf16.mxu0 0
      %315 = vmatpush1.bf16.msra.mxu0 0
      %316 = vmatprep.subr.bf16.mxu0 0
      %317 = vmatpush1.bf16.msra.mxu0 0
      %318 = vmatprep.subr.bf16.mxu0 0
      %319 = vmatpush1.bf16.msra.mxu0 0
      %320 = vmatprep.subr.bf16.mxu0 0
      %321 = vmatpush1.bf16.msra.mxu0 0
      %322 = vmatprep.subr.bf16.mxu0 0
      %323 = vmatpush1.bf16.msra.mxu0 0
      %324 = vmatprep.subr.bf16.mxu0 0
      %325 = vmatpush1.bf16.msra.mxu0 0
      %326 = vmatprep.subr.bf16.mxu0 0
      %327 = vmatpush1.bf16.msra.mxu0 0
      %328 = vmatprep.subr.bf16.mxu0 0
      %329 = vmatpush1.bf16.msra.mxu0 0
      %330 = vmatprep.mubr.bf16.mxu0 0
      %331 = vmatmul.mubr.bf16.gmra.mrb[0].mxu0 %v289
      %v332 = vpop.f32.mrb[0].mxu0
      %v333 = vadd.f32 0.0, %v332
      %v334 = vpop.f32.mrb[0].mxu0
      %v335 = vadd.f32 0.0, %v334
      %v336 = vpop.f32.mrb[0].mxu0
      %v337 = vpop.f32.mrb[0].mxu0
      %338 = vdwg.mxu0
      %339 = vst [vmem:[%s258] sm:$0xff] %v333
      %340 = vst [vmem:[%s258 + $0x8] sm:$0xff] %v335
      %v341 = vadd.f32 %v333, %v335
      %342 = vadd.xlane.f32.xlu0 %v341
      %v343 = vpop.xlane.xlu0 %342
      %vm344 = vcmask 7168
      %345 = vst.msk [vmem:[%s266] sm:$0xff] %vm344, %v343
      %v346 = vmul.f32 %v333, %v333
      %v347 = vmul.f32 %v335, %v335
      %v348 = vadd.f32 %v346, %v347
      %349 = vadd.xlane.f32.xlu0 %v348
      %v350 = vpop.xlane.xlu0 %349
      %351 = vst.msk [vmem:[%s274] sm:$0xff] %vm344, %v350
      %p352 = scmp.lt.s32.totalorder %s20, 1
      %s353 = scalar_select %p352, %s20, 1
      %p354 = scmp.lt.s32.totalorder %s21, 3
      %s355 = scalar_select %p354, %s21, 3
      %s356 = smul.addr %s355, 2
      %s357 = smul.addr %s353, 8
      %s358 = sadd.s32 %s356, %s357
      %s359 = smul.addr %s358, 8
      %s360 = scalar_lea.vmem %s2, %s359
      %p361 = scmp.lt.s32.totalorder %s20, 1
      %s362 = scalar_select %p361, %s20, 1
      %p363 = scmp.lt.s32.totalorder %s21, 3
      %s364 = scalar_select %p363, %s21, 3
      %s365 = smul.addr %s362, 4
      %s366 = sadd.s32 %s364, %s365
      %s367 = smul.addr %s366, 8
      %s368 = scalar_lea.vmem %s3, %s367
      %p369 = scmp.lt.s32.totalorder %s20, 1
      %s370 = scalar_select %p369, %s20, 1
      %p371 = scmp.lt.s32.totalorder %s21, 3
      %s372 = scalar_select %p371, %s21, 3
      %s373 = smul.addr %s370, 4
      %s374 = sadd.s32 %s372, %s373
      %s375 = smul.addr %s374, 8
      %s376 = scalar_lea.vmem %s4, %s375
      // Predicated region
      $region29: #{bottleneck_forward.3} parent=27 // pred_check
        %p377 = pneg %p97
      $region30: #{bottleneck_forward.3} parent=27 // pred_check_branch
        %379 = sbr.rel (%p377) target = $region32
      $region31: #{bottleneck_forward.3} parent=27 // pred_region
        _
      $region32: #{bottleneck_forward.3} parent=27 // pred_fallthru
        _
      // Predicated region
      $region33: #{bottleneck_forward.3} parent=27 // pred_check
        %p380 = pneg %p125
      $region34: #{bottleneck_forward.3} parent=27 // pred_check_branch
        %382 = sbr.rel (%p380) target = $region36
      $region35: #{bottleneck_forward.3} parent=27 // pred_region
        _
      $region36: #{bottleneck_forward.3} parent=27 // pred_fallthru
        _
      // Predicated region
      $region37: #{bottleneck_forward.3} parent=27 // pred_check
        %p383 = pneg %p153
      $region38: #{bottleneck_forward.3} parent=27 // pred_check_branch
        %385 = sbr.rel (%p383) target = $region40
      $region39: #{bottleneck_forward.3} parent=27 // pred_region
        _
      $region40: #{bottleneck_forward.3} parent=27 // pred_fallthru
        _
    $region28: #{bottleneck_forward.3} parent=5 // pred_fallthru
      _
    %p386 = scmp.le.s32.totalorder 2, %s11
    // Predicated region
    $region41: #{bottleneck_forward.3} parent=5 // pred_check
      %p387 = pneg %p386
    $region42: #{bottleneck_forward.3} parent=5 // pred_check_branch
      %389 = sbr.rel (%p387) target = $region44
    $region43: #{bottleneck_forward.3} parent=5 // pred_region
      %s390 = ssub.s32 %s11, 2
      // Predicated region
      $region45: #{bottleneck_forward.3} parent=43 // pred_check
        %p391 = pneg %p103
      $region46: #{bottleneck_forward.3} parent=43 // pred_check_branch
        %393 = sbr.rel (%p391) target = $region48
      $region47: #{bottleneck_forward.3} parent=43 // pred_region
        %p394 = scmp.lt.s32.totalorder %s22, 1
        %s395 = scalar_select %p394, %s22, 1
        %p396 = scmp.lt.s32.totalorder %s23, 3
        %s397 = scalar_select %p396, %s23, 3
        %s398 = smul.addr %s397, 2
        %s399 = smul.addr %s395, 8
        %s400 = sadd.s32 %s398, %s399
        %s401 = smul.addr %s400, 8
        %s402 = scalar_lea.vmem %s2, %s401
      $region48: #{bottleneck_forward.3} parent=43 // pred_fallthru
        _
      // Predicated region
      $region49: #{bottleneck_forward.3} parent=43 // pred_check
        %p403 = pneg %p131
      $region50: #{bottleneck_forward.3} parent=43 // pred_check_branch
        %405 = sbr.rel (%p403) target = $region52
      $region51: #{bottleneck_forward.3} parent=43 // pred_region
        %p406 = scmp.lt.s32.totalorder %s22, 1
        %s407 = scalar_select %p406, %s22, 1
        %p408 = scmp.lt.s32.totalorder %s23, 3
        %s409 = scalar_select %p408, %s23, 3
        %s410 = smul.addr %s407, 4
        %s411 = sadd.s32 %s409, %s410
        %s412 = smul.addr %s411, 8
        %s413 = scalar_lea.vmem %s3, %s412
      $region52: #{bottleneck_forward.3} parent=43 // pred_fallthru
        _
      // Predicated region
      $region53: #{bottleneck_forward.3} parent=43 // pred_check
        %p414 = pneg %p159
      $region54: #{bottleneck_forward.3} parent=43 // pred_check_branch
        %416 = sbr.rel (%p414) target = $region56
      $region55: #{bottleneck_forward.3} parent=43 // pred_region
        %p417 = scmp.lt.s32.totalorder %s22, 1
        %s418 = scalar_select %p417, %s22, 1
        %p419 = scmp.lt.s32.totalorder %s23, 3
        %s420 = scalar_select %p419, %s23, 3
        %s421 = smul.addr %s418, 4
        %s422 = sadd.s32 %s420, %s421
        %s423 = smul.addr %s422, 8
        %s424 = scalar_lea.vmem %s4, %s423
      $region56: #{bottleneck_forward.3} parent=43 // pred_fallthru
        _
    $region44: #{bottleneck_forward.3} parent=5 // pred_fallthru
      _
  $region6: #{bottleneck_forward.3} parent=0 // loop_footer
    %s15 = sadd.s32 1, %s11
  $region7: #{bottleneck_forward.3} parent=0 // loop_footer_branch
    %10 = sbr.rel target = $region3
  $region8: #{bottleneck_forward.3} parent=0 // loop_exit
    _

// kernel: bottleneck_forward.5
$region0: #{bottleneck_forward.5}
  #allocation0 [shape = 'u32[]', space=smem, size = 0x4, offset = 0x4, fixed_abs, tag = 'smem constant byte address 0x4 - core index']
  #allocation1 [shape = 'u32[144,128]{1,0:T(1,128)}', space=vmem, size = 0x12000, scoped, tag = 'internal scratch']
  %s0 = inlined_call_operand.vmem [shape: f32[2,4,8,256], index: 0, kind: input, shape index: {}]
  %s1 = inlined_call_operand.vmem [shape: f32[8,2], index: 1, kind: input, shape index: {}]
  %s2 = inlined_call_operand.vmem [shape: f32[2,4,8,256], index: 2, kind: output, shape index: {}]
  %s3 = sld [smem:[#allocation0]]
  $region41: #{bottleneck_forward.5} parent=0
    _
  %s5 = ssub.s32 1, %s3
  %s6 = scalar_select 0, %s5, %s3
  loop: start=0, step=1, limit=10
  $region2: #{bottleneck_forward.5} parent=0 // loop_pre_header
    _
  $region3: #{bottleneck_forward.5} parent=0 // loop_header
    %s8 = sphi 0, %s12
    %p9 = scmp.ge.s32.totalorder %s8, 10
    %s15 = sphi 0, %s27
    %s16 = sphi 0, %s23
    %s17 = sphi 0, %s15
    %s18 = sphi 0, %s16
    %s19 = sphi 0, %s17
    %s20 = sphi 0, %s18
    %s32 = sphi 0, %s34
    %s35 = sphi 0, %s32
    %s36 = sphi 0, %s35
    %s52 = sphi 0, %s36
    %s56 = sphi 0, %s56
    %s58 = sphi 0, %s56
    %s59 = sphi 0, %s58
    %s73 = sphi 0, %s59
    %s81 = sphi 0, %s83
    %s84 = sphi 0, %s81
    %s85 = sphi 0, %s84
    %s101 = sphi 0, %s85
  $region4: #{bottleneck_forward.5} parent=0 // loop_header_branch
    %11 = sbr.rel (%p9) target = $region8
  $region5: #{bottleneck_forward.5} parent=0 // loop_body
    %s13 = ssub.s32 %s8, 1
    %s14 = ssub.s32 %s8, 2
    %s21 = sadd.s32 1, %s16
    %p22 = scmp.ge.s32.totalorder %s21, 4
    %s23 = scalar_select %p22, 0, %s21
    %s24 = sadd.s32 1, %s15
    %s25 = scalar_select %p22, %s24, %s15
    %p26 = scmp.ge.s32.totalorder %s25, 2
    %s27 = scalar_select %p26, 0, %s25
    %s28 = ssub.s32 %s15, %s27
    %s29 = ssub.s32 %s16, %s23
    %s30 = sor.u32 %s28, %s29
    %p31 = scmp.eq.s32.totalorder %s30, 0
    %s33 = sadd.s32 %s32, 1
    %s34 = scalar_select %p31, %s32, %s33
    %p37 = pneg %p31
    %p38 = scmp.eq.s32.totalorder %s8, 7
    %p39 = por %p37, %p38
    %p40 = scmp.ne.s32.totalorder %s32, %s35
    %p41 = scmp.eq.s32.totalorder %s8, 0
    %p42 = por %p40, %p41
    %p43 = scmp.ne.s32.totalorder %s32, %s35
    %p44 = scmp.eq.s32.totalorder %s13, 7
    %p45 = por %p43, %p44
    %p46 = scmp.ne.s32.totalorder %s35, %s36
    %p47 = scmp.eq.s32.totalorder %s13, 0
    %p48 = por %p46, %p47
    %p49 = scmp.ne.s32.totalorder %s35, %s36
    %p50 = scmp.eq.s32.totalorder %s14, 7
    %p51 = por %p49, %p50
    %p53 = scmp.ne.s32.totalorder %s36, %s52
    %p54 = scmp.eq.s32.totalorder %s14, 0
    %p55 = por %p53, %p54
    %s57 = sadd.s32 %s56, 1
    %p60 = scmp.eq.s32.totalorder %s8, 7
    %p61 = scmp.ne.s32.totalorder %s56, %s58
    %p62 = scmp.eq.s32.totalorder %s8, 0
    %p63 = por %p61, %p62
    %p64 = scmp.ne.s32.totalorder %s56, %s58
    %p65 = scmp.eq.s32.totalorder %s13, 7
    %p66 = por %p64, %p65
    %p67 = scmp.ne.s32.totalorder %s58, %s59
    %p68 = scmp.eq.s32.totalorder %s13, 0
    %p69 = por %p67, %p68
    %p70 = scmp.ne.s32.totalorder %s58, %s59
    %p71 = scmp.eq.s32.totalorder %s14, 7
    %p72 = por %p70, %p71
    %p74 = scmp.ne.s32.totalorder %s59, %s73
    %p75 = scmp.eq.s32.totalorder %s14, 0
    %p76 = por %p74, %p75
    %s77 = ssub.s32 %s15, %s27
    %s78 = ssub.s32 %s16, %s23
    %s79 = sor.u32 %s77, %s78
    %p80 = scmp.eq.s32.totalorder %s79, 0
    %s82 = sadd.s32 %s81, 1
    %s83 = scalar_select %p80, %s81, %s82
    %p86 = pneg %p80
    %p87 = scmp.eq.s32.totalorder %s8, 7
    %p88 = por %p86, %p87
    %p89 = scmp.ne.s32.totalorder %s81, %s84
    %p90 = scmp.eq.s32.totalorder %s8, 0
    %p91 = por %p89, %p90
    %p92 = scmp.ne.s32.totalorder %s81, %s84
    %p93 = scmp.eq.s32.totalorder %s13, 7
    %p94 = por %p92, %p93
    %p95 = scmp.ne.s32.totalorder %s84, %s85
    %p96 = scmp.eq.s32.totalorder %s13, 0
    %p97 = por %p95, %p96
    %p98 = scmp.ne.s32.totalorder %s84, %s85
    %p99 = scmp.eq.s32.totalorder %s14, 7
    %p100 = por %p98, %p99
    %p102 = scmp.ne.s32.totalorder %s85, %s101
    %p103 = scmp.eq.s32.totalorder %s14, 0
    %p104 = por %p102, %p103
    %p105 = scmp.le.s32.totalorder 1, %s8
    %p106 = scmp.lt.s32.totalorder %s8, 9
    %p107 = pnand %p105, %p106
    %p108 = pneg %p107
    // Predicated region
    $region9: #{bottleneck_forward.5} parent=5 // pred_check
      _
    $region10: #{bottleneck_forward.5} parent=5 // pred_check_branch
      %110 = sbr.rel (%p107) target = $region12
    $region11: #{bottleneck_forward.5} parent=5 // pred_region
      %s111 = ssub.s32 %s8, 1
      // Predicated region
      $region13: #{bottleneck_forward.5} parent=11 // pred_check
        %p112 = pneg %p69
      $region14: #{bottleneck_forward.5} parent=11 // pred_check_branch
        %114 = sbr.rel (%p112) target = $region16
      $region15: #{bottleneck_forward.5} parent=11 // pred_region
        _
      $region16: #{bottleneck_forward.5} parent=11 // pred_fallthru
        _
    $region12: #{bottleneck_forward.5} parent=5 // pred_fallthru
      _
    %p115 = scmp.lt.s32.totalorder %s8, 8
    // Predicated region
    $region17: #{bottleneck_forward.5} parent=5 // pred_check
      %p116 = pneg %p115
    $region18: #{bottleneck_forward.5} parent=5 // pred_check_branch
      %118 = sbr.rel (%p116) target = $region20
    $region19: #{bottleneck_forward.5} parent=5 // pred_region
      // Predicated region
      $region21: #{bottleneck_forward.5} parent=19 // pred_check
        %p119 = pneg %p42
      $region22: #{bottleneck_forward.5} parent=19 // pred_check_branch
        %121 = sbr.rel (%p119) target = $region24
      $region23: #{bottleneck_forward.5} parent=19 // pred_region
        %p122 = scmp.lt.s32.totalorder %s15, 1
        %s123 = scalar_select %p122, %s15, 1
        %p124 = scmp.lt.s32.totalorder %s16, 3
        %s125 = scalar_select %p124, %s16, 3
        %s126 = smul.addr %s125, 2
        %s127 = smul.addr %s123, 8
        %s128 = sadd.s32 %s126, %s127
        %s129 = smul.addr %s128, 8
        %s130 = scalar_lea.vmem %s0, %s129
      $region24: #{bottleneck_forward.5} parent=19 // pred_fallthru
        _
    $region20: #{bottleneck_forward.5} parent=5 // pred_fallthru
      _
    %p131 = scmp.le.s32.totalorder 1, %s8
    %p132 = scmp.lt.s32.totalorder %s8, 9
    %p133 = pnand %p131, %p132
    %p134 = pneg %p133
    // Predicated region
    $region25: #{bottleneck_forward.5} parent=5 // pred_check
      _
    $region26: #{bottleneck_forward.5} parent=5 // pred_check_branch
      %136 = sbr.rel (%p133) target = $region28
    $region27: #{bottleneck_forward.5} parent=5 // pred_region
      %s137 = ssub.s32 %s8, 1
      %p138 = scmp.lt.s32.totalorder %s17, 1
      %s139 = scalar_select %p138, %s17, 1
      %p140 = scmp.lt.s32.totalorder %s18, 3
      %s141 = scalar_select %p140, %s18, 3
      %s142 = smul.addr %s141, 2
      %s143 = smul.addr %s139, 8
      %s144 = sadd.s32 %s142, %s143
      %s145 = smul.addr %s144, 8
      %s146 = scalar_lea.vmem %s0, %s145
      %p147 = pneg %p48
      %p148 = pneg %p45
      %p149 = pneg %p69
      %p150 = pneg %p66
      %p151 = pneg %p97
      %p152 = pneg %p94
      %p153 = scmp.lt.s32.totalorder %s17, 1
      %s154 = scalar_select %p153, %s17, 1
      %p155 = scmp.lt.s32.totalorder %s18, 3
      %s156 = scalar_select %p155, %s18, 3
      %s157 = smul.addr %s156, 2
      %s158 = smul.addr %s154, 8
      %s159 = sadd.s32 %s157, %s158
      %s160 = smul.addr %s159, 8
      %s161 = scalar_lea.vmem %s2, %s160
      %p162 = scmp.lt.s32.totalorder %s17, 1
      %s163 = scalar_select %p162, %s17, 1
      %p164 = scmp.lt.s32.totalorder %s18, 3
      %s165 = scalar_select %p164, %s18, 3
      %s166 = smul.addr %s165, 2
      %s167 = smul.addr %s163, 8
      %s168 = sadd.s32 %s166, %s167
      %s169 = smul.addr %s168, 8
      %s170 = scalar_lea.vmem %s0, %s169
      %p171 = scmp.lt.s32.totalorder %s17, 1
      %s172 = scalar_select %p171, %s17, 1
      %p173 = scmp.lt.s32.totalorder %s18, 3
      %s174 = scalar_select %p173, %s18, 3
      %s175 = smul.addr %s174, 2
      %s176 = smul.addr %s172, 8
      %s177 = sadd.s32 %s175, %s176
      %s178 = smul.addr %s177, 8
      %s179 = scalar_lea.vmem %s2, %s178
      %v180 = vld [vmem:[%s1] sm:$0xff]
      %v181 = vld [vmem:[%s170] sm:$0xff]
      %v182 = vld [vmem:[%s170 + $0x8] sm:$0xff]
      %184 = vset.pattern.permute.xlu0 0
      %185 = vperm.xlu0 %184, %v180
      %v186 = vpop.permute.xlu0 %185
      %v188 = vmul.f32 %v181, %v186
      %v189 = vmul.f32 %v182, %v186
      %190 = vset.pattern.permute.xlu0 1
      %191 = vperm.xlu0 %190, %v180
      %v192 = vpop.permute.xlu0 %191
      %v194 = vadd.f32 %v188, %v192
      %v195 = vadd.f32 %v189, %v192
      %v196 = vmax.f32 %v194, 0.0
      %v197 = vmax.f32 %v195, 0.0
      %198 = vst [vmem:[%s179] sm:$0xff] %v196
      %199 = vst [vmem:[%s179 + $0x8] sm:$0xff] %v197
      %p200 = scmp.lt.s32.totalorder %s17, 1
      %s201 = scalar_select %p200, %s17, 1
      %p202 = scmp.lt.s32.totalorder %s18, 3
      %s203 = scalar_select %p202, %s18, 3
      %s204 = smul.addr %s203, 2
      %s205 = smul.addr %s201, 8
      %s206 = sadd.s32 %s204, %s205
      %s207 = smul.addr %s206, 8
      %s208 = scalar_lea.vmem %s2, %s207
      // Predicated region
      $region29: #{bottleneck_forward.5} parent=27 // pred_check
        %p209 = pneg %p94
      $region30: #{bottleneck_forward.5} parent=27 // pred_check_branch
        %211 = sbr.rel (%p209) target = $region32
      $region31: #{bottleneck_forward.5} parent=27 // pred_region
        _
      $region32: #{bottleneck_forward.5} parent=27 // pred_fallthru
        _
    $region28: #{bottleneck_forward.5} parent=5 // pred_fallthru
      _
    %p212 = scmp.le.s32.totalorder 2, %s8
    // Predicated region
    $region33: #{bottleneck_forward.5} parent=5 // pred_check
      %p213 = pneg %p212
    $region34: #{bottleneck_forward.5} parent=5 // pred_check_branch
      %215 = sbr.rel (%p213) target = $region36
    $region35: #{bottleneck_forward.5} parent=5 // pred_region
      %s216 = ssub.s32 %s8, 2
      // Predicated region
      $region37: #{bottleneck_forward.5} parent=35 // pred_check
        %p217 = pneg %p100
      $region38: #{bottleneck_forward.5} parent=35 // pred_check_branch
        %219 = sbr.rel (%p217) target = $region40
      $region39: #{bottleneck_forward.5} parent=35 // pred_region
        %p220 = scmp.lt.s32.totalorder %s19, 1
        %s221 = scalar_select %p220, %s19, 1
        %p222 = scmp.lt.s32.totalorder %s20, 3
        %s223 = scalar_select %p222, %s20, 3
        %s224 = smul.addr %s223, 2
        %s225 = smul.addr %s221, 8
        %s226 = sadd.s32 %s224, %s225
        %s227 = smul.addr %s226, 8
        %s228 = scalar_lea.vmem %s2, %s227
      $region40: #{bottleneck_forward.5} parent=35 // pred_fallthru
        _
    $region36: #{bottleneck_forward.5} parent=5 // pred_fallthru
      _
  $region6: #{bottleneck_forward.5} parent=0 // loop_footer
    %s12 = sadd.s32 1, %s8
  $region7: #{bottleneck_forward.5} parent=0 // loop_footer_branch
    %7 = sbr.rel target = $region3
  $region8: #{bottleneck_forward.5} parent=0 // loop_exit
    _

// kernel: bottleneck_forward.4
$region0: #{bottleneck_forward.4}
  #allocation0 [shape = 'u32[]', space=smem, size = 0x4, offset = 0x4, fixed_abs, tag = 'smem constant byte address 0x4 - core index']
  #allocation1 [shape = 'u32[144,128]{1,0:T(1,128)}', space=vmem, size = 0x12000, scoped, tag = 'internal scratch']
  %s0 = inlined_call_operand.vmem [shape: f32[2,4,8,256], index: 0, kind: input, shape index: {}, may-alias: {0,1,2}]
  %s1 = inlined_call_operand.vmem [shape: f32[2,4,8,256], index: 1, kind: input, shape index: {}, may-alias: {0,1,2}]
  %s2 = inlined_call_operand.vmem [shape: f32[2,4,8,256], index: 2, kind: input, shape index: {}, may-alias: {0,1,2}]
  %s3 = inlined_call_operand.vmem [shape: f32[8,2], index: 3, kind: input, shape index: {}]
  %s4 = inlined_call_operand.vmem [shape: bf16[27,8,8], index: 4, kind: input, shape index: {}]
  %s5 = inlined_call_operand.vmem [shape: f32[9,256], index: 5, kind: input, shape index: {}]
  %s6 = inlined_call_operand.vmem [shape: f32[2,4,8,256], index: 6, kind: output, shape index: {0}]
  %s7 = inlined_call_operand.vmem [shape: f32[2,4,8,1], index: 7, kind: output, shape index: {1}]
  %s8 = inlined_call_operand.vmem [shape: f32[2,4,8,1], index: 8, kind: output, shape index: {2}]
  %9 = xla_tuple %s6, %s7, %s8
  %s10 = sld [smem:[#allocation0]]
  $region73: #{bottleneck_forward.4} parent=0
    _
  %s12 = ssub.s32 1, %s10
  %s13 = scalar_select 0, %s12, %s10
  loop: start=0, step=1, limit=10
  $region2: #{bottleneck_forward.4} parent=0 // loop_pre_header
    _
  $region3: #{bottleneck_forward.4} parent=0 // loop_header
    %s15 = sphi 0, %s19
    %p16 = scmp.ge.s32.totalorder %s15, 10
    %s22 = sphi 0, %s34
    %s23 = sphi 0, %s30
    %s24 = sphi 0, %s22
    %s25 = sphi 0, %s23
    %s26 = sphi 0, %s24
    %s27 = sphi 0, %s25
    %s45 = sphi 0, %s47
    %s48 = sphi 0, %s45
    %s49 = sphi 0, %s48
    %s65 = sphi 0, %s49
    %s73 = sphi 0, %s75
    %s76 = sphi 0, %s73
    %s77 = sphi 0, %s76
    %s93 = sphi 0, %s77
    %s107 = sphi 0, %s109
    %s110 = sphi 0, %s107
    %s111 = sphi 0, %s110
    %s127 = sphi 0, %s111
    %s131 = sphi 0, %s131
    %s133 = sphi 0, %s131
    %s134 = sphi 0, %s133
    %s148 = sphi 0, %s134
    %s152 = sphi 0, %s152
    %s154 = sphi 0, %s152
    %s155 = sphi 0, %s154
    %s169 = sphi 0, %s155
    %s173 = sphi 0, %s173
    %s175 = sphi 0, %s173
    %s176 = sphi 0, %s175
    %s190 = sphi 0, %s176
    %s198 = sphi 0, %s200
    %s201 = sphi 0, %s198
    %s202 = sphi 0, %s201
    %s218 = sphi 0, %s202
    %s226 = sphi 0, %s228
    %s229 = sphi 0, %s226
    %s230 = sphi 0, %s229
    %s246 = sphi 0, %s230
    %s254 = sphi 0, %s256
    %s257 = sphi 0, %s254
    %s258 = sphi 0, %s257
    %s274 = sphi 0, %s258
  $region4: #{bottleneck_forward.4} parent=0 // loop_header_branch
    %18 = sbr.rel (%p16) target = $region8
  $region5: #{bottleneck_forward.4} parent=0 // loop_body
    %s20 = ssub.s32 %s15, 1
    %s21 = ssub.s32 %s15, 2
    %s28 = sadd.s32 1, %s23
    %p29 = scmp.ge.s32.totalorder %s28, 4
    %s30 = scalar_select %p29, 0, %s28
    %s31 = sadd.s32 1, %s22
    %s32 = scalar_select %p29, %s31, %s22
    %p33 = scmp.ge.s32.totalorder %s32, 2
    %s34 = scalar_select %p33, 0, %s32
    %s35 = ssub.s32 %s23, 1
    %p36 = scmp.gt.s32.totalorder %s35, 0
    %s37 = scalar_select %p36, %s35, 0
    %s38 = ssub.s32 %s30, 1
    %p39 = scmp.gt.s32.totalorder %s38, 0
    %s40 = scalar_select %p39, %s38, 0
    %s41 = ssub.s32 %s22, %s34
    %s42 = ssub.s32 %s37, %s40
    %s43 = sor.u32 %s41, %s42
    %p44 = scmp.eq.s32.totalorder %s43, 0
    %s46 = sadd.s32 %s45, 1
    %s47 = scalar_select %p44, %s45, %s46
    %p50 = pneg %p44
    %p51 = scmp.eq.s32.totalorder %s15, 7
    %p52 = por %p50, %p51
    %p53 = scmp.ne.s32.totalorder %s45, %s48
    %p54 = scmp.eq.s32.totalorder %s15, 0
    %p55 = por %p53, %p54
    %p56 = scmp.ne.s32.totalorder %s45, %s48
    %p57 = scmp.eq.s32.totalorder %s20, 7
    %p58 = por %p56, %p57
    %p59 = scmp.ne.s32.totalorder %s48, %s49
    %p60 = scmp.eq.s32.totalorder %s20, 0
    %p61 = por %p59, %p60
    %p62 = scmp.ne.s32.totalorder %s48, %s49
    %p63 = scmp.eq.s32.totalorder %s21, 7
    %p64 = por %p62, %p63
    %p66 = scmp.ne.s32.totalorder %s49, %s65
    %p67 = scmp.eq.s32.totalorder %s21, 0
    %p68 = por %p66, %p67
    %s69 = ssub.s32 %s22, %s34
    %s70 = ssub.s32 %s23, %s30
    %s71 = sor.u32 %s69, %s70
    %p72 = scmp.eq.s32.totalorder %s71, 0
    %s74 = sadd.s32 %s73, 1
    %s75 = scalar_select %p72, %s73, %s74
    %p78 = pneg %p72
    %p79 = scmp.eq.s32.totalorder %s15, 7
    %p80 = por %p78, %p79
    %p81 = scmp.ne.s32.totalorder %s73, %s76
    %p82 = scmp.eq.s32.totalorder %s15, 0
    %p83 = por %p81, %p82
    %p84 = scmp.ne.s32.totalorder %s73, %s76
    %p85 = scmp.eq.s32.totalorder %s20, 7
    %p86 = por %p84, %p85
    %p87 = scmp.ne.s32.totalorder %s76, %s77
    %p88 = scmp.eq.s32.totalorder %s20, 0
    %p89 = por %p87, %p88
    %p90 = scmp.ne.s32.totalorder %s76, %s77
    %p91 = scmp.eq.s32.totalorder %s21, 7
    %p92 = por %p90, %p91
    %p94 = scmp.ne.s32.totalorder %s77, %s93
    %p95 = scmp.eq.s32.totalorder %s21, 0
    %p96 = por %p94, %p95
    %s97 = sadd.s32 %s23, 1
    %p98 = scmp.lt.s32.totalorder %s97, 3
    %s99 = scalar_select %p98, %s97, 3
    %s100 = sadd.s32 %s30, 1
    %p101 = scmp.lt.s32.totalorder %s100, 3
    %s102 = scalar_select %p101, %s100, 3
    %s103 = ssub.s32 %s22, %s34
    %s104 = ssub.s32 %s99, %s102
    %s105 = sor.u32 %s103, %s104
    %p106 = scmp.eq.s32.totalorder %s105, 0
    %s108 = sadd.s32 %s107, 1
    %s109 = scalar_select %p106, %s107, %s108
    %p112 = pneg %p106
    %p113 = scmp.eq.s32.totalorder %s15, 7
    %p114 = por %p112, %p113
    %p115 = scmp.ne.s32.totalorder %s107, %s110
    %p116 = scmp.eq.s32.totalorder %s15, 0
    %p117 = por %p115, %p116
    %p118 = scmp.ne.s32.totalorder %s107, %s110
    %p119 = scmp.eq.s32.totalorder %s20, 7
    %p120 = por %p118, %p119
    %p121 = scmp.ne.s32.totalorder %s110, %s111
    %p122 = scmp.eq.s32.totalorder %s20, 0
    %p123 = por %p121, %p122
    %p124 = scmp.ne.s32.totalorder %s110, %s111
    %p125 = scmp.eq.s32.totalorder %s21, 7
    %p126 = por %p124, %p125
    %p128 = scmp.ne.s32.totalorder %s111, %s127
    %p129 = scmp.eq.s32.totalorder %s21, 0
    %p130 = por %p128, %p129
    %s132 = sadd.s32 %s131, 1
    %p135 = scmp.eq.s32.totalorder %s15, 7
    %p136 = scmp.ne.s32.totalorder %s131, %s133
    %p137 = scmp.eq.s32.totalorder %s15, 0
    %p138 = por %p136, %p137
    %p139 = scmp.ne.s32.totalorder %s131, %s133
    %p140 = scmp.eq.s32.totalorder %s20, 7
    %p141 = por %p139, %p140
    %p142 = scmp.ne.s32.totalorder %s133, %s134
    %p143 = scmp.eq.s32.totalorder %s20, 0
    %p144 = por %p142, %p143
    %p145 = scmp.ne.s32.totalorder %s133, %s134
    %p146 = scmp.eq.s32.totalorder %s21, 7
    %p147 = por %p145, %p146
    %p149 = scmp.ne.s32.totalorder %s134, %s148
    %p150 = scmp.eq.s32.totalorder %s21, 0
    %p151 = por %p149, %p150
    %s153 = sadd.s32 %s152, 1
    %p156 = scmp.eq.s32.totalorder %s15, 7
    %p157 = scmp.ne.s32.totalorder %s152, %s154
    %p158 = scmp.eq.s32.totalorder %s15, 0
    %p159 = por %p157, %p158
    %p160 = scmp.ne.s32.totalorder %s152, %s154
    %p161 = scmp.eq.s32.totalorder %s20, 7
    %p162 = por %p160, %p161
    %p163 = scmp.ne.s32.totalorder %s154, %s155
    %p164 = scmp.eq.s32.totalorder %s20, 0
    %p165 = por %p163, %p164
    %p166 = scmp.ne.s32.totalorder %s154, %s155
    %p167 = scmp.eq.s32.totalorder %s21, 7
    %p168 = por %p166, %p167
    %p170 = scmp.ne.s32.totalorder %s155, %s169
    %p171 = scmp.eq.s32.totalorder %s21, 0
    %p172 = por %p170, %p171
    %s174 = sadd.s32 %s173, 1
    %p177 = scmp.eq.s32.totalorder %s15, 7
    %p178 = scmp.ne.s32.totalorder %s173, %s175
    %p179 = scmp.eq.s32.totalorder %s15, 0
    %p180 = por %p178, %p179
    %p181 = scmp.ne.s32.totalorder %s173, %s175
    %p182 = scmp.eq.s32.totalorder %s20, 7
    %p183 = por %p181, %p182
    %p184 = scmp.ne.s32.totalorder %s175, %s176
    %p185 = scmp.eq.s32.totalorder %s20, 0
    %p186 = por %p184, %p185
    %p187 = scmp.ne.s32.totalorder %s175, %s176
    %p188 = scmp.eq.s32.totalorder %s21, 7
    %p189 = por %p187, %p188
    %p191 = scmp.ne.s32.totalorder %s176, %s190
    %p192 = scmp.eq.s32.totalorder %s21, 0
    %p193 = por %p191, %p192
    %s194 = ssub.s32 %s22, %s34
    %s195 = ssub.s32 %s23, %s30
    %s196 = sor.u32 %s194, %s195
    %p197 = scmp.eq.s32.totalorder %s196, 0
    %s199 = sadd.s32 %s198, 1
    %s200 = scalar_select %p197, %s198, %s199
    %p203 = pneg %p197
    %p204 = scmp.eq.s32.totalorder %s15, 7
    %p205 = por %p203, %p204
    %p206 = scmp.ne.s32.totalorder %s198, %s201
    %p207 = scmp.eq.s32.totalorder %s15, 0
    %p208 = por %p206, %p207
    %p209 = scmp.ne.s32.totalorder %s198, %s201
    %p210 = scmp.eq.s32.totalorder %s20, 7
    %p211 = por %p209, %p210
    %p212 = scmp.ne.s32.totalorder %s201, %s202
    %p213 = scmp.eq.s32.totalorder %s20, 0
    %p214 = por %p212, %p213
    %p215 = scmp.ne.s32.totalorder %s201, %s202
    %p216 = scmp.eq.s32.totalorder %s21, 7
    %p217 = por %p215, %p216
    %p219 = scmp.ne.s32.totalorder %s202, %s218
    %p220 = scmp.eq.s32.totalorder %s21, 0
    %p221 = por %p219, %p220
    %s222 = ssub.s32 %s22, %s34
    %s223 = ssub.s32 %s23, %s30
    %s224 = sor.u32 %s222, %s223
    %p225 = scmp.eq.s32.totalorder %s224, 0
    %s227 = sadd.s32 %s226, 1
    %s228 = scalar_select %p225, %s226, %s227
    %p231 = pneg %p225
    %p232 = scmp.eq.s32.totalorder %s15, 7
    %p233 = por %p231, %p232
    %p234 = scmp.ne.s32.totalorder %s226, %s229
    %p235 = scmp.eq.s32.totalorder %s15, 0
    %p236 = por %p234, %p235
    %p237 = scmp.ne.s32.totalorder %s226, %s229
    %p238 = scmp.eq.s32.totalorder %s20, 7
    %p239 = por %p237, %p238
    %p240 = scmp.ne.s32.totalorder %s229, %s230
    %p241 = scmp.eq.s32.totalorder %s20, 0
    %p242 = por %p240, %p241
    %p243 = scmp.ne.s32.totalorder %s229, %s230
    %p244 = scmp.eq.s32.totalorder %s21, 7
    %p245 = por %p243, %p244
    %p247 = scmp.ne.s32.totalorder %s230, %s246
    %p248 = scmp.eq.s32.totalorder %s21, 0
    %p249 = por %p247, %p248
    %s250 = ssub.s32 %s22, %s34
    %s251 = ssub.s32 %s23, %s30
    %s252 = sor.u32 %s250, %s251
    %p253 = scmp.eq.s32.totalorder %s252, 0
    %s255 = sadd.s32 %s254, 1
    %s256 = scalar_select %p253, %s254, %s255
    %p259 = pneg %p253
    %p260 = scmp.eq.s32.totalorder %s15, 7
    %p261 = por %p259, %p260
    %p262 = scmp.ne.s32.totalorder %s254, %s257
    %p263 = scmp.eq.s32.totalorder %s15, 0
    %p264 = por %p262, %p263
    %p265 = scmp.ne.s32.totalorder %s254, %s257
    %p266 = scmp.eq.s32.totalorder %s20, 7
    %p267 = por %p265, %p266
    %p268 = scmp.ne.s32.totalorder %s257, %s258
    %p269 = scmp.eq.s32.totalorder %s20, 0
    %p270 = por %p268, %p269
    %p271 = scmp.ne.s32.totalorder %s257, %s258
    %p272 = scmp.eq.s32.totalorder %s21, 7
    %p273 = por %p271, %p272
    %p275 = scmp.ne.s32.totalorder %s258, %s274
    %p276 = scmp.eq.s32.totalorder %s21, 0
    %p277 = por %p275, %p276
    %p278 = scmp.le.s32.totalorder 1, %s15
    %p279 = scmp.lt.s32.totalorder %s15, 9
    %p280 = pnand %p278, %p279
    %p281 = pneg %p280
    // Predicated region
    $region9: #{bottleneck_forward.4} parent=5 // pred_check
      _
    $region10: #{bottleneck_forward.4} parent=5 // pred_check_branch
      %283 = sbr.rel (%p280) target = $region12
    $region11: #{bottleneck_forward.4} parent=5 // pred_region
      %s284 = ssub.s32 %s15, 1
      // Predicated region
      $region13: #{bottleneck_forward.4} parent=11 // pred_check
        %p285 = pneg %p144
      $region14: #{bottleneck_forward.4} parent=11 // pred_check_branch
        %287 = sbr.rel (%p285) target = $region16
      $region15: #{bottleneck_forward.4} parent=11 // pred_region
        _
      $region16: #{bottleneck_forward.4} parent=11 // pred_fallthru
        _
      // Predicated region
      $region17: #{bottleneck_forward.4} parent=11 // pred_check
        %p288 = pneg %p165
      $region18: #{bottleneck_forward.4} parent=11 // pred_check_branch
        %290 = sbr.rel (%p288) target = $region20
      $region19: #{bottleneck_forward.4} parent=11 // pred_region
        _
      $region20: #{bottleneck_forward.4} parent=11 // pred_fallthru
        _
      // Predicated region
      $region21: #{bottleneck_forward.4} parent=11 // pred_check
        %p291 = pneg %p186
      $region22: #{bottleneck_forward.4} parent=11 // pred_check_branch
        %293 = sbr.rel (%p291) target = $region24
      $region23: #{bottleneck_forward.4} parent=11 // pred_region
        _
      $region24: #{bottleneck_forward.4} parent=11 // pred_fallthru
        _
    $region12: #{bottleneck_forward.4} parent=5 // pred_fallthru
      _
    %p294 = scmp.lt.s32.totalorder %s15, 8
    // Predicated region
    $region25: #{bottleneck_forward.4} parent=5 // pred_check
      %p295 = pneg %p294
    $region26: #{bottleneck_forward.4} parent=5 // pred_check_branch
      %297 = sbr.rel (%p295) target = $region28
    $region27: #{bottleneck_forward.4} parent=5 // pred_region
      // Predicated region
      $region29: #{bottleneck_forward.4} parent=27 // pred_check
        %p298 = pneg %p55
      $region30: #{bottleneck_forward.4} parent=27 // pred_check_branch
        %300 = sbr.rel (%p298) target = $region32
      $region31: #{bottleneck_forward.4} parent=27 // pred_region
        %s301 = ssub.s32 %s23, 1
        %p302 = scmp.gt.s32.totalorder %s301, 0
        %s303 = scalar_select %p302, %s301, 0
        %p304 = scmp.lt.s32.totalorder %s22, 1
        %s305 = scalar_select %p304, %s22, 1
        %p306 = scmp.lt.s32.totalorder %s303, 3
        %s307 = scalar_select %p306, %s303, 3
        %s308 = smul.addr %s307, 2
        %s309 = smul.addr %s305, 8
        %s310 = sadd.s32 %s308, %s309
        %s311 = smul.addr %s310, 8
        %s312 = scalar_lea.vmem %s0, %s311
        %s313 = ssub.s32 %s23, 1
        %p314 = scmp.gt.s32.totalorder %s313, 0
        %s315 = scalar_select %p314, %s313, 0
      $region32: #{bottleneck_forward.4} parent=27 // pred_fallthru
        _
      // Predicated region
      $region33: #{bottleneck_forward.4} parent=27 // pred_check
        %p316 = pneg %p83
      $region34: #{bottleneck_forward.4} parent=27 // pred_check_branch
        %318 = sbr.rel (%p316) target = $region36
      $region35: #{bottleneck_forward.4} parent=27 // pred_region
        %p319 = scmp.lt.s32.totalorder %s22, 1
        %s320 = scalar_select %p319, %s22, 1
        %p321 = scmp.lt.s32.totalorder %s23, 3
        %s322 = scalar_select %p321, %s23, 3
        %s323 = smul.addr %s322, 2
        %s324 = smul.addr %s320, 8
        %s325 = sadd.s32 %s323, %s324
        %s326 = smul.addr %s325, 8
        %s327 = scalar_lea.vmem %s1, %s326
      $region36: #{bottleneck_forward.4} parent=27 // pred_fallthru
        _
      // Predicated region
      $region37: #{bottleneck_forward.4} parent=27 // pred_check
        %p328 = pneg %p117
      $region38: #{bottleneck_forward.4} parent=27 // pred_check_branch
        %330 = sbr.rel (%p328) target = $region40
      $region39: #{bottleneck_forward.4} parent=27 // pred_region
        %s331 = sadd.s32 %s23, 1
        %p332 = scmp.lt.s32.totalorder %s331, 3
        %s333 = scalar_select %p332, %s331, 3
        %p334 = scmp.lt.s32.totalorder %s22, 1
        %s335 = scalar_select %p334, %s22, 1
        %p336 = scmp.lt.s32.totalorder %s333, 3
        %s337 = scalar_select %p336, %s333, 3
        %s338 = smul.addr %s337, 2
        %s339 = smul.addr %s335, 8
        %s340 = sadd.s32 %s338, %s339
        %s341 = smul.addr %s340, 8
        %s342 = scalar_lea.vmem %s2, %s341
        %s343 = sadd.s32 %s23, 1
        %p344 = scmp.lt.s32.totalorder %s343, 3
        %s345 = scalar_select %p344, %s343, 3
      $region40: #{bottleneck_forward.4} parent=27 // pred_fallthru
        _
    $region28: #{bottleneck_forward.4} parent=5 // pred_fallthru
      _
    %p346 = scmp.le.s32.totalorder 1, %s15
    %p347 = scmp.lt.s32.totalorder %s15, 9
    %p348 = pnand %p346, %p347
    %p349 = pneg %p348
    // Predicated region
    $region41: #{bottleneck_forward.4} parent=5 // pred_check
      _
    $region42: #{bottleneck_forward.4} parent=5 // pred_check_branch
      %351 = sbr.rel (%p348) target = $region44
    $region43: #{bottleneck_forward.4} parent=5 // pred_region
      %s352 = ssub.s32 %s15, 1
      %s353 = ssub.s32 %s25, 1
      %p354 = scmp.gt.s32.totalorder %s353, 0
      %s355 = scalar_select %p354, %s353, 0
      %p356 = scmp.lt.s32.totalorder %s24, 1
      %s357 = scalar_select %p356, %s24, 1
      %p358 = scmp.lt.s32.totalorder %s355, 3
      %s359 = scalar_select %p358, %s355, 3
      %s360 = smul.addr %s359, 2
      %s361 = smul.addr %s357, 8
      %s362 = sadd.s32 %s360, %s361
      %s363 = smul.addr %s362, 8
      %s364 = scalar_lea.vmem %s0, %s363
      %p365 = pneg %p61
      %p366 = pneg %p58
      %p367 = scmp.lt.s32.totalorder %s24, 1
      %s368 = scalar_select %p367, %s24, 1
      %p369 = scmp.lt.s32.totalorder %s25, 3
      %s370 = scalar_select %p369, %s25, 3
      %s371 = smul.addr %s370, 2
      %s372 = smul.addr %s368, 8
      %s373 = sadd.s32 %s371, %s372
      %s374 = smul.addr %s373, 8
      %s375 = scalar_lea.vmem %s1, %s374
      %p376 = pneg %p89
      %p377 = pneg %p86
      %s378 = sadd.s32 %s25, 1
      %p379 = scmp.lt.s32.totalorder %s378, 3
      %s380 = scalar_select %p379, %s378, 3
      %p381 = scmp.lt.s32.totalorder %s24, 1
      %s382 = scalar_select %p381, %s24, 1
      %p383 = scmp.lt.s32.totalorder %s380, 3
      %s384 = scalar_select %p383, %s380, 3
      %s385 = smul.addr %s384, 2
      %s386 = smul.addr %s382, 8
      %s387 = sadd.s32 %s385, %s386
      %s388 = smul.addr %s387, 8
      %s389 = scalar_lea.vmem %s2, %s388
      %p390 = pneg %p123
      %p391 = pneg %p120
      %p392 = pneg %p144
      %p393 = pneg %p141
      %p394 = pneg %p165
      %p395 = pneg %p162
      %p396 = pneg %p186
      %p397 = pneg %p183
      %p398 = pneg %p214
      %p399 = pneg %p211
      %p400 = scmp.lt.s32.totalorder %s24, 1
      %s401 = scalar_select %p400, %s24, 1
      %p402 = scmp.lt.s32.totalorder %s25, 3
      %s403 = scalar_select %p402, %s25, 3
      %s404 = smul.addr %s403, 2
      %s405 = smul.addr %s401, 8
      %s406 = sadd.s32 %s404, %s405
      %s407 = smul.addr %s406, 8
      %s408 = scalar_lea.vmem %s6, %s407
      %p409 = pneg %p242
      %p410 = pneg %p239
      %p411 = scmp.lt.s32.totalorder %s24, 1
      %s412 = scalar_select %p411, %s24, 1
      %p413 = scmp.lt.s32.totalorder %s25, 3
      %s414 = scalar_select %p413, %s25, 3
      %s415 = smul.addr %s412, 4
      %s416 = sadd.s32 %s414, %s415
      %s417 = smul.addr %s416, 8
      %s418 = scalar_lea.vmem %s7, %s417
      %p419 = pneg %p270
      %p420 = pneg %p267
      %p421 = scmp.lt.s32.totalorder %s24, 1
      %s422 = scalar_select %p421, %s24, 1
      %p423 = scmp.lt.s32.totalorder %s25, 3
      %s424 = scalar_select %p423, %s25, 3
      %s425 = smul.addr %s422, 4
      %s426 = sadd.s32 %s424, %s425
      %s427 = smul.addr %s426, 8
      %s428 = scalar_lea.vmem %s8, %s427
      %s429 = ssub.s32 %s25, 1
      %p430 = scmp.gt.s32.totalorder %s429, 0
      %s431 = scalar_select %p430, %s429, 0
      %p432 = scmp.lt.s32.totalorder %s24, 1
      %s433 = scalar_select %p432, %s24, 1
      %p434 = scmp.lt.s32.totalorder %s431, 3
      %s435 = scalar_select %p434, %s431, 3
      %s436 = smul.addr %s435, 2
      %s437 = smul.addr %s433, 8
      %s438 = sadd.s32 %s436, %s437
      %s439 = smul.addr %s438, 8
      %s440 = scalar_lea.vmem %s0, %s439
      %s441 = ssub.s32 %s25, 1
      %p442 = scmp.gt.s32.totalorder %s441, 0
      %s443 = scalar_select %p442, %s441, 0
      %p444 = scmp.lt.s32.totalorder %s24, 1
      %s445 = scalar_select %p444, %s24, 1
      %p446 = scmp.lt.s32.totalorder %s25, 3
      %s447 = scalar_select %p446, %s25, 3
      %s448 = smul.addr %s447, 2
      %s449 = smul.addr %s445, 8
      %s450 = sadd.s32 %s448, %s449
      %s451 = smul.addr %s450, 8
      %s452 = scalar_lea.vmem %s1, %s451
      %s453 = sadd.s32 %s25, 1
      %p454 = scmp.lt.s32.totalorder %s453, 3
      %s455 = scalar_select %p454, %s453, 3
      %p456 = scmp.lt.s32.totalorder %s24, 1
      %s457 = scalar_select %p456, %s24, 1
      %p458 = scmp.lt.s32.totalorder %s455, 3
      %s459 = scalar_select %p458, %s455, 3
      %s460 = smul.addr %s459, 2
      %s461 = smul.addr %s457, 8
      %s462 = sadd.s32 %s460, %s461
      %s463 = smul.addr %s462, 8
      %s464 = scalar_lea.vmem %s2, %s463
      %s465 = sadd.s32 %s25, 1
      %p466 = scmp.lt.s32.totalorder %s465, 3
      %s467 = scalar_select %p466, %s465, 3
      %p468 = scmp.lt.s32.totalorder %s24, 1
      %s469 = scalar_select %p468, %s24, 1
      %p470 = scmp.lt.s32.totalorder %s25, 3
      %s471 = scalar_select %p470, %s25, 3
      %s472 = smul.addr %s471, 2
      %s473 = smul.addr %s469, 8
      %s474 = sadd.s32 %s472, %s473
      %s475 = smul.addr %s474, 8
      %s476 = scalar_lea.vmem %s6, %s475
      %p477 = scmp.lt.s32.totalorder %s24, 1
      %s478 = scalar_select %p477, %s24, 1
      %p479 = scmp.lt.s32.totalorder %s25, 3
      %s480 = scalar_select %p479, %s25, 3
      %s481 = smul.addr %s478, 4
      %s482 = sadd.s32 %s480, %s481
      %s483 = smul.addr %s482, 8
      %s484 = scalar_lea.vmem %s7, %s483
      %p485 = scmp.lt.s32.totalorder %s24, 1
      %s486 = scalar_select %p485, %s24, 1
      %p487 = scmp.lt.s32.totalorder %s25, 3
      %s488 = scalar_select %p487, %s25, 3
      %s489 = smul.addr %s486, 4
      %s490 = sadd.s32 %s488, %s489
      %s491 = smul.addr %s490, 8
      %s492 = scalar_lea.vmem %s8, %s491
      %v494 = vld [vmem:[%s3] sm:$0xff]
      %v495 = vld [vmem:[%s440] sm:$0xff]
      %v496 = vld [vmem:[%s440 + $0x8] sm:$0xff]
      %498 = vset.pattern.permute.xlu0 0
      %499 = vperm.xlu0 %498, %v494
      %v500 = vpop.permute.xlu0 %499
      %v502 = vmul.f32 %v495, %v500
      %v503 = vmul.f32 %v496, %v500
      %504 = vset.pattern.permute.xlu0 1
      %505 = vperm.xlu0 %504, %v494
      %v506 = vpop.permute.xlu0 %505
      %v508 = vadd.f32 %v502, %v506
      %v509 = vadd.f32 %v503, %v506
      %v510 = vmax.f32 %v508, 0.0
      %v511 = vmax.f32 %v509, 0.0
      %v512 = vld [vmem:[%s452] sm:$0xff]
      %v513 = vld [vmem:[%s452 + $0x8] sm:$0xff]
      %v514 = vmul.f32 %v512, %v500
      %v515 = vmul.f32 %v513, %v500
      %v516 = vadd.f32 %v514, %v506
      %v517 = vadd.f32 %v515, %v506
      %v518 = vmax.f32 %v516, 0.0
      %v519 = vmax.f32 %v517, 0.0
      %v520 = vld [vmem:[%s464] sm:$0xff]
      %v521 = vld [vmem:[%s464 + $0x8] sm:$0xff]
      %v522 = vmul.f32 %v520, %v500
      %v523 = vmul.f32 %v521, %v500
      %v524 = vadd.f32 %v522, %v506
      %v525 = vadd.f32 %v523, %v506
      %v526 = vmax.f32 %v524, 0.0
      %v527 = vmax.f32 %v525, 0.0
      %v528 = vld [vmem:[%s5] ss:$8 sm:$0x3]
      %s529 = scalar_lea.vmem %s5, 1
      %v530 = vld [vmem:[%s529] ss:$8 sm:$0x3]
      %s531 = scalar_lea.vmem %s5, 2
      %v532 = vld [vmem:[%s531] ss:$8 sm:$0x3]
      %s533 = scalar_lea.vmem %s5, 3
      %v534 = vld [vmem:[%s533] ss:$8 sm:$0x3]
      %s535 = scalar_lea.vmem %s5, 5
      %v536 = vld [vmem:[%s535] ss:$8 sm:$0x3]
      %s537 = scalar_lea.vmem %s5, 6
      %v538 = vld [vmem:[%s537] ss:$8 sm:$0x3]
      %s539 = scalar_lea.vmem %s5, 7
      %v540 = vld [vmem:[%s539] ss:$8 sm:$0x3]
      %s541 = scalar_lea.vmem %s5, 16
      %v542 = vld [vmem:[%s541] ss:$8 sm:$0x3]
      %543 = vrot.lane.b32.xlu0 %v510, 17
      %v544 = vpop.permute.xlu0 %543
      %545 = vrot.lane.b32.xlu0 %v511, 17
      %v546 = vpop.permute.xlu0 %545
      %v547 = vlaneseq
      %v548 = vand.u32 %v547, 127
      %vm549 = vcmp.lt.s32.totalorder %v548, 17
      %v550 = vsel %vm549, %v544, %v546
      %v551 = vsel %vm549, %v546, %v544
      %v553 = vlaneseq
      %v554 = vshrl.u32 %v553, 7
      %v555 = vsub.s32 0, %v554
      %v556 = vrot.slane %v528, %v555
      %v557 = vlaneseq
      %v558 = vshrl.u32 %v557, 7
      %v559 = vsub.s32 1, %v558
      %v560 = vrot.slane %v528, %v559
      %v563 = vmul.f32 %v551, %v556
      %v564 = vmul.f32 %v550, %v560
      %v565 = vld [vmem:[%s4] sm:$0xf]
      %v566 = vpack.c.bf16 %v563, %v563
      %v567 = vpack.c.bf16 %v564, %v564
      %568 = vrot.lane.b32.xlu0 %v510, 16
      %v569 = vpop.permute.xlu0 %568
      %570 = vrot.lane.b32.xlu0 %v511, 16
      %v571 = vpop.permute.xlu0 %570
      %vm572 = vcmp.lt.s32.totalorder %v548, 16
      %v573 = vsel %vm572, %v569, %v571
      %v574 = vsel %vm572, %v571, %v569
      %v576 = vlaneseq
      %v577 = vshrl.u32 %v576, 7
      %v578 = vsub.s32 0, %v577
      %v579 = vrot.slane %v530, %v578
      %v580 = vlaneseq
      %v581 = vshrl.u32 %v580, 7
      %v582 = vsub.s32 1, %v581
      %v583 = vrot.slane %v530, %v582
      %v586 = vmul.f32 %v574, %v579
      %v587 = vmul.f32 %v573, %v583
      %s588 = scalar_lea.vmem %s4, 4
      %v589 = vld [vmem:[%s588] sm:$0xf]
      %v590 = vpack.c.bf16 %v586, %v586
      %v591 = vpack.c.bf16 %v587, %v587
      %vm592 = vcmask 64512
      %v594 = vsel %vm592, %v589, 0
      %vm596 = vcmask 1043456
      %v598 = vsel %vm596, %v590, 0
      %v601 = vsel %vm596, %v591, 0
      %603 = vmatprep.subr.bf16.mxu0 %v601
      %604 = vmatpush1.bf16.msra.mxu0 %v598
      %605 = vmatprep.subr.bf16.mxu0 0
      %606 = vmatpush1.bf16.msra.mxu0 0
      %607 = vmatprep.subr.bf16.mxu0 0
      %608 = vmatpush1.bf16.msra.mxu0 0
      %609 = vmatprep.subr.bf16.mxu0 0
      %610 = vmatpush1.bf16.msra.mxu0 0
      %611 = vmatprep.subr.bf16.mxu0 0
      %612 = vmatpush1.bf16.msra.mxu0 0
      %613 = vmatprep.subr.bf16.mxu0 0
      %614 = vmatpush1.bf16.msra.mxu0 0
      %615 = vmatprep.subr.bf16.mxu0 0
      %616 = vmatpush1.bf16.msra.mxu0 0
      %617 = vmatprep.subr.bf16.mxu0 0
      %618 = vmatpush1.bf16.msra.mxu0 0
      %619 = vmatprep.subr.bf16.mxu0 0
      %620 = vmatpush1.bf16.msra.mxu0 0
      %621 = vmatprep.subr.bf16.mxu0 0
      %622 = vmatpush1.bf16.msra.mxu0 0
      %623 = vmatprep.subr.bf16.mxu0 0
      %624 = vmatpush1.bf16.msra.mxu0 0
      %625 = vmatprep.subr.bf16.mxu0 0
      %626 = vmatpush1.bf16.msra.mxu0 0
      %627 = vmatprep.subr.bf16.mxu0 0
      %628 = vmatpush1.bf16.msra.mxu0 0
      %629 = vmatprep.subr.bf16.mxu0 0
      %630 = vmatpush1.bf16.msra.mxu0 0
      %631 = vmatprep.subr.bf16.mxu0 0
      %632 = vmatpush1.bf16.msra.mxu0 0
      %633 = vmatprep.subr.bf16.mxu0 0
      %634 = vmatpush1.bf16.msra.mxu0 0
      %635 = vmatprep.mubr.bf16.mxu0 0
      %636 = vmatmul.mubr.bf16.gmra.mrb[0].mxu0 %v594
      %v637 = vpop.f32.mrb[0].mxu0
      %v638 = vadd.f32 0.0, %v637
      %v639 = vpop.f32.mrb[0].mxu0
      %v640 = vadd.f32 0.0, %v639
      %v641 = vpop.f32.mrb[0].mxu0
      %v642 = vpop.f32.mrb[0].mxu0
      %643 = vdwg.mxu0
      %v645 = vsel %vm592, %v565, 0
      %v648 = vsel %vm596, %v566, 0
      %v651 = vsel %vm596, %v567, 0
      %653 = vmatprep.subr.bf16.mxu0 %v651
      %654 = vmatpush1.bf16.msra.mxu0 %v648
      %655 = vmatprep.subr.bf16.mxu0 0
      %656 = vmatpush1.bf16.msra.mxu0 0
      %657 = vmatprep.subr.bf16.mxu0 0
      %658 = vmatpush1.bf16.msra.mxu0 0
      %659 = vmatprep.subr.bf16.mxu0 0
      %660 = vmatpush1.bf16.msra.mxu0 0
      %661 = vmatprep.subr.bf16.mxu0 0
      %662 = vmatpush1.bf16.msra.mxu0 0
      %663 = vmatprep.subr.bf16.mxu0 0
      %664 = vmatpush1.bf16.msra.mxu0 0
      %665 = vmatprep.subr.bf16.mxu0 0
      %666 = vmatpush1.bf16.msra.mxu0 0
      %667 = vmatprep.subr.bf16.mxu0 0
      %668 = vmatpush1.bf16.msra.mxu0 0
      %669 = vmatprep.subr.bf16.mxu0 0
      %670 = vmatpush1.bf16.msra.mxu0 0
      %671 = vmatprep.subr.bf16.mxu0 0
      %672 = vmatpush1.bf16.msra.mxu0 0
      %673 = vmatprep.subr.bf16.mxu0 0
      %674 = vmatpush1.bf16.msra.mxu0 0
      %675 = vmatprep.subr.bf16.mxu0 0
      %676 = vmatpush1.bf16.msra.mxu0 0
      %677 = vmatprep.subr.bf16.mxu0 0
      %678 = vmatpush1.bf16.msra.mxu0 0
      %679 = vmatprep.subr.bf16.mxu0 0
      %680 = vmatpush1.bf16.msra.mxu0 0
      %681 = vmatprep.subr.bf16.mxu0 0
      %682 = vmatpush1.bf16.msra.mxu0 0
      %683 = vmatprep.subr.bf16.mxu0 0
      %684 = vmatpush1.bf16.msra.mxu0 0
      %685 = vmatprep.mubr.bf16.mxu0 0
      %686 = vmatmul.mubr.bf16.gmra.mrb[0].mxu0 %v645
      %v687 = vpop.f32.mrb[0].mxu0
      %v688 = vadd.f32 %v638, %v687
      %v689 = vpop.f32.mrb[0].mxu0
      %v690 = vadd.f32 %v640, %v689
      %v691 = vpop.f32.mrb[0].mxu0
      %v692 = vpop.f32.mrb[0].mxu0
      %693 = vdwg.mxu0
      %694 = vrot.lane.b32.xlu0 %v510, 15
      %v695 = vpop.permute.xlu0 %694
      %696 = vrot.lane.b32.xlu0 %v511, 15
      %v697 = vpop.permute.xlu0 %696
      %vm698 = vcmp.lt.s32.totalorder %v548, 15
      %v699 = vsel %vm698, %v695, %v697
      %v700 = vsel %vm698, %v697, %v695
      %v702 = vlaneseq
      %v703 = vshrl.u32 %v702, 7
      %v704 = vsub.s32 0, %v703
      %v705 = vrot.slane %v532, %v704
      %v706 = vlaneseq
      %v707 = vshrl.u32 %v706, 7
      %v708 = vsub.s32 1, %v707
      %v709 = vrot.slane %v532, %v708
      %v712 = vmul.f32 %v700, %v705
      %v713 = vmul.f32 %v699, %v709
      %s714 = scalar_lea.vmem %s4, 8
      %v715 = vld [vmem:[%s714] sm:$0xf]
      %v716 = vpack.c.bf16 %v712, %v712
      %v717 = vpack.c.bf16 %v713, %v713
      %v719 = vsel %vm592, %v715, 0
      %v722 = vsel %vm596, %v716, 0
      %v725 = vsel %vm596, %v717, 0
      %727 = vmatprep.subr.bf16.mxu0 %v725
      %728 = vmatpush1.bf16.msra.mxu0 %v722
      %729 = vmatprep.subr.bf16.mxu0 0
      %730 = vmatpush1.bf16.msra.mxu0 0
      %731 = vmatprep.subr.bf16.mxu0 0
      %732 = vmatpush1.bf16.msra.mxu0 0
      %733 = vmatprep.subr.bf16.mxu0 0
      %734 = vmatpush1.bf16.msra.mxu0 0
      %735 = vmatprep.subr.bf16.mxu0 0
      %736 = vmatpush1.bf16.msra.mxu0 0
      %737 = vmatprep.subr.bf16.mxu0 0
      %738 = vmatpush1.bf16.msra.mxu0 0
      %739 = vmatprep.subr.bf16.mxu0 0
      %740 = vmatpush1.bf16.msra.mxu0 0
      %741 = vmatprep.subr.bf16.mxu0 0
      %742 = vmatpush1.bf16.msra.mxu0 0
      %743 = vmatprep.subr.bf16.mxu0 0
      %744 = vmatpush1.bf16.msra.mxu0 0
      %745 = vmatprep.subr.bf16.mxu0 0
      %746 = vmatpush1.bf16.msra.mxu0 0
      %747 = vmatprep.subr.bf16.mxu0 0
      %748 = vmatpush1.bf16.msra.mxu0 0
      %749 = vmatprep.subr.bf16.mxu0 0
      %750 = vmatpush1.bf16.msra.mxu0 0
      %751 = vmatprep.subr.bf16.mxu0 0
      %752 = vmatpush1.bf16.msra.mxu0 0
      %753 = vmatprep.subr.bf16.mxu0 0
      %754 = vmatpush1.bf16.msra.mxu0 0
      %755 = vmatprep.subr.bf16.mxu0 0
      %756 = vmatpush1.bf16.msra.mxu0 0
      %757 = vmatprep.subr.bf16.mxu0 0
      %758 = vmatpush1.bf16.msra.mxu0 0
      %759 = vmatprep.mubr.bf16.mxu0 0
      %760 = vmatmul.mubr.bf16.gmra.mrb[0].mxu0 %v719
      %v761 = vpop.f32.mrb[0].mxu0
      %v762 = vadd.f32 0.0, %v761
      %v763 = vpop.f32.mrb[0].mxu0
      %v764 = vadd.f32 0.0, %v763
      %v765 = vpop.f32.mrb[0].mxu0
      %v766 = vpop.f32.mrb[0].mxu0
      %767 = vdwg.mxu0
      %v768 = vadd.f32 %v688, %v762
      %v769 = vadd.f32 %v690, %v764
      %770 = vrot.lane.b32.xlu0 %v510, 1
      %v771 = vpop.permute.xlu0 %770
      %772 = vrot.lane.b32.xlu0 %v511, 1
      %v773 = vpop.permute.xlu0 %772
      %vm774 = vcmp.lt.s32.totalorder %v548, 1
      %v775 = vsel %vm774, %v771, %v773
      %v776 = vsel %vm774, %v773, %v771
      %v778 = vlaneseq
      %v779 = vshrl.u32 %v778, 7
      %v780 = vsub.s32 0, %v779
      %v781 = vrot.slane %v534, %v780
      %v782 = vlaneseq
      %v783 = vshrl.u32 %v782, 7
      %v784 = vsub.s32 1, %v783
      %v785 = vrot.slane %v534, %v784
      %v788 = vmul.f32 %v776, %v781
      %v789 = vmul.f32 %v775, %v785
      %s790 = scalar_lea.vmem %s4, 12
      %v791 = vld [vmem:[%s790] sm:$0xf]
      %v792 = vpack.c.bf16 %v788, %v788
      %v793 = vpack.c.bf16 %v789, %v789
      %v795 = vsel %vm592, %v791, 0
      %v798 = vsel %vm596, %v792, 0
      %v801 = vsel %vm596, %v793, 0
      %803 = vmatprep.subr.bf16.mxu0 %v801
      %804 = vmatpush1.bf16.msra.mxu0 %v798
      %805 = vmatprep.subr.bf16.mxu0 0
      %806 = vmatpush1.bf16.msra.mxu0 0
      %807 = vmatprep.subr.bf16.mxu0 0
      %808 = vmatpush1.bf16.msra.mxu0 0
      %809 = vmatprep.subr.bf16.mxu0 0
      %810 = vmatpush1.bf16.msra.mxu0 0
      %811 = vmatprep.subr.bf16.mxu0 0
      %812 = vmatpush1.bf16.msra.mxu0 0
      %813 = vmatprep.subr.bf16.mxu0 0
      %814 = vmatpush1.bf16.msra.mxu0 0
      %815 = vmatprep.subr.bf16.mxu0 0
      %816 = vmatpush1.bf16.msra.mxu0 0
      %817 = vmatprep.subr.bf16.mxu0 0
      %818 = vmatpush1.bf16.msra.mxu0 0
      %819 = vmatprep.subr.bf16.mxu0 0
      %820 = vmatpush1.bf16.msra.mxu0 0
      %821 = vmatprep.subr.bf16.mxu0 0
      %822 = vmatpush1.bf16.msra.mxu0 0
      %823 = vmatprep.subr.bf16.mxu0 0
      %824 = vmatpush1.bf16.msra.mxu0 0
      %825 = vmatprep.subr.bf16.mxu0 0
      %826 = vmatpush1.bf16.msra.mxu0 0
      %827 = vmatprep.subr.bf16.mxu0 0
      %828 = vmatpush1.bf16.msra.mxu0 0
      %829 = vmatprep.subr.bf16.mxu0 0
      %830 = vmatpush1.bf16.msra.mxu0 0
      %831 = vmatprep.subr.bf16.mxu0 0
      %832 = vmatpush1.bf16.msra.mxu0 0
      %833 = vmatprep.subr.bf16.mxu0 0
      %834 = vmatpush1.bf16.msra.mxu0 0
      %835 = vmatprep.mubr.bf16.mxu0 0
      %836 = vmatmul.mubr.bf16.gmra.mrb[0].mxu0 %v795
      %v837 = vpop.f32.mrb[0].mxu0
      %v838 = vadd.f32 0.0, %v837
      %v839 = vpop.f32.mrb[0].mxu0
      %v840 = vadd.f32 0.0, %v839
      %v841 = vpop.f32.mrb[0].mxu0
      %v842 = vpop.f32.mrb[0].mxu0
      %843 = vdwg.mxu0
      %v844 = vadd.f32 %v768, %v838
      %v845 = vadd.f32 %v769, %v840
      %s846 = scalar_lea.vmem %s4, 16
      %v847 = vld [vmem:[%s846] sm:$0xf]
      %v848 = vpack.c.bf16 %v510, %v510
      %v849 = vpack.c.bf16 %v511, %v511
      %v851 = vsel %vm592, %v847, 0
      %v854 = vsel %vm596, %v848, 0
      %v857 = vsel %vm596, %v849, 0
      %859 = vmatprep.subr.bf16.mxu0 %v857
      %860 = vmatpush1.bf16.msra.mxu0 %v854
      %861 = vmatprep.subr.bf16.mxu0 0
      %862 = vmatpush1.bf16.msra.mxu0 0
      %863 = vmatprep.subr.bf16.mxu0 0
      %864 = vmatpush1.bf16.msra.mxu0 0
      %865 = vmatprep.subr.bf16.mxu0 0
      %866 = vmatpush1.bf16.msra.mxu0 0
      %867 = vmatprep.subr.bf16.mxu0 0
      %868 = vmatpush1.bf16.msra.mxu0 0
      %869 = vmatprep.subr.bf16.mxu0 0
      %870 = vmatpush1.bf16.msra.mxu0 0
      %871 = vmatprep.subr.bf16.mxu0 0
      %872 = vmatpush1.bf16.msra.mxu0 0
      %873 = vmatprep.subr.bf16.mxu0 0
      %874 = vmatpush1.bf16.msra.mxu0 0
      %875 = vmatprep.subr.bf16.mxu0 0
      %876 = vmatpush1.bf16.msra.mxu0 0
      %877 = vmatprep.subr.bf16.mxu0 0
      %878 = vmatpush1.bf16.msra.mxu0 0
      %879 = vmatprep.subr.bf16.mxu0 0
      %880 = vmatpush1.bf16.msra.mxu0 0
      %881 = vmatprep.subr.bf16.mxu0 0
      %882 = vmatpush1.bf16.msra.mxu0 0
      %883 = vmatprep.subr.bf16.mxu0 0
      %884 = vmatpush1.bf16.msra.mxu0 0
      %885 = vmatprep.subr.bf16.mxu0 0
      %886 = vmatpush1.bf16.msra.mxu0 0
      %887 = vmatprep.subr.bf16.mxu0 0
      %888 = vmatpush1.bf16.msra.mxu0 0
      %889 = vmatprep.subr.bf16.mxu0 0
      %890 = vmatpush1.bf16.msra.mxu0 0
      %891 = vmatprep.mubr.bf16.mxu0 0
      %892 = vmatmul.mubr.bf16.gmra.mrb[0].mxu0 %v851
      %v893 = vpop.f32.mrb[0].mxu0
      %v894 = vadd.f32 0.0, %v893
      %v895 = vpop.f32.mrb[0].mxu0
      %v896 = vadd.f32 0.0, %v895
      %v897 = vpop.f32.mrb[0].mxu0
      %v898 = vpop.f32.mrb[0].mxu0
      %899 = vdwg.mxu0
      %v900 = vadd.f32 %v844, %v894
      %v901 = vadd.f32 %v845, %v896
      %902 = vrot.lane.b32.xlu0 %v510, 127
      %v903 = vpop.permute.xlu0 %902
      %904 = vrot.lane.b32.xlu0 %v511, 127
      %v905 = vpop.permute.xlu0 %904
      %vm906 = vcmp.lt.s32.totalorder %v548, 127
      %v907 = vsel %vm906, %v903, %v905
      %v908 = vsel %vm906, %v905, %v903
      %v910 = vlaneseq
      %v911 = vshrl.u32 %v910, 7
      %v912 = vsub.s32 0, %v911
      %v913 = vrot.slane %v536, %v912
      %v914 = vlaneseq
      %v915 = vshrl.u32 %v914, 7
      %v916 = vsub.s32 1, %v915
      %v917 = vrot.slane %v536, %v916
      %v920 = vmul.f32 %v907, %v913
      %v921 = vmul.f32 %v908, %v917
      %s922 = scalar_lea.vmem %s4, 20
      %v923 = vld [vmem:[%s922] sm:$0xf]
      %v924 = vpack.c.bf16 %v920, %v920
      %v925 = vpack.c.bf16 %v921, %v921
      %v927 = vsel %vm592, %v923, 0
      %v930 = vsel %vm596, %v924, 0
      %v933 = vsel %vm596, %v925, 0
      %935 = vmatprep.subr.bf16.mxu0 %v933
      %936 = vmatpush1.bf16.msra.mxu0 %v930
      %937 = vmatprep.subr.bf16.mxu0 0
      %938 = vmatpush1.bf16.msra.mxu0 0
      %939 = vmatprep.subr.bf16.mxu0 0
      %940 = vmatpush1.bf16.msra.mxu0 0
      %941 = vmatprep.subr.bf16.mxu0 0
      %942 = vmatpush1.bf16.msra.mxu0 0
      %943 = vmatprep.subr.bf16.mxu0 0
      %944 = vmatpush1.bf16.msra.mxu0 0
      %945 = vmatprep.subr.bf16.mxu0 0
      %946 = vmatpush1.bf16.msra.mxu0 0
      %947 = vmatprep.subr.bf16.mxu0 0
      %948 = vmatpush1.bf16.msra.mxu0 0
      %949 = vmatprep.subr.bf16.mxu0 0
      %950 = vmatpush1.bf16.msra.mxu0 0
      %951 = vmatprep.subr.bf16.mxu0 0
      %952 = vmatpush1.bf16.msra.mxu0 0
      %953 = vmatprep.subr.bf16.mxu0 0
      %954 = vmatpush1.bf16.msra.mxu0 0
      %955 = vmatprep.subr.bf16.mxu0 0
      %956 = vmatpush1.bf16.msra.mxu0 0
      %957 = vmatprep.subr.bf16.mxu0 0
      %958 = vmatpush1.bf16.msra.mxu0 0
      %959 = vmatprep.subr.bf16.mxu0 0
      %960 = vmatpush1.bf16.msra.mxu0 0
      %961 = vmatprep.subr.bf16.mxu0 0
      %962 = vmatpush1.bf16.msra.mxu0 0
      %963 = vmatprep.subr.bf16.mxu0 0
      %964 = vmatpush1.bf16.msra.mxu0 0
      %965 = vmatprep.subr.bf16.mxu0 0
      %966 = vmatpush1.bf16.msra.mxu0 0
      %967 = vmatprep.mubr.bf16.mxu0 0
      %968 = vmatmul.mubr.bf16.gmra.mrb[0].mxu0 %v927
      %v969 = vpop.f32.mrb[0].mxu0
      %v970 = vadd.f32 0.0, %v969
      %v971 = vpop.f32.mrb[0].mxu0
      %v972 = vadd.f32 0.0, %v971
      %v973 = vpop.f32.mrb[0].mxu0
      %v974 = vpop.f32.mrb[0].mxu0
      %975 = vdwg.mxu0
      %v976 = vadd.f32 %v900, %v970
      %v977 = vadd.f32 %v901, %v972
      %978 = vrot.lane.b32.xlu0 %v510, 113
      %v979 = vpop.permute.xlu0 %978
      %980 = vrot.lane.b32.xlu0 %v511, 113
      %v981 = vpop.permute.xlu0 %980
      %vm982 = vcmp.lt.s32.totalorder %v548, 113
      %v983 = vsel %vm982, %v979, %v981
      %v984 = vsel %vm982, %v981, %v979
      %v986 = vlaneseq
      %v987 = vshrl.u32 %v986, 7
      %v988 = vsub.s32 0, %v987
      %v989 = vrot.slane %v538, %v988
      %v990 = vlaneseq
      %v991 = vshrl.u32 %v990, 7
      %v992 = vsub.s32 1, %v991
      %v993 = vrot.slane %v538, %v992
      %v996 = vmul.f32 %v983, %v989
      %v997 = vmul.f32 %v984, %v993
      %s998 = scalar_lea.vmem %s4, 24
      %v999 = vld [vmem:[%s998] sm:$0xf]
      %v1000 = vpack.c.bf16 %v996, %v996
      %v1001 = vpack.c.bf16 %v997, %v997
      %v1003 = vsel %vm592, %v999, 0
      %v1006 = vsel %vm596, %v1000, 0
      %v1009 = vsel %vm596, %v1001, 0
      %1011 = vmatprep.subr.bf16.mxu0 %v1009
      %1012 = vmatpush1.bf16.msra.mxu0 %v1006
      %1013 = vmatprep.subr.bf16.mxu0 0
      %1014 = vmatpush1.bf16.msra.mxu0 0
      %1015 = vmatprep.subr.bf16.mxu0 0
      %1016 = vmatpush1.bf16.msra.mxu0 0
      %1017 = vmatprep.subr.bf16.mxu0 0
      %1018 = vmatpush1.bf16.msra.mxu0 0
      %1019 = vmatprep.subr.bf16.mxu0 0
      %1020 = vmatpush1.bf16.msra.mxu0 0
      %1021 = vmatprep.subr.bf16.mxu0 0
      %1022 = vmatpush1.bf16.msra.mxu0 0
      %1023 = vmatprep.subr.bf16.mxu0 0
      %1024 = vmatpush1.bf16.msra.mxu0 0
      %1025 = vmatprep.subr.bf16.mxu0 0
      %1026 = vmatpush1.bf16.msra.mxu0 0
      %1027 = vmatprep.subr.bf16.mxu0 0
      %1028 = vmatpush1.bf16.msra.mxu0 0
      %1029 = vmatprep.subr.bf16.mxu0 0
      %1030 = vmatpush1.bf16.msra.mxu0 0
      %1031 = vmatprep.subr.bf16.mxu0 0
      %1032 = vmatpush1.bf16.msra.mxu0 0
      %1033 = vmatprep.subr.bf16.mxu0 0
      %1034 = vmatpush1.bf16.msra.mxu0 0
      %1035 = vmatprep.subr.bf16.mxu0 0
      %1036 = vmatpush1.bf16.msra.mxu0 0
      %1037 = vmatprep.subr.bf16.mxu0 0
      %1038 = vmatpush1.bf16.msra.mxu0 0
      %1039 = vmatprep.subr.bf16.mxu0 0
      %1040 = vmatpush1.bf16.msra.mxu0 0
      %1041 = vmatprep.subr.bf16.mxu0 0
      %1042 = vmatpush1.bf16.msra.mxu0 0
      %1043 = vmatprep.mubr.bf16.mxu0 0
      %1044 = vmatmul.mubr.bf16.gmra.mrb[0].mxu0 %v1003
      %v1045 = vpop.f32.mrb[0].mxu0
      %v1046 = vadd.f32 0.0, %v1045
      %v1047 = vpop.f32.mrb[0].mxu0
      %v1048 = vadd.f32 0.0, %v1047
      %v1049 = vpop.f32.mrb[0].mxu0
      %v1050 = vpop.f32.mrb[0].mxu0
      %1051 = vdwg.mxu0
      %v1052 = vadd.f32 %v976, %v1046
      %v1053 = vadd.f32 %v977, %v1048
      %1054 = vrot.lane.b32.xlu0 %v510, 112
      %v1055 = vpop.permute.xlu0 %1054
      %1056 = vrot.lane.b32.xlu0 %v511, 112
      %v1057 = vpop.permute.xlu0 %1056
      %vm1058 = vcmp.lt.s32.totalorder %v548, 112
      %v1059 = vsel %vm1058, %v1055, %v1057
      %v1060 = vsel %vm1058, %v1057, %v1055
      %v1062 = vlaneseq
      %v1063 = vshrl.u32 %v1062, 7
      %v1064 = vsub.s32 0, %v1063
      %v1065 = vrot.slane %v540, %v1064
      %v1066 = vlaneseq
      %v1067 = vshrl.u32 %v1066, 7
      %v1068 = vsub.s32 1, %v1067
      %v1069 = vrot.slane %v540, %v1068
      %v1072 = vmul.f32 %v1059, %v1065
      %v1073 = vmul.f32 %v1060, %v1069
      %s1074 = scalar_lea.vmem %s4, 28
      %v1075 = vld [vmem:[%s1074] sm:$0xf]
      %v1076 = vpack.c.bf16 %v1072, %v1072
      %v1077 = vpack.c.bf16 %v1073, %v1073
      %v1079 = vsel %vm592, %v1075, 0
      %v1082 = vsel %vm596, %v1076, 0
      %v1085 = vsel %vm596, %v1077, 0
      %1087 = vmatprep.subr.bf16.mxu0 %v1085
      %1088 = vmatpush1.bf16.msra.mxu0 %v1082
      %1089 = vmatprep.subr.bf16.mxu0 0
      %1090 = vmatpush1.bf16.msra.mxu0 0
      %1091 = vmatprep.subr.bf16.mxu0 0
      %1092 = vmatpush1.bf16.msra.mxu0 0
      %1093 = vmatprep.subr.bf16.mxu0 0
      %1094 = vmatpush1.bf16.msra.mxu0 0
      %1095 = vmatprep.subr.bf16.mxu0 0
      %1096 = vmatpush1.bf16.msra.mxu0 0
      %1097 = vmatprep.subr.bf16.mxu0 0
      %1098 = vmatpush1.bf16.msra.mxu0 0
      %1099 = vmatprep.subr.bf16.mxu0 0
      %1100 = vmatpush1.bf16.msra.mxu0 0
      %1101 = vmatprep.subr.bf16.mxu0 0
      %1102 = vmatpush1.bf16.msra.mxu0 0
      %1103 = vmatprep.subr.bf16.mxu0 0
      %1104 = vmatpush1.bf16.msra.mxu0 0
      %1105 = vmatprep.subr.bf16.mxu0 0
      %1106 = vmatpush1.bf16.msra.mxu0 0
      %1107 = vmatprep.subr.bf16.mxu0 0
      %1108 = vmatpush1.bf16.msra.mxu0 0
      %1109 = vmatprep.subr.bf16.mxu0 0
      %1110 = vmatpush1.bf16.msra.mxu0 0
      %1111 = vmatprep.subr.bf16.mxu0 0
      %1112 = vmatpush1.bf16.msra.mxu0 0
      %1113 = vmatprep.subr.bf16.mxu0 0
      %1114 = vmatpush1.bf16.msra.mxu0 0
      %1115 = vmatprep.subr.bf16.mxu0 0
      %1116 = vmatpush1.bf16.msra.mxu0 0
      %1117 = vmatprep.subr.bf16.mxu0 0
      %1118 = vmatpush1.bf16.msra.mxu0 0
      %1119 = vmatprep.mubr.bf16.mxu0 0
      %1120 = vmatmul.mubr.bf16.gmra.mrb[0].mxu0 %v1079
      %v1121 = vpop.f32.mrb[0].mxu0
      %v1122 = vadd.f32 0.0, %v1121
      %v1123 = vpop.f32.mrb[0].mxu0
      %v1124 = vadd.f32 0.0, %v1123
      %v1125 = vpop.f32.mrb[0].mxu0
      %v1126 = vpop.f32.mrb[0].mxu0
      %1127 = vdwg.mxu0
      %v1128 = vadd.f32 %v1052, %v1122
      %v1129 = vadd.f32 %v1053, %v1124
      %1130 = vrot.lane.b32.xlu0 %v510, 111
      %v1131 = vpop.permute.xlu0 %1130
      %1132 = vrot.lane.b32.xlu0 %v511, 111
      %v1133 = vpop.permute.xlu0 %1132
      %vm1134 = vcmp.lt.s32.totalorder %v548, 111
      %v1135 = vsel %vm1134, %v1131, %v1133
      %v1136 = vsel %vm1134, %v1133, %v1131
      %v1138 = vlaneseq
      %v1139 = vshrl.u32 %v1138, 7
      %v1140 = vsub.s32 0, %v1139
      %v1141 = vrot.slane %v542, %v1140
      %v1142 = vlaneseq
      %v1143 = vshrl.u32 %v1142, 7
      %v1144 = vsub.s32 1, %v1143
      %v1145 = vrot.slane %v542, %v1144
      %v1148 = vmul.f32 %v1135, %v1141
      %v1149 = vmul.f32 %v1136, %v1145
      %s1150 = scalar_lea.vmem %s4, 32
      %v1151 = vld [vmem:[%s1150] sm:$0xf]
      %v1152 = vpack.c.bf16 %v1148, %v1148
      %v1153 = vpack.c.bf16 %v1149, %v1149
      %v1155 = vsel %vm592, %v1151, 0
      %v1158 = vsel %vm596, %v1152, 0
      %v1161 = vsel %vm596, %v1153, 0
      %1163 = vmatprep.subr.bf16.mxu0 %v1161
      %1164 = vmatpush1.bf16.msra.mxu0 %v1158
      %1165 = vmatprep.subr.bf16.mxu0 0
      %1166 = vmatpush1.bf16.msra.mxu0 0
      %1167 = vmatprep.subr.bf16.mxu0 0
      %1168 = vmatpush1.bf16.msra.mxu0 0
      %1169 = vmatprep.subr.bf16.mxu0 0
      %1170 = vmatpush1.bf16.msra.mxu0 0
      %1171 = vmatprep.subr.bf16.mxu0 0
      %1172 = vmatpush1.bf16.msra.mxu0 0
      %1173 = vmatprep.subr.bf16.mxu0 0
      %1174 = vmatpush1.bf16.msra.mxu0 0
      %1175 = vmatprep.subr.bf16.mxu0 0
      %1176 = vmatpush1.bf16.msra.mxu0 0
      %1177 = vmatprep.subr.bf16.mxu0 0
      %1178 = vmatpush1.bf16.msra.mxu0 0
      %1179 = vmatprep.subr.bf16.mxu0 0
      %1180 = vmatpush1.bf16.msra.mxu0 0
      %1181 = vmatprep.subr.bf16.mxu0 0
      %1182 = vmatpush1.bf16.msra.mxu0 0
      %1183 = vmatprep.subr.bf16.mxu0 0
      %1184 = vmatpush1.bf16.msra.mxu0 0
      %1185 = vmatprep.subr.bf16.mxu0 0
      %1186 = vmatpush1.bf16.msra.mxu0 0
      %1187 = vmatprep.subr.bf16.mxu0 0
      %1188 = vmatpush1.bf16.msra.mxu0 0
      %1189 = vmatprep.subr.bf16.mxu0 0
      %1190 = vmatpush1.bf16.msra.mxu0 0
      %1191 = vmatprep.subr.bf16.mxu0 0
      %1192 = vmatpush1.bf16.msra.mxu0 0
      %1193 = vmatprep.subr.bf16.mxu0 0
      %1194 = vmatpush1.bf16.msra.mxu0 0
      %1195 = vmatprep.mubr.bf16.mxu0 0
      %1196 = vmatmul.mubr.bf16.gmra.mrb[0].mxu0 %v1155
      %v1197 = vpop.f32.mrb[0].mxu0
      %v1198 = vadd.f32 0.0, %v1197
      %v1199 = vpop.f32.mrb[0].mxu0
      %v1200 = vadd.f32 0.0, %v1199
      %v1201 = vpop.f32.mrb[0].mxu0
      %v1202 = vpop.f32.mrb[0].mxu0
      %1203 = vdwg.mxu0
      %v1204 = vadd.f32 %v1128, %v1198
      %v1205 = vadd.f32 %v1129, %v1200
      %1206 = vrot.lane.b32.xlu0 %v518, 17
      %v1207 = vpop.permute.xlu0 %1206
      %1208 = vrot.lane.b32.xlu0 %v519, 17
      %v1209 = vpop.permute.xlu0 %1208
      %v1210 = vsel %vm549, %v1207, %v1209
      %v1211 = vsel %vm549, %v1209, %v1207
      %v1212 = vmul.f32 %v1211, %v556
      %v1213 = vmul.f32 %v1210, %v560
      %s1214 = scalar_lea.vmem %s4, 36
      %v1215 = vld [vmem:[%s1214] sm:$0xf]
      %v1216 = vpack.c.bf16 %v1212, %v1212
      %v1217 = vpack.c.bf16 %v1213, %v1213
      %1218 = vrot.lane.b32.xlu0 %v518, 16
      %v1219 = vpop.permute.xlu0 %1218
      %1220 = vrot.lane.b32.xlu0 %v519, 16
      %v1221 = vpop.permute.xlu0 %1220
      %v1222 = vsel %vm572, %v1219, %v1221
      %v1223 = vsel %vm572, %v1221, %v1219
      %v1224 = vmul.f32 %v1223, %v579
      %v1225 = vmul.f32 %v1222, %v583
      %s1226 = scalar_lea.vmem %s4, 40
      %v1227 = vld [vmem:[%s1226] sm:$0xf]
      %v1228 = vpack.c.bf16 %v1224, %v1224
      %v1229 = vpack.c.bf16 %v1225, %v1225
      %v1231 = vsel %vm592, %v1227, 0
      %v1234 = vsel %vm596, %v1228, 0
      %v1237 = vsel %vm596, %v1229, 0
      %1239 = vmatprep.subr.bf16.mxu0 %v1237
      %1240 = vmatpush1.bf16.msra.mxu0 %v1234
      %1241 = vmatprep.subr.bf16.mxu0 0
      %1242 = vmatpush1.bf16.msra.mxu0 0
      %1243 = vmatprep.subr.bf16.mxu0 0
      %1244 = vmatpush1.bf16.msra.mxu0 0
      %1245 = vmatprep.subr.bf16.mxu0 0
      %1246 = vmatpush1.bf16.msra.mxu0 0
      %1247 = vmatprep.subr.bf16.mxu0 0
      %1248 = vmatpush1.bf16.msra.mxu0 0
      %1249 = vmatprep.subr.bf16.mxu0 0
      %1250 = vmatpush1.bf16.msra.mxu0 0
      %1251 = vmatprep.subr.bf16.mxu0 0
      %1252 = vmatpush1.bf16.msra.mxu0 0
      %1253 = vmatprep.subr.bf16.mxu0 0
      %1254 = vmatpush1.bf16.msra.mxu0 0
      %1255 = vmatprep.subr.bf16.mxu0 0
      %1256 = vmatpush1.bf16.msra.mxu0 0
      %1257 = vmatprep.subr.bf16.mxu0 0
      %1258 = vmatpush1.bf16.msra.mxu0 0
      %1259 = vmatprep.subr.bf16.mxu0 0
      %1260 = vmatpush1.bf16.msra.mxu0 0
      %1261 = vmatprep.subr.bf16.mxu0 0
      %1262 = vmatpush1.bf16.msra.mxu0 0
      %1263 = vmatprep.subr.bf16.mxu0 0
      %1264 = vmatpush1.bf16.msra.mxu0 0
      %1265 = vmatprep.subr.bf16.mxu0 0
      %1266 = vmatpush1.bf16.msra.mxu0 0
      %1267 = vmatprep.subr.bf16.mxu0 0
      %1268 = vmatpush1.bf16.msra.mxu0 0
      %1269 = vmatprep.subr.bf16.mxu0 0
      %1270 = vmatpush1.bf16.msra.mxu0 0
      %1271 = vmatprep.mubr.bf16.mxu0 0
      %1272 = vmatmul.mubr.bf16.gmra.mrb[0].mxu0 %v1231
      %v1273 = vpop.f32.mrb[0].mxu0
      %v1274 = vadd.f32 0.0, %v1273
      %v1275 = vpop.f32.mrb[0].mxu0
      %v1276 = vadd.f32 0.0, %v1275
      %v1277 = vpop.f32.mrb[0].mxu0
      %v1278 = vpop.f32.mrb[0].mxu0
      %1279 = vdwg.mxu0
      %v1281 = vsel %vm592, %v1215, 0
      %v1284 = vsel %vm596, %v1216, 0
      %v1287 = vsel %vm596, %v1217, 0
      %1289 = vmatprep.subr.bf16.mxu0 %v1287
      %1290 = vmatpush1.bf16.msra.mxu0 %v1284
      %1291 = vmatprep.subr.bf16.mxu0 0
      %1292 = vmatpush1.bf16.msra.mxu0 0
      %1293 = vmatprep.subr.bf16.mxu0 0
      %1294 = vmatpush1.bf16.msra.mxu0 0
      %1295 = vmatprep.subr.bf16.mxu0 0
      %1296 = vmatpush1.bf16.msra.mxu0 0
      %1297 = vmatprep.subr.bf16.mxu0 0
      %1298 = vmatpush1.bf16.msra.mxu0 0
      %1299 = vmatprep.subr.bf16.mxu0 0
      %1300 = vmatpush1.bf16.msra.mxu0 0
      %1301 = vmatprep.subr.bf16.mxu0 0
      %1302 = vmatpush1.bf16.msra.mxu0 0
      %1303 = vmatprep.subr.bf16.mxu0 0
      %1304 = vmatpush1.bf16.msra.mxu0 0
      %1305 = vmatprep.subr.bf16.mxu0 0
      %1306 = vmatpush1.bf16.msra.mxu0 0
      %1307 = vmatprep.subr.bf16.mxu0 0
      %1308 = vmatpush1.bf16.msra.mxu0 0
      %1309 = vmatprep.subr.bf16.mxu0 0
      %1310 = vmatpush1.bf16.msra.mxu0 0
      %1311 = vmatprep.subr.bf16.mxu0 0
      %1312 = vmatpush1.bf16.msra.mxu0 0
      %1313 = vmatprep.subr.bf16.mxu0 0
      %1314 = vmatpush1.bf16.msra.mxu0 0
      %1315 = vmatprep.subr.bf16.mxu0 0
      %1316 = vmatpush1.bf16.msra.mxu0 0
      %1317 = vmatprep.subr.bf16.mxu0 0
      %1318 = vmatpush1.bf16.msra.mxu0 0
      %1319 = vmatprep.subr.bf16.mxu0 0
      %1320 = vmatpush1.bf16.msra.mxu0 0
      %1321 = vmatprep.mubr.bf16.mxu0 0
      %1322 = vmatmul.mubr.bf16.gmra.mrb[0].mxu0 %v1281
      %v1323 = vpop.f32.mrb[0].mxu0
      %v1324 = vadd.f32 %v1274, %v1323
      %v1325 = vpop.f32.mrb[0].mxu0
      %v1326 = vadd.f32 %v1276, %v1325
      %v1327 = vpop.f32.mrb[0].mxu0
      %v1328 = vpop.f32.mrb[0].mxu0
      %1329 = vdwg.mxu0
      %1330 = vrot.lane.b32.xlu0 %v518, 15
      %v1331 = vpop.permute.xlu0 %1330
      %1332 = vrot.lane.b32.xlu0 %v519, 15
      %v1333 = vpop.permute.xlu0 %1332
      %v1334 = vsel %vm698, %v1331, %v1333
      %v1335 = vsel %vm698, %v1333, %v1331
      %v1336 = vmul.f32 %v1335, %v705
      %v1337 = vmul.f32 %v1334, %v709
      %s1338 = scalar_lea.vmem %s4, 44
      %v1339 = vld [vmem:[%s1338] sm:$0xf]
      %v1340 = vpack.c.bf16 %v1336, %v1336
      %v1341 = vpack.c.bf16 %v1337, %v1337
      %v1343 = vsel %vm592, %v1339, 0
      %v1346 = vsel %vm596, %v1340, 0
      %v1349 = vsel %vm596, %v1341, 0
      %1351 = vmatprep.subr.bf16.mxu0 %v1349
      %1352 = vmatpush1.bf16.msra.mxu0 %v1346
      %1353 = vmatprep.subr.bf16.mxu0 0
      %1354 = vmatpush1.bf16.msra.mxu0 0
      %1355 = vmatprep.subr.bf16.mxu0 0
      %1356 = vmatpush1.bf16.msra.mxu0 0
      %1357 = vmatprep.subr.bf16.mxu0 0
      %1358 = vmatpush1.bf16.msra.mxu0 0
      %1359 = vmatprep.subr.bf16.mxu0 0
      %1360 = vmatpush1.bf16.msra.mxu0 0
      %1361 = vmatprep.subr.bf16.mxu0 0
      %1362 = vmatpush1.bf16.msra.mxu0 0
      %1363 = vmatprep.subr.bf16.mxu0 0
      %1364 = vmatpush1.bf16.msra.mxu0 0
      %1365 = vmatprep.subr.bf16.mxu0 0
      %1366 = vmatpush1.bf16.msra.mxu0 0
      %1367 = vmatprep.subr.bf16.mxu0 0
      %1368 = vmatpush1.bf16.msra.mxu0 0
      %1369 = vmatprep.subr.bf16.mxu0 0
      %1370 = vmatpush1.bf16.msra.mxu0 0
      %1371 = vmatprep.subr.bf16.mxu0 0
      %1372 = vmatpush1.bf16.msra.mxu0 0
      %1373 = vmatprep.subr.bf16.mxu0 0
      %1374 = vmatpush1.bf16.msra.mxu0 0
      %1375 = vmatprep.subr.bf16.mxu0 0
      %1376 = vmatpush1.bf16.msra.mxu0 0
      %1377 = vmatprep.subr.bf16.mxu0 0
      %1378 = vmatpush1.bf16.msra.mxu0 0
      %1379 = vmatprep.subr.bf16.mxu0 0
      %1380 = vmatpush1.bf16.msra.mxu0 0
      %1381 = vmatprep.subr.bf16.mxu0 0
      %1382 = vmatpush1.bf16.msra.mxu0 0
      %1383 = vmatprep.mubr.bf16.mxu0 0
      %1384 = vmatmul.mubr.bf16.gmra.mrb[0].mxu0 %v1343
      %v1385 = vpop.f32.mrb[0].mxu0
      %v1386 = vadd.f32 0.0, %v1385
      %v1387 = vpop.f32.mrb[0].mxu0
      %v1388 = vadd.f32 0.0, %v1387
      %v1389 = vpop.f32.mrb[0].mxu0
      %v1390 = vpop.f32.mrb[0].mxu0
      %1391 = vdwg.mxu0
      %v1392 = vadd.f32 %v1324, %v1386
      %v1393 = vadd.f32 %v1326, %v1388
      %1394 = vrot.lane.b32.xlu0 %v518, 1
      %v1395 = vpop.permute.xlu0 %1394
      %1396 = vrot.lane.b32.xlu0 %v519, 1
      %v1397 = vpop.permute.xlu0 %1396
      %v1398 = vsel %vm774, %v1395, %v1397
      %v1399 = vsel %vm774, %v1397, %v1395
      %v1400 = vmul.f32 %v1399, %v781
      %v1401 = vmul.f32 %v1398, %v785
      %s1402 = scalar_lea.vmem %s4, 48
      %v1403 = vld [vmem:[%s1402] sm:$0xf]
      %v1404 = vpack.c.bf16 %v1400, %v1400
      %v1405 = vpack.c.bf16 %v1401, %v1401
      %v1407 = vsel %vm592, %v1403, 0
      %v1410 = vsel %vm596, %v1404, 0
      %v1413 = vsel %vm596, %v1405, 0
      %1415 = vmatprep.subr.bf16.mxu0 %v1413
      %1416 = vmatpush1.bf16.msra.mxu0 %v1410
      %1417 = vmatprep.subr.bf16.mxu0 0
      %1418 = vmatpush1.bf16.msra.mxu0 0
      %1419 = vmatprep.subr.bf16.mxu0 0
      %1420 = vmatpush1.bf16.msra.mxu0 0
      %1421 = vmatprep.subr.bf16.mxu0 0
      %1422 = vmatpush1.bf16.msra.mxu0 0
      %1423 = vmatprep.subr.bf16.mxu0 0
      %1424 = vmatpush1.bf16.msra.mxu0 0
      %1425 = vmatprep.subr.bf16.mxu0 0
      %1426 = vmatpush1.bf16.msra.mxu0 0
      %1427 = vmatprep.subr.bf16.mxu0 0
      %1428 = vmatpush1.bf16.msra.mxu0 0
      %1429 = vmatprep.subr.bf16.mxu0 0
      %1430 = vmatpush1.bf16.msra.mxu0 0
      %1431 = vmatprep.subr.bf16.mxu0 0
      %1432 = vmatpush1.bf16.msra.mxu0 0
      %1433 = vmatprep.subr.bf16.mxu0 0
      %1434 = vmatpush1.bf16.msra.mxu0 0
      %1435 = vmatprep.subr.bf16.mxu0 0
      %1436 = vmatpush1.bf16.msra.mxu0 0
      %1437 = vmatprep.subr.bf16.mxu0 0
      %1438 = vmatpush1.bf16.msra.mxu0 0
      %1439 = vmatprep.subr.bf16.mxu0 0
      %1440 = vmatpush1.bf16.msra.mxu0 0
      %1441 = vmatprep.subr.bf16.mxu0 0
      %1442 = vmatpush1.bf16.msra.mxu0 0
      %1443 = vmatprep.subr.bf16.mxu0 0
      %1444 = vmatpush1.bf16.msra.mxu0 0
      %1445 = vmatprep.subr.bf16.mxu0 0
      %1446 = vmatpush1.bf16.msra.mxu0 0
      %1447 = vmatprep.mubr.bf16.mxu0 0
      %1448 = vmatmul.mubr.bf16.gmra.mrb[0].mxu0 %v1407
      %v1449 = vpop.f32.mrb[0].mxu0
      %v1450 = vadd.f32 0.0, %v1449
      %v1451 = vpop.f32.mrb[0].mxu0
      %v1452 = vadd.f32 0.0, %v1451
      %v1453 = vpop.f32.mrb[0].mxu0
      %v1454 = vpop.f32.mrb[0].mxu0
      %1455 = vdwg.mxu0
      %v1456 = vadd.f32 %v1392, %v1450
      %v1457 = vadd.f32 %v1393, %v1452
      %s1458 = scalar_lea.vmem %s4, 52
      %v1459 = vld [vmem:[%s1458] sm:$0xf]
      %v1460 = vpack.c.bf16 %v518, %v518
      %v1461 = vpack.c.bf16 %v519, %v519
      %v1463 = vsel %vm592, %v1459, 0
      %v1466 = vsel %vm596, %v1460, 0
      %v1469 = vsel %vm596, %v1461, 0
      %1471 = vmatprep.subr.bf16.mxu0 %v1469
      %1472 = vmatpush1.bf16.msra.mxu0 %v1466
      %1473 = vmatprep.subr.bf16.mxu0 0
      %1474 = vmatpush1.bf16.msra.mxu0 0
      %1475 = vmatprep.subr.bf16.mxu0 0
      %1476 = vmatpush1.bf16.msra.mxu0 0
      %1477 = vmatprep.subr.bf16.mxu0 0
      %1478 = vmatpush1.bf16.msra.mxu0 0
      %1479 = vmatprep.subr.bf16.mxu0 0
      %1480 = vmatpush1.bf16.msra.mxu0 0
      %1481 = vmatprep.subr.bf16.mxu0 0
      %1482 = vmatpush1.bf16.msra.mxu0 0
      %1483 = vmatprep.subr.bf16.mxu0 0
      %1484 = vmatpush1.bf16.msra.mxu0 0
      %1485 = vmatprep.subr.bf16.mxu0 0
      %1486 = vmatpush1.bf16.msra.mxu0 0
      %1487 = vmatprep.subr.bf16.mxu0 0
      %1488 = vmatpush1.bf16.msra.mxu0 0
      %1489 = vmatprep.subr.bf16.mxu0 0
      %1490 = vmatpush1.bf16.msra.mxu0 0
      %1491 = vmatprep.subr.bf16.mxu0 0
      %1492 = vmatpush1.bf16.msra.mxu0 0
      %1493 = vmatprep.subr.bf16.mxu0 0
      %1494 = vmatpush1.bf16.msra.mxu0 0
      %1495 = vmatprep.subr.bf16.mxu0 0
      %1496 = vmatpush1.bf16.msra.mxu0 0
      %1497 = vmatprep.subr.bf16.mxu0 0
      %1498 = vmatpush1.bf16.msra.mxu0 0
      %1499 = vmatprep.subr.bf16.mxu0 0
      %1500 = vmatpush1.bf16.msra.mxu0 0
      %1501 = vmatprep.subr.bf16.mxu0 0
      %1502 = vmatpush1.bf16.msra.mxu0 0
      %1503 = vmatprep.mubr.bf16.mxu0 0
      %1504 = vmatmul.mubr.bf16.gmra.mrb[0].mxu0 %v1463
      %v1505 = vpop.f32.mrb[0].mxu0
      %v1506 = vadd.f32 0.0, %v1505
      %v1507 = vpop.f32.mrb[0].mxu0
      %v1508 = vadd.f32 0.0, %v1507
      %v1509 = vpop.f32.mrb[0].mxu0
      %v1510 = vpop.f32.mrb[0].mxu0
      %1511 = vdwg.mxu0
      %v1512 = vadd.f32 %v1456, %v1506
      %v1513 = vadd.f32 %v1457, %v1508
      %1514 = vrot.lane.b32.xlu0 %v518, 127
      %v1515 = vpop.permute.xlu0 %1514
      %1516 = vrot.lane.b32.xlu0 %v519, 127
      %v1517 = vpop.permute.xlu0 %1516
      %v1518 = vsel %vm906, %v1515, %v1517
      %v1519 = vsel %vm906, %v1517, %v1515
      %v1520 = vmul.f32 %v1518, %v913
      %v1521 = vmul.f32 %v1519, %v917
      %s1522 = scalar_lea.vmem %s4, 56
      %v1523 = vld [vmem:[%s1522] sm:$0xf]
      %v1524 = vpack.c.bf16 %v1520, %v1520
      %v1525 = vpack.c.bf16 %v1521, %v1521
      %v1527 = vsel %vm592, %v1523, 0
      %v1530 = vsel %vm596, %v1524, 0
      %v1533 = vsel %vm596, %v1525, 0
      %1535 = vmatprep.subr.bf16.mxu0 %v1533
      %1536 = vmatpush1.bf16.msra.mxu0 %v1530
      %1537 = vmatprep.subr.bf16.mxu0 0
      %1538 = vmatpush1.bf16.msra.mxu0 0
      %1539 = vmatprep.subr.bf16.mxu0 0
      %1540 = vmatpush1.bf16.msra.mxu0 0
      %1541 = vmatprep.subr.bf16.mxu0 0
      %1542 = vmatpush1.bf16.msra.mxu0 0
      %1543 = vmatprep.subr.bf16.mxu0 0
      %1544 = vmatpush1.bf16.msra.mxu0 0
      %1545 = vmatprep.subr.bf16.mxu0 0
      %1546 = vmatpush1.bf16.msra.mxu0 0
      %1547 = vmatprep.subr.bf16.mxu0 0
      %1548 = vmatpush1.bf16.msra.mxu0 0
      %1549 = vmatprep.subr.bf16.mxu0 0
      %1550 = vmatpush1.bf16.msra.mxu0 0
      %1551 = vmatprep.subr.bf16.mxu0 0
      %1552 = vmatpush1.bf16.msra.mxu0 0
      %1553 = vmatprep.subr.bf16.mxu0 0
      %1554 = vmatpush1.bf16.msra.mxu0 0
      %1555 = vmatprep.subr.bf16.mxu0 0
      %1556 = vmatpush1.bf16.msra.mxu0 0
      %1557 = vmatprep.subr.bf16.mxu0 0
      %1558 = vmatpush1.bf16.msra.mxu0 0
      %1559 = vmatprep.subr.bf16.mxu0 0
      %1560 = vmatpush1.bf16.msra.mxu0 0
      %1561 = vmatprep.subr.bf16.mxu0 0
      %1562 = vmatpush1.bf16.msra.mxu0 0
      %1563 = vmatprep.subr.bf16.mxu0 0
      %1564 = vmatpush1.bf16.msra.mxu0 0
      %1565 = vmatprep.subr.bf16.mxu0 0
      %1566 = vmatpush1.bf16.msra.mxu0 0
      %1567 = vmatprep.mubr.bf16.mxu0 0
      %1568 = vmatmul.mubr.bf16.gmra.mrb[0].mxu0 %v1527
      %v1569 = vpop.f32.mrb[0].mxu0
      %v1570 = vadd.f32 0.0, %v1569
      %v1571 = vpop.f32.mrb[0].mxu0
      %v1572 = vadd.f32 0.0, %v1571
      %v1573 = vpop.f32.mrb[0].mxu0
      %v1574 = vpop.f32.mrb[0].mxu0
      %1575 = vdwg.mxu0
      %v1576 = vadd.f32 %v1512, %v1570
      %v1577 = vadd.f32 %v1513, %v1572
      %1578 = vrot.lane.b32.xlu0 %v518, 113
      %v1579 = vpop.permute.xlu0 %1578
      %1580 = vrot.lane.b32.xlu0 %v519, 113
      %v1581 = vpop.permute.xlu0 %1580
      %v1582 = vsel %vm982, %v1579, %v1581
      %v1583 = vsel %vm982, %v1581, %v1579
      %v1584 = vmul.f32 %v1582, %v989
      %v1585 = vmul.f32 %v1583, %v993
      %s1586 = scalar_lea.vmem %s4, 60
      %v1587 = vld [vmem:[%s1586] sm:$0xf]
      %v1588 = vpack.c.bf16 %v1584, %v1584
      %v1589 = vpack.c.bf16 %v1585, %v1585
      %v1591 = vsel %vm592, %v1587, 0
      %v1594 = vsel %vm596, %v1588, 0
      %v1597 = vsel %vm596, %v1589, 0
      %1599 = vmatprep.subr.bf16.mxu0 %v1597
      %1600 = vmatpush1.bf16.msra.mxu0 %v1594
      %1601 = vmatprep.subr.bf16.mxu0 0
      %1602 = vmatpush1.bf16.msra.mxu0 0
      %1603 = vmatprep.subr.bf16.mxu0 0
      %1604 = vmatpush1.bf16.msra.mxu0 0
      %1605 = vmatprep.subr.bf16.mxu0 0
      %1606 = vmatpush1.bf16.msra.mxu0 0
      %1607 = vmatprep.subr.bf16.mxu0 0
      %1608 = vmatpush1.bf16.msra.mxu0 0
      %1609 = vmatprep.subr.bf16.mxu0 0
      %1610 = vmatpush1.bf16.msra.mxu0 0
      %1611 = vmatprep.subr.bf16.mxu0 0
      %1612 = vmatpush1.bf16.msra.mxu0 0
      %1613 = vmatprep.subr.bf16.mxu0 0
      %1614 = vmatpush1.bf16.msra.mxu0 0
      %1615 = vmatprep.subr.bf16.mxu0 0
      %1616 = vmatpush1.bf16.msra.mxu0 0
      %1617 = vmatprep.subr.bf16.mxu0 0
      %1618 = vmatpush1.bf16.msra.mxu0 0
      %1619 = vmatprep.subr.bf16.mxu0 0
      %1620 = vmatpush1.bf16.msra.mxu0 0
      %1621 = vmatprep.subr.bf16.mxu0 0
      %1622 = vmatpush1.bf16.msra.mxu0 0
      %1623 = vmatprep.subr.bf16.mxu0 0
      %1624 = vmatpush1.bf16.msra.mxu0 0
      %1625 = vmatprep.subr.bf16.mxu0 0
      %1626 = vmatpush1.bf16.msra.mxu0 0
      %1627 = vmatprep.subr.bf16.mxu0 0
      %1628 = vmatpush1.bf16.msra.mxu0 0
      %1629 = vmatprep.subr.bf16.mxu0 0
      %1630 = vmatpush1.bf16.msra.mxu0 0
      %1631 = vmatprep.mubr.bf16.mxu0 0
      %1632 = vmatmul.mubr.bf16.gmra.mrb[0].mxu0 %v1591
      %v1633 = vpop.f32.mrb[0].mxu0
      %v1634 = vadd.f32 0.0, %v1633
      %v1635 = vpop.f32.mrb[0].mxu0
      %v1636 = vadd.f32 0.0, %v1635
      %v1637 = vpop.f32.mrb[0].mxu0
      %v1638 = vpop.f32.mrb[0].mxu0
      %1639 = vdwg.mxu0
      %v1640 = vadd.f32 %v1576, %v1634
      %v1641 = vadd.f32 %v1577, %v1636
      %1642 = vrot.lane.b32.xlu0 %v518, 112
      %v1643 = vpop.permute.xlu0 %1642
      %1644 = vrot.lane.b32.xlu0 %v519, 112
      %v1645 = vpop.permute.xlu0 %1644
      %v1646 = vsel %vm1058, %v1643, %v1645
      %v1647 = vsel %vm1058, %v1645, %v1643
      %v1648 = vmul.f32 %v1646, %v1065
      %v1649 = vmul.f32 %v1647, %v1069
      %s1650 = scalar_lea.vmem %s4, 64
      %v1651 = vld [vmem:[%s1650] sm:$0xf]
      %v1652 = vpack.c.bf16 %v1648, %v1648
      %v1653 = vpack.c.bf16 %v1649, %v1649
      %v1655 = vsel %vm592, %v1651, 0
      %v1658 = vsel %vm596, %v1652, 0
      %v1661 = vsel %vm596, %v1653, 0
      %1663 = vmatprep.subr.bf16.mxu0 %v1661
      %1664 = vmatpush1.bf16.msra.mxu0 %v1658
      %1665 = vmatprep.subr.bf16.mxu0 0
      %1666 = vmatpush1.bf16.msra.mxu0 0
      %1667 = vmatprep.subr.bf16.mxu0 0
      %1668 = vmatpush1.bf16.msra.mxu0 0
      %1669 = vmatprep.subr.bf16.mxu0 0
      %1670 = vmatpush1.bf16.msra.mxu0 0
      %1671 = vmatprep.subr.bf16.mxu0 0
      %1672 = vmatpush1.bf16.msra.mxu0 0
      %1673 = vmatprep.subr.bf16.mxu0 0
      %1674 = vmatpush1.bf16.msra.mxu0 0
      %1675 = vmatprep.subr.bf16.mxu0 0
      %1676 = vmatpush1.bf16.msra.mxu0 0
      %1677 = vmatprep.subr.bf16.mxu0 0
      %1678 = vmatpush1.bf16.msra.mxu0 0
      %1679 = vmatprep.subr.bf16.mxu0 0
      %1680 = vmatpush1.bf16.msra.mxu0 0
      %1681 = vmatprep.subr.bf16.mxu0 0
      %1682 = vmatpush1.bf16.msra.mxu0 0
      %1683 = vmatprep.subr.bf16.mxu0 0
      %1684 = vmatpush1.bf16.msra.mxu0 0
      %1685 = vmatprep.subr.bf16.mxu0 0
      %1686 = vmatpush1.bf16.msra.mxu0 0
      %1687 = vmatprep.subr.bf16.mxu0 0
      %1688 = vmatpush1.bf16.msra.mxu0 0
      %1689 = vmatprep.subr.bf16.mxu0 0
      %1690 = vmatpush1.bf16.msra.mxu0 0
      %1691 = vmatprep.subr.bf16.mxu0 0
      %1692 = vmatpush1.bf16.msra.mxu0 0
      %1693 = vmatprep.subr.bf16.mxu0 0
      %1694 = vmatpush1.bf16.msra.mxu0 0
      %1695 = vmatprep.mubr.bf16.mxu0 0
      %1696 = vmatmul.mubr.bf16.gmra.mrb[0].mxu0 %v1655
      %v1697 = vpop.f32.mrb[0].mxu0
      %v1698 = vadd.f32 0.0, %v1697
      %v1699 = vpop.f32.mrb[0].mxu0
      %v1700 = vadd.f32 0.0, %v1699
      %v1701 = vpop.f32.mrb[0].mxu0
      %v1702 = vpop.f32.mrb[0].mxu0
      %1703 = vdwg.mxu0
      %v1704 = vadd.f32 %v1640, %v1698
      %v1705 = vadd.f32 %v1641, %v1700
      %1706 = vrot.lane.b32.xlu0 %v518, 111
      %v1707 = vpop.permute.xlu0 %1706
      %1708 = vrot.lane.b32.xlu0 %v519, 111
      %v1709 = vpop.permute.xlu0 %1708
      %v1710 = vsel %vm1134, %v1707, %v1709
      %v1711 = vsel %vm1134, %v1709, %v1707
      %v1712 = vmul.f32 %v1710, %v1141
      %v1713 = vmul.f32 %v1711, %v1145
      %s1714 = scalar_lea.vmem %s4, 68
      %v1715 = vld [vmem:[%s1714] sm:$0xf]
      %v1716 = vpack.c.bf16 %v1712, %v1712
      %v1717 = vpack.c.bf16 %v1713, %v1713
      %v1719 = vsel %vm592, %v1715, 0
      %v1722 = vsel %vm596, %v1716, 0
      %v1725 = vsel %vm596, %v1717, 0
      %1727 = vmatprep.subr.bf16.mxu0 %v1725
      %1728 = vmatpush1.bf16.msra.mxu0 %v1722
      %1729 = vmatprep.subr.bf16.mxu0 0
      %1730 = vmatpush1.bf16.msra.mxu0 0
      %1731 = vmatprep.subr.bf16.mxu0 0
      %1732 = vmatpush1.bf16.msra.mxu0 0
      %1733 = vmatprep.subr.bf16.mxu0 0
      %1734 = vmatpush1.bf16.msra.mxu0 0
      %1735 = vmatprep.subr.bf16.mxu0 0
      %1736 = vmatpush1.bf16.msra.mxu0 0
      %1737 = vmatprep.subr.bf16.mxu0 0
      %1738 = vmatpush1.bf16.msra.mxu0 0
      %1739 = vmatprep.subr.bf16.mxu0 0
      %1740 = vmatpush1.bf16.msra.mxu0 0
      %1741 = vmatprep.subr.bf16.mxu0 0
      %1742 = vmatpush1.bf16.msra.mxu0 0
      %1743 = vmatprep.subr.bf16.mxu0 0
      %1744 = vmatpush1.bf16.msra.mxu0 0
      %1745 = vmatprep.subr.bf16.mxu0 0
      %1746 = vmatpush1.bf16.msra.mxu0 0
      %1747 = vmatprep.subr.bf16.mxu0 0
      %1748 = vmatpush1.bf16.msra.mxu0 0
      %1749 = vmatprep.subr.bf16.mxu0 0
      %1750 = vmatpush1.bf16.msra.mxu0 0
      %1751 = vmatprep.subr.bf16.mxu0 0
      %1752 = vmatpush1.bf16.msra.mxu0 0
      %1753 = vmatprep.subr.bf16.mxu0 0
      %1754 = vmatpush1.bf16.msra.mxu0 0
      %1755 = vmatprep.subr.bf16.mxu0 0
      %1756 = vmatpush1.bf16.msra.mxu0 0
      %1757 = vmatprep.subr.bf16.mxu0 0
      %1758 = vmatpush1.bf16.msra.mxu0 0
      %1759 = vmatprep.mubr.bf16.mxu0 0
      %1760 = vmatmul.mubr.bf16.gmra.mrb[0].mxu0 %v1719
      %v1761 = vpop.f32.mrb[0].mxu0
      %v1762 = vadd.f32 0.0, %v1761
      %v1763 = vpop.f32.mrb[0].mxu0
      %v1764 = vadd.f32 0.0, %v1763
      %v1765 = vpop.f32.mrb[0].mxu0
      %v1766 = vpop.f32.mrb[0].mxu0
      %1767 = vdwg.mxu0
      %v1768 = vadd.f32 %v1704, %v1762
      %v1769 = vadd.f32 %v1705, %v1764
      %1770 = vrot.lane.b32.xlu0 %v526, 17
      %v1771 = vpop.permute.xlu0 %1770
      %1772 = vrot.lane.b32.xlu0 %v527, 17
      %v1773 = vpop.permute.xlu0 %1772
      %v1774 = vsel %vm549, %v1771, %v1773
      %v1775 = vsel %vm549, %v1773, %v1771
      %v1776 = vmul.f32 %v1775, %v556
      %v1777 = vmul.f32 %v1774, %v560
      %s1778 = scalar_lea.vmem %s4, 72
      %v1779 = vld [vmem:[%s1778] sm:$0xf]
      %v1780 = vpack.c.bf16 %v1776, %v1776
      %v1781 = vpack.c.bf16 %v1777, %v1777
      %1782 = vrot.lane.b32.xlu0 %v526, 16
      %v1783 = vpop.permute.xlu0 %1782
      %1784 = vrot.lane.b32.xlu0 %v527, 16
      %v1785 = vpop.permute.xlu0 %1784
      %v1786 = vsel %vm572, %v1783, %v1785
      %v1787 = vsel %vm572, %v1785, %v1783
      %v1788 = vmul.f32 %v1787, %v579
      %v1789 = vmul.f32 %v1786, %v583
      %s1790 = scalar_lea.vmem %s4, 76
      %v1791 = vld [vmem:[%s1790] sm:$0xf]
      %v1792 = vpack.c.bf16 %v1788, %v1788
      %v1793 = vpack.c.bf16 %v1789, %v1789
      %v1795 = vsel %vm592, %v1791, 0
      %v1798 = vsel %vm596, %v1792, 0
      %v1801 = vsel %vm596, %v1793, 0
      %1803 = vmatprep.subr.bf16.mxu0 %v1801
      %1804 = vmatpush1.bf16.msra.mxu0 %v1798
      %1805 = vmatprep.subr.bf16.mxu0 0
      %1806 = vmatpush1.bf16.msra.mxu0 0
      %1807 = vmatprep.subr.bf16.mxu0 0
      %1808 = vmatpush1.bf16.msra.mxu0 0
      %1809 = vmatprep.subr.bf16.mxu0 0
      %1810 = vmatpush1.bf16.msra.mxu0 0
      %1811 = vmatprep.subr.bf16.mxu0 0
      %1812 = vmatpush1.bf16.msra.mxu0 0
      %1813 = vmatprep.subr.bf16.mxu0 0
      %1814 = vmatpush1.bf16.msra.mxu0 0
      %1815 = vmatprep.subr.bf16.mxu0 0
      %1816 = vmatpush1.bf16.msra.mxu0 0
      %1817 = vmatprep.subr.bf16.mxu0 0
      %1818 = vmatpush1.bf16.msra.mxu0 0
      %1819 = vmatprep.subr.bf16.mxu0 0
      %1820 = vmatpush1.bf16.msra.mxu0 0
      %1821 = vmatprep.subr.bf16.mxu0 0
      %1822 = vmatpush1.bf16.msra.mxu0 0
      %1823 = vmatprep.subr.bf16.mxu0 0
      %1824 = vmatpush1.bf16.msra.mxu0 0
      %1825 = vmatprep.subr.bf16.mxu0 0
      %1826 = vmatpush1.bf16.msra.mxu0 0
      %1827 = vmatprep.subr.bf16.mxu0 0
      %1828 = vmatpush1.bf16.msra.mxu0 0
      %1829 = vmatprep.subr.bf16.mxu0 0
      %1830 = vmatpush1.bf16.msra.mxu0 0
      %1831 = vmatprep.subr.bf16.mxu0 0
      %1832 = vmatpush1.bf16.msra.mxu0 0
      %1833 = vmatprep.subr.bf16.mxu0 0
      %1834 = vmatpush1.bf16.msra.mxu0 0
      %1835 = vmatprep.mubr.bf16.mxu0 0
      %1836 = vmatmul.mubr.bf16.gmra.mrb[0].mxu0 %v1795
      %v1837 = vpop.f32.mrb[0].mxu0
      %v1838 = vadd.f32 0.0, %v1837
      %v1839 = vpop.f32.mrb[0].mxu0
      %v1840 = vadd.f32 0.0, %v1839
      %v1841 = vpop.f32.mrb[0].mxu0
      %v1842 = vpop.f32.mrb[0].mxu0
      %1843 = vdwg.mxu0
      %v1845 = vsel %vm592, %v1779, 0
      %v1848 = vsel %vm596, %v1780, 0
      %v1851 = vsel %vm596, %v1781, 0
      %1853 = vmatprep.subr.bf16.mxu0 %v1851
      %1854 = vmatpush1.bf16.msra.mxu0 %v1848
      %1855 = vmatprep.subr.bf16.mxu0 0
      %1856 = vmatpush1.bf16.msra.mxu0 0
      %1857 = vmatprep.subr.bf16.mxu0 0
      %1858 = vmatpush1.bf16.msra.mxu0 0
      %1859 = vmatprep.subr.bf16.mxu0 0
      %1860 = vmatpush1.bf16.msra.mxu0 0
      %1861 = vmatprep.subr.bf16.mxu0 0
      %1862 = vmatpush1.bf16.msra.mxu0 0
      %1863 = vmatprep.subr.bf16.mxu0 0
      %1864 = vmatpush1.bf16.msra.mxu0 0
      %1865 = vmatprep.subr.bf16.mxu0 0
      %1866 = vmatpush1.bf16.msra.mxu0 0
      %1867 = vmatprep.subr.bf16.mxu0 0
      %1868 = vmatpush1.bf16.msra.mxu0 0
      %1869 = vmatprep.subr.bf16.mxu0 0
      %1870 = vmatpush1.bf16.msra.mxu0 0
      %1871 = vmatprep.subr.bf16.mxu0 0
      %1872 = vmatpush1.bf16.msra.mxu0 0
      %1873 = vmatprep.subr.bf16.mxu0 0
      %1874 = vmatpush1.bf16.msra.mxu0 0
      %1875 = vmatprep.subr.bf16.mxu0 0
      %1876 = vmatpush1.bf16.msra.mxu0 0
      %1877 = vmatprep.subr.bf16.mxu0 0
      %1878 = vmatpush1.bf16.msra.mxu0 0
      %1879 = vmatprep.subr.bf16.mxu0 0
      %1880 = vmatpush1.bf16.msra.mxu0 0
      %1881 = vmatprep.subr.bf16.mxu0 0
      %1882 = vmatpush1.bf16.msra.mxu0 0
      %1883 = vmatprep.subr.bf16.mxu0 0
      %1884 = vmatpush1.bf16.msra.mxu0 0
      %1885 = vmatprep.mubr.bf16.mxu0 0
      %1886 = vmatmul.mubr.bf16.gmra.mrb[0].mxu0 %v1845
      %v1887 = vpop.f32.mrb[0].mxu0
      %v1888 = vadd.f32 %v1838, %v1887
      %v1889 = vpop.f32.mrb[0].mxu0
      %v1890 = vadd.f32 %v1840, %v1889
      %v1891 = vpop.f32.mrb[0].mxu0
      %v1892 = vpop.f32.mrb[0].mxu0
      %1893 = vdwg.mxu0
      %1894 = vrot.lane.b32.xlu0 %v526, 15
      %v1895 = vpop.permute.xlu0 %1894
      %1896 = vrot.lane.b32.xlu0 %v527, 15
      %v1897 = vpop.permute.xlu0 %1896
      %v1898 = vsel %vm698, %v1895, %v1897
      %v1899 = vsel %vm698, %v1897, %v1895
      %v1900 = vmul.f32 %v1899, %v705
      %v1901 = vmul.f32 %v1898, %v709
      %s1902 = scalar_lea.vmem %s4, 80
      %v1903 = vld [vmem:[%s1902] sm:$0xf]
      %v1904 = vpack.c.bf16 %v1900, %v1900
      %v1905 = vpack.c.bf16 %v1901, %v1901
      %v1907 = vsel %vm592, %v1903, 0
      %v1910 = vsel %vm596, %v1904, 0
      %v1913 = vsel %vm596, %v1905, 0
      %1915 = vmatprep.subr.bf16.mxu0 %v1913
      %1916 = vmatpush1.bf16.msra.mxu0 %v1910
      %1917 = vmatprep.subr.bf16.mxu0 0
      %1918 = vmatpush1.bf16.msra.mxu0 0
      %1919 = vmatprep.subr.bf16.mxu0 0
      %1920 = vmatpush1.bf16.msra.mxu0 0
      %1921 = vmatprep.subr.bf16.mxu0 0
      %1922 = vmatpush1.bf16.msra.mxu0 0
      %1923 = vmatprep.subr.bf16.mxu0 0
      %1924 = vmatpush1.bf16.msra.mxu0 0
      %1925 = vmatprep.subr.bf16.mxu0 0
      %1926 = vmatpush1.bf16.msra.mxu0 0
      %1927 = vmatprep.subr.bf16.mxu0 0
      %1928 = vmatpush1.bf16.msra.mxu0 0
      %1929 = vmatprep.subr.bf16.mxu0 0
      %1930 = vmatpush1.bf16.msra.mxu0 0
      %1931 = vmatprep.subr.bf16.mxu0 0
      %1932 = vmatpush1.bf16.msra.mxu0 0
      %1933 = vmatprep.subr.bf16.mxu0 0
      %1934 = vmatpush1.bf16.msra.mxu0 0
      %1935 = vmatprep.subr.bf16.mxu0 0
      %1936 = vmatpush1.bf16.msra.mxu0 0
      %1937 = vmatprep.subr.bf16.mxu0 0
      %1938 = vmatpush1.bf16.msra.mxu0 0
      %1939 = vmatprep.subr.bf16.mxu0 0
      %1940 = vmatpush1.bf16.msra.mxu0 0
      %1941 = vmatprep.subr.bf16.mxu0 0
      %1942 = vmatpush1.bf16.msra.mxu0 0
      %1943 = vmatprep.subr.bf16.mxu0 0
      %1944 = vmatpush1.bf16.msra.mxu0 0
      %1945 = vmatprep.subr.bf16.mxu0 0
      %1946 = vmatpush1.bf16.msra.mxu0 0
      %1947 = vmatprep.mubr.bf16.mxu0 0
      %1948 = vmatmul.mubr.bf16.gmra.mrb[0].mxu0 %v1907
      %v1949 = vpop.f32.mrb[0].mxu0
      %v1950 = vadd.f32 0.0, %v1949
      %v1951 = vpop.f32.mrb[0].mxu0
      %v1952 = vadd.f32 0.0, %v1951
      %v1953 = vpop.f32.mrb[0].mxu0
      %v1954 = vpop.f32.mrb[0].mxu0
      %1955 = vdwg.mxu0
      %v1956 = vadd.f32 %v1888, %v1950
      %v1957 = vadd.f32 %v1890, %v1952
      %1958 = vrot.lane.b32.xlu0 %v526, 1
      %v1959 = vpop.permute.xlu0 %1958
      %1960 = vrot.lane.b32.xlu0 %v527, 1
      %v1961 = vpop.permute.xlu0 %1960
      %v1962 = vsel %vm774, %v1959, %v1961
      %v1963 = vsel %vm774, %v1961, %v1959
      %v1964 = vmul.f32 %v1963, %v781
      %v1965 = vmul.f32 %v1962, %v785
      %s1966 = scalar_lea.vmem %s4, 84
      %v1967 = vld [vmem:[%s1966] sm:$0xf]
      %v1968 = vpack.c.bf16 %v1964, %v1964
      %v1969 = vpack.c.bf16 %v1965, %v1965
      %v1971 = vsel %vm592, %v1967, 0
      %v1974 = vsel %vm596, %v1968, 0
      %v1977 = vsel %vm596, %v1969, 0
      %1979 = vmatprep.subr.bf16.mxu0 %v1977
      %1980 = vmatpush1.bf16.msra.mxu0 %v1974
      %1981 = vmatprep.subr.bf16.mxu0 0
      %1982 = vmatpush1.bf16.msra.mxu0 0
      %1983 = vmatprep.subr.bf16.mxu0 0
      %1984 = vmatpush1.bf16.msra.mxu0 0
      %1985 = vmatprep.subr.bf16.mxu0 0
      %1986 = vmatpush1.bf16.msra.mxu0 0
      %1987 = vmatprep.subr.bf16.mxu0 0
      %1988 = vmatpush1.bf16.msra.mxu0 0
      %1989 = vmatprep.subr.bf16.mxu0 0
      %1990 = vmatpush1.bf16.msra.mxu0 0
      %1991 = vmatprep.subr.bf16.mxu0 0
      %1992 = vmatpush1.bf16.msra.mxu0 0
      %1993 = vmatprep.subr.bf16.mxu0 0
      %1994 = vmatpush1.bf16.msra.mxu0 0
      %1995 = vmatprep.subr.bf16.mxu0 0
      %1996 = vmatpush1.bf16.msra.mxu0 0
      %1997 = vmatprep.subr.bf16.mxu0 0
      %1998 = vmatpush1.bf16.msra.mxu0 0
      %1999 = vmatprep.subr.bf16.mxu0 0
      %2000 = vmatpush1.bf16.msra.mxu0 0
      %2001 = vmatprep.subr.bf16.mxu0 0
      %2002 = vmatpush1.bf16.msra.mxu0 0
      %2003 = vmatprep.subr.bf16.mxu0 0
      %2004 = vmatpush1.bf16.msra.mxu0 0
      %2005 = vmatprep.subr.bf16.mxu0 0
      %2006 = vmatpush1.bf16.msra.mxu0 0
      %2007 = vmatprep.subr.bf16.mxu0 0
      %2008 = vmatpush1.bf16.msra.mxu0 0
      %2009 = vmatprep.subr.bf16.mxu0 0
      %2010 = vmatpush1.bf16.msra.mxu0 0
      %2011 = vmatprep.mubr.bf16.mxu0 0
      %2012 = vmatmul.mubr.bf16.gmra.mrb[0].mxu0 %v1971
      %v2013 = vpop.f32.mrb[0].mxu0
      %v2014 = vadd.f32 0.0, %v2013
      %v2015 = vpop.f32.mrb[0].mxu0
      %v2016 = vadd.f32 0.0, %v2015
      %v2017 = vpop.f32.mrb[0].mxu0
      %v2018 = vpop.f32.mrb[0].mxu0
      %2019 = vdwg.mxu0
      %v2020 = vadd.f32 %v1956, %v2014
      %v2021 = vadd.f32 %v1957, %v2016
      %s2022 = scalar_lea.vmem %s4, 88
      %v2023 = vld [vmem:[%s2022] sm:$0xf]
      %v2024 = vpack.c.bf16 %v526, %v526
      %v2025 = vpack.c.bf16 %v527, %v527
      %v2027 = vsel %vm592, %v2023, 0
      %v2030 = vsel %vm596, %v2024, 0
      %v2033 = vsel %vm596, %v2025, 0
      %2035 = vmatprep.subr.bf16.mxu0 %v2033
      %2036 = vmatpush1.bf16.msra.mxu0 %v2030
      %2037 = vmatprep.subr.bf16.mxu0 0
      %2038 = vmatpush1.bf16.msra.mxu0 0
      %2039 = vmatprep.subr.bf16.mxu0 0
      %2040 = vmatpush1.bf16.msra.mxu0 0
      %2041 = vmatprep.subr.bf16.mxu0 0
      %2042 = vmatpush1.bf16.msra.mxu0 0
      %2043 = vmatprep.subr.bf16.mxu0 0
      %2044 = vmatpush1.bf16.msra.mxu0 0
      %2045 = vmatprep.subr.bf16.mxu0 0
      %2046 = vmatpush1.bf16.msra.mxu0 0
      %2047 = vmatprep.subr.bf16.mxu0 0
      %2048 = vmatpush1.bf16.msra.mxu0 0
      %2049 = vmatprep.subr.bf16.mxu0 0
      %2050 = vmatpush1.bf16.msra.mxu0 0
      %2051 = vmatprep.subr.bf16.mxu0 0
      %2052 = vmatpush1.bf16.msra.mxu0 0
      %2053 = vmatprep.subr.bf16.mxu0 0
      %2054 = vmatpush1.bf16.msra.mxu0 0
      %2055 = vmatprep.subr.bf16.mxu0 0
      %2056 = vmatpush1.bf16.msra.mxu0 0
      %2057 = vmatprep.subr.bf16.mxu0 0
      %2058 = vmatpush1.bf16.msra.mxu0 0
      %2059 = vmatprep.subr.bf16.mxu0 0
      %2060 = vmatpush1.bf16.msra.mxu0 0
      %2061 = vmatprep.subr.bf16.mxu0 0
      %2062 = vmatpush1.bf16.msra.mxu0 0
      %2063 = vmatprep.subr.bf16.mxu0 0
      %2064 = vmatpush1.bf16.msra.mxu0 0
      %2065 = vmatprep.subr.bf16.mxu0 0
      %2066 = vmatpush1.bf16.msra.mxu0 0
      %2067 = vmatprep.mubr.bf16.mxu0 0
      %2068 = vmatmul.mubr.bf16.gmra.mrb[0].mxu0 %v2027
      %v2069 = vpop.f32.mrb[0].mxu0
      %v2070 = vadd.f32 0.0, %v2069
      %v2071 = vpop.f32.mrb[0].mxu0
      %v2072 = vadd.f32 0.0, %v2071
      %v2073 = vpop.f32.mrb[0].mxu0
      %v2074 = vpop.f32.mrb[0].mxu0
      %2075 = vdwg.mxu0
      %v2076 = vadd.f32 %v2020, %v2070
      %v2077 = vadd.f32 %v2021, %v2072
      %2078 = vrot.lane.b32.xlu0 %v526, 127
      %v2079 = vpop.permute.xlu0 %2078
      %2080 = vrot.lane.b32.xlu0 %v527, 127
      %v2081 = vpop.permute.xlu0 %2080
      %v2082 = vsel %vm906, %v2079, %v2081
      %v2083 = vsel %vm906, %v2081, %v2079
      %v2084 = vmul.f32 %v2082, %v913
      %v2085 = vmul.f32 %v2083, %v917
      %s2086 = scalar_lea.vmem %s4, 92
      %v2087 = vld [vmem:[%s2086] sm:$0xf]
      %v2088 = vpack.c.bf16 %v2084, %v2084
      %v2089 = vpack.c.bf16 %v2085, %v2085
      %v2091 = vsel %vm592, %v2087, 0
      %v2094 = vsel %vm596, %v2088, 0
      %v2097 = vsel %vm596, %v2089, 0
      %2099 = vmatprep.subr.bf16.mxu0 %v2097
      %2100 = vmatpush1.bf16.msra.mxu0 %v2094
      %2101 = vmatprep.subr.bf16.mxu0 0
      %2102 = vmatpush1.bf16.msra.mxu0 0
      %2103 = vmatprep.subr.bf16.mxu0 0
      %2104 = vmatpush1.bf16.msra.mxu0 0
      %2105 = vmatprep.subr.bf16.mxu0 0
      %2106 = vmatpush1.bf16.msra.mxu0 0
      %2107 = vmatprep.subr.bf16.mxu0 0
      %2108 = vmatpush1.bf16.msra.mxu0 0
      %2109 = vmatprep.subr.bf16.mxu0 0
      %2110 = vmatpush1.bf16.msra.mxu0 0
      %2111 = vmatprep.subr.bf16.mxu0 0
      %2112 = vmatpush1.bf16.msra.mxu0 0
      %2113 = vmatprep.subr.bf16.mxu0 0
      %2114 = vmatpush1.bf16.msra.mxu0 0
      %2115 = vmatprep.subr.bf16.mxu0 0
      %2116 = vmatpush1.bf16.msra.mxu0 0
      %2117 = vmatprep.subr.bf16.mxu0 0
      %2118 = vmatpush1.bf16.msra.mxu0 0
      %2119 = vmatprep.subr.bf16.mxu0 0
      %2120 = vmatpush1.bf16.msra.mxu0 0
      %2121 = vmatprep.subr.bf16.mxu0 0
      %2122 = vmatpush1.bf16.msra.mxu0 0
      %2123 = vmatprep.subr.bf16.mxu0 0
      %2124 = vmatpush1.bf16.msra.mxu0 0
      %2125 = vmatprep.subr.bf16.mxu0 0
      %2126 = vmatpush1.bf16.msra.mxu0 0
      %2127 = vmatprep.subr.bf16.mxu0 0
      %2128 = vmatpush1.bf16.msra.mxu0 0
      %2129 = vmatprep.subr.bf16.mxu0 0
      %2130 = vmatpush1.bf16.msra.mxu0 0
      %2131 = vmatprep.mubr.bf16.mxu0 0
      %2132 = vmatmul.mubr.bf16.gmra.mrb[0].mxu0 %v2091
      %v2133 = vpop.f32.mrb[0].mxu0
      %v2134 = vadd.f32 0.0, %v2133
      %v2135 = vpop.f32.mrb[0].mxu0
      %v2136 = vadd.f32 0.0, %v2135
      %v2137 = vpop.f32.mrb[0].mxu0
      %v2138 = vpop.f32.mrb[0].mxu0
      %2139 = vdwg.mxu0
      %v2140 = vadd.f32 %v2076, %v2134
      %v2141 = vadd.f32 %v2077, %v2136
      %2142 = vrot.lane.b32.xlu0 %v526, 113
      %v2143 = vpop.permute.xlu0 %2142
      %2144 = vrot.lane.b32.xlu0 %v527, 113
      %v2145 = vpop.permute.xlu0 %2144
      %v2146 = vsel %vm982, %v2143, %v2145
      %v2147 = vsel %vm982, %v2145, %v2143
      %v2148 = vmul.f32 %v2146, %v989
      %v2149 = vmul.f32 %v2147, %v993
      %s2150 = scalar_lea.vmem %s4, 96
      %v2151 = vld [vmem:[%s2150] sm:$0xf]
      %v2152 = vpack.c.bf16 %v2148, %v2148
      %v2153 = vpack.c.bf16 %v2149, %v2149
      %v2155 = vsel %vm592, %v2151, 0
      %v2158 = vsel %vm596, %v2152, 0
      %v2161 = vsel %vm596, %v2153, 0
      %2163 = vmatprep.subr.bf16.mxu0 %v2161
      %2164 = vmatpush1.bf16.msra.mxu0 %v2158
      %2165 = vmatprep.subr.bf16.mxu0 0
      %2166 = vmatpush1.bf16.msra.mxu0 0
      %2167 = vmatprep.subr.bf16.mxu0 0
      %2168 = vmatpush1.bf16.msra.mxu0 0
      %2169 = vmatprep.subr.bf16.mxu0 0
      %2170 = vmatpush1.bf16.msra.mxu0 0
      %2171 = vmatprep.subr.bf16.mxu0 0
      %2172 = vmatpush1.bf16.msra.mxu0 0
      %2173 = vmatprep.subr.bf16.mxu0 0
      %2174 = vmatpush1.bf16.msra.mxu0 0
      %2175 = vmatprep.subr.bf16.mxu0 0
      %2176 = vmatpush1.bf16.msra.mxu0 0
      %2177 = vmatprep.subr.bf16.mxu0 0
      %2178 = vmatpush1.bf16.msra.mxu0 0
      %2179 = vmatprep.subr.bf16.mxu0 0
      %2180 = vmatpush1.bf16.msra.mxu0 0
      %2181 = vmatprep.subr.bf16.mxu0 0
      %2182 = vmatpush1.bf16.msra.mxu0 0
      %2183 = vmatprep.subr.bf16.mxu0 0
      %2184 = vmatpush1.bf16.msra.mxu0 0
      %2185 = vmatprep.subr.bf16.mxu0 0
      %2186 = vmatpush1.bf16.msra.mxu0 0
      %2187 = vmatprep.subr.bf16.mxu0 0
      %2188 = vmatpush1.bf16.msra.mxu0 0
      %2189 = vmatprep.subr.bf16.mxu0 0
      %2190 = vmatpush1.bf16.msra.mxu0 0
      %2191 = vmatprep.subr.bf16.mxu0 0
      %2192 = vmatpush1.bf16.msra.mxu0 0
      %2193 = vmatprep.subr.bf16.mxu0 0
      %2194 = vmatpush1.bf16.msra.mxu0 0
      %2195 = vmatprep.mubr.bf16.mxu0 0
      %2196 = vmatmul.mubr.bf16.gmra.mrb[0].mxu0 %v2155
      %v2197 = vpop.f32.mrb[0].mxu0
      %v2198 = vadd.f32 0.0, %v2197
      %v2199 = vpop.f32.mrb[0].mxu0
      %v2200 = vadd.f32 0.0, %v2199
      %v2201 = vpop.f32.mrb[0].mxu0
      %v2202 = vpop.f32.mrb[0].mxu0
      %2203 = vdwg.mxu0
      %v2204 = vadd.f32 %v2140, %v2198
      %v2205 = vadd.f32 %v2141, %v2200
      %2206 = vrot.lane.b32.xlu0 %v526, 112
      %v2207 = vpop.permute.xlu0 %2206
      %2208 = vrot.lane.b32.xlu0 %v527, 112
      %v2209 = vpop.permute.xlu0 %2208
      %v2210 = vsel %vm1058, %v2207, %v2209
      %v2211 = vsel %vm1058, %v2209, %v2207
      %v2212 = vmul.f32 %v2210, %v1065
      %v2213 = vmul.f32 %v2211, %v1069
      %s2214 = scalar_lea.vmem %s4, 100
      %v2215 = vld [vmem:[%s2214] sm:$0xf]
      %v2216 = vpack.c.bf16 %v2212, %v2212
      %v2217 = vpack.c.bf16 %v2213, %v2213
      %v2219 = vsel %vm592, %v2215, 0
      %v2222 = vsel %vm596, %v2216, 0
      %v2225 = vsel %vm596, %v2217, 0
      %2227 = vmatprep.subr.bf16.mxu0 %v2225
      %2228 = vmatpush1.bf16.msra.mxu0 %v2222
      %2229 = vmatprep.subr.bf16.mxu0 0
      %2230 = vmatpush1.bf16.msra.mxu0 0
      %2231 = vmatprep.subr.bf16.mxu0 0
      %2232 = vmatpush1.bf16.msra.mxu0 0
      %2233 = vmatprep.subr.bf16.mxu0 0
      %2234 = vmatpush1.bf16.msra.mxu0 0
      %2235 = vmatprep.subr.bf16.mxu0 0
      %2236 = vmatpush1.bf16.msra.mxu0 0
      %2237 = vmatprep.subr.bf16.mxu0 0
      %2238 = vmatpush1.bf16.msra.mxu0 0
      %2239 = vmatprep.subr.bf16.mxu0 0
      %2240 = vmatpush1.bf16.msra.mxu0 0
      %2241 = vmatprep.subr.bf16.mxu0 0
      %2242 = vmatpush1.bf16.msra.mxu0 0
      %2243 = vmatprep.subr.bf16.mxu0 0
      %2244 = vmatpush1.bf16.msra.mxu0 0
      %2245 = vmatprep.subr.bf16.mxu0 0
      %2246 = vmatpush1.bf16.msra.mxu0 0
      %2247 = vmatprep.subr.bf16.mxu0 0
      %2248 = vmatpush1.bf16.msra.mxu0 0
      %2249 = vmatprep.subr.bf16.mxu0 0
      %2250 = vmatpush1.bf16.msra.mxu0 0
      %2251 = vmatprep.subr.bf16.mxu0 0
      %2252 = vmatpush1.bf16.msra.mxu0 0
      %2253 = vmatprep.subr.bf16.mxu0 0
      %2254 = vmatpush1.bf16.msra.mxu0 0
      %2255 = vmatprep.subr.bf16.mxu0 0
      %2256 = vmatpush1.bf16.msra.mxu0 0
      %2257 = vmatprep.subr.bf16.mxu0 0
      %2258 = vmatpush1.bf16.msra.mxu0 0
      %2259 = vmatprep.mubr.bf16.mxu0 0
      %2260 = vmatmul.mubr.bf16.gmra.mrb[0].mxu0 %v2219
      %v2261 = vpop.f32.mrb[0].mxu0
      %v2262 = vadd.f32 0.0, %v2261
      %v2263 = vpop.f32.mrb[0].mxu0
      %v2264 = vadd.f32 0.0, %v2263
      %v2265 = vpop.f32.mrb[0].mxu0
      %v2266 = vpop.f32.mrb[0].mxu0
      %2267 = vdwg.mxu0
      %v2268 = vadd.f32 %v2204, %v2262
      %v2269 = vadd.f32 %v2205, %v2264
      %2270 = vrot.lane.b32.xlu0 %v526, 111
      %v2271 = vpop.permute.xlu0 %2270
      %2272 = vrot.lane.b32.xlu0 %v527, 111
      %v2273 = vpop.permute.xlu0 %2272
      %v2274 = vsel %vm1134, %v2271, %v2273
      %v2275 = vsel %vm1134, %v2273, %v2271
      %v2276 = vmul.f32 %v2274, %v1141
      %v2277 = vmul.f32 %v2275, %v1145
      %s2278 = scalar_lea.vmem %s4, 104
      %v2279 = vld [vmem:[%s2278] sm:$0xf]
      %v2280 = vpack.c.bf16 %v2276, %v2276
      %v2281 = vpack.c.bf16 %v2277, %v2277
      %v2283 = vsel %vm592, %v2279, 0
      %v2286 = vsel %vm596, %v2280, 0
      %v2289 = vsel %vm596, %v2281, 0
      %2291 = vmatprep.subr.bf16.mxu0 %v2289
      %2292 = vmatpush1.bf16.msra.mxu0 %v2286
      %2293 = vmatprep.subr.bf16.mxu0 0
      %2294 = vmatpush1.bf16.msra.mxu0 0
      %2295 = vmatprep.subr.bf16.mxu0 0
      %2296 = vmatpush1.bf16.msra.mxu0 0
      %2297 = vmatprep.subr.bf16.mxu0 0
      %2298 = vmatpush1.bf16.msra.mxu0 0
      %2299 = vmatprep.subr.bf16.mxu0 0
      %2300 = vmatpush1.bf16.msra.mxu0 0
      %2301 = vmatprep.subr.bf16.mxu0 0
      %2302 = vmatpush1.bf16.msra.mxu0 0
      %2303 = vmatprep.subr.bf16.mxu0 0
      %2304 = vmatpush1.bf16.msra.mxu0 0
      %2305 = vmatprep.subr.bf16.mxu0 0
      %2306 = vmatpush1.bf16.msra.mxu0 0
      %2307 = vmatprep.subr.bf16.mxu0 0
      %2308 = vmatpush1.bf16.msra.mxu0 0
      %2309 = vmatprep.subr.bf16.mxu0 0
      %2310 = vmatpush1.bf16.msra.mxu0 0
      %2311 = vmatprep.subr.bf16.mxu0 0
      %2312 = vmatpush1.bf16.msra.mxu0 0
      %2313 = vmatprep.subr.bf16.mxu0 0
      %2314 = vmatpush1.bf16.msra.mxu0 0
      %2315 = vmatprep.subr.bf16.mxu0 0
      %2316 = vmatpush1.bf16.msra.mxu0 0
      %2317 = vmatprep.subr.bf16.mxu0 0
      %2318 = vmatpush1.bf16.msra.mxu0 0
      %2319 = vmatprep.subr.bf16.mxu0 0
      %2320 = vmatpush1.bf16.msra.mxu0 0
      %2321 = vmatprep.subr.bf16.mxu0 0
      %2322 = vmatpush1.bf16.msra.mxu0 0
      %2323 = vmatprep.mubr.bf16.mxu0 0
      %2324 = vmatmul.mubr.bf16.gmra.mrb[0].mxu0 %v2283
      %v2325 = vpop.f32.mrb[0].mxu0
      %v2326 = vadd.f32 0.0, %v2325
      %v2327 = vpop.f32.mrb[0].mxu0
      %v2328 = vadd.f32 0.0, %v2327
      %v2329 = vpop.f32.mrb[0].mxu0
      %v2330 = vpop.f32.mrb[0].mxu0
      %2331 = vdwg.mxu0
      %v2332 = vadd.f32 %v2268, %v2326
      %v2333 = vadd.f32 %v2269, %v2328
      %p2334 = scmp.gt.s32.totalorder %s25, 0
      %s2335 = scalar_select %p2334, 1.0, 0.0
      %p2336 = scmp.lt.s32.totalorder %s25, 3
      %s2337 = scalar_select %p2336, 1.0, 0.0
      %v2338 = vstv %s2335
      %v2339 = vmul.f32 %v2338, %v1204
      %v2340 = vmul.f32 %v2338, %v1205
      %v2341 = vadd.f32 %v1768, %v2339
      %v2342 = vadd.f32 %v1769, %v2340
      %v2343 = vstv %s2337
      %v2344 = vmul.f32 %v2343, %v2332
      %v2345 = vmul.f32 %v2343, %v2333
      %v2346 = vadd.f32 %v2341, %v2344
      %v2347 = vadd.f32 %v2342, %v2345
      %2348 = vst [vmem:[%s476] sm:$0xff] %v2346
      %2349 = vst [vmem:[%s476 + $0x8] sm:$0xff] %v2347
      %v2350 = vadd.f32 %v2346, %v2347
      %2351 = vadd.xlane.f32.xlu0 %v2350
      %v2352 = vpop.xlane.xlu0 %2351
      %vm2353 = vcmask 7168
      %2354 = vst.msk [vmem:[%s484] sm:$0xff] %vm2353, %v2352
      %v2355 = vmul.f32 %v2346, %v2346
      %v2356 = vmul.f32 %v2347, %v2347
      %v2357 = vadd.f32 %v2355, %v2356
      %2358 = vadd.xlane.f32.xlu0 %v2357
      %v2359 = vpop.xlane.xlu0 %2358
      %2360 = vst.msk [vmem:[%s492] sm:$0xff] %vm2353, %v2359
      %p2361 = scmp.lt.s32.totalorder %s24, 1
      %s2362 = scalar_select %p2361, %s24, 1
      %p2363 = scmp.lt.s32.totalorder %s25, 3
      %s2364 = scalar_select %p2363, %s25, 3
      %s2365 = smul.addr %s2364, 2
      %s2366 = smul.addr %s2362, 8
      %s2367 = sadd.s32 %s2365, %s2366
      %s2368 = smul.addr %s2367, 8
      %s2369 = scalar_lea.vmem %s6, %s2368
      %p2370 = scmp.lt.s32.totalorder %s24, 1
      %s2371 = scalar_select %p2370, %s24, 1
      %p2372 = scmp.lt.s32.totalorder %s25, 3
      %s2373 = scalar_select %p2372, %s25, 3
      %s2374 = smul.addr %s2371, 4
      %s2375 = sadd.s32 %s2373, %s2374
      %s2376 = smul.addr %s2375, 8
      %s2377 = scalar_lea.vmem %s7, %s2376
      %p2378 = scmp.lt.s32.totalorder %s24, 1
      %s2379 = scalar_select %p2378, %s24, 1
      %p2380 = scmp.lt.s32.totalorder %s25, 3
      %s2381 = scalar_select %p2380, %s25, 3
      %s2382 = smul.addr %s2379, 4
      %s2383 = sadd.s32 %s2381, %s2382
      %s2384 = smul.addr %s2383, 8
      %s2385 = scalar_lea.vmem %s8, %s2384
      // Predicated region
      $region45: #{bottleneck_forward.4} parent=43 // pred_check
        %p2386 = pneg %p211
      $region46: #{bottleneck_forward.4} parent=43 // pred_check_branch
        %2388 = sbr.rel (%p2386) target = $region48
      $region47: #{bottleneck_forward.4} parent=43 // pred_region
        _
      $region48: #{bottleneck_forward.4} parent=43 // pred_fallthru
        _
      // Predicated region
      $region49: #{bottleneck_forward.4} parent=43 // pred_check
        %p2389 = pneg %p239
      $region50: #{bottleneck_forward.4} parent=43 // pred_check_branch
        %2391 = sbr.rel (%p2389) target = $region52
      $region51: #{bottleneck_forward.4} parent=43 // pred_region
        _
      $region52: #{bottleneck_forward.4} parent=43 // pred_fallthru
        _
      // Predicated region
      $region53: #{bottleneck_forward.4} parent=43 // pred_check
        %p2392 = pneg %p267
      $region54: #{bottleneck_forward.4} parent=43 // pred_check_branch
        %2394 = sbr.rel (%p2392) target = $region56
      $region55: #{bottleneck_forward.4} parent=43 // pred_region
        _
      $region56: #{bottleneck_forward.4} parent=43 // pred_fallthru
        _
    $region44: #{bottleneck_forward.4} parent=5 // pred_fallthru
      _
    %p2395 = scmp.le.s32.totalorder 2, %s15
    // Predicated region
    $region57: #{bottleneck_forward.4} parent=5 // pred_check
      %p2396 = pneg %p2395
    $region58: #{bottleneck_forward.4} parent=5 // pred_check_branch
      %2398 = sbr.rel (%p2396) target = $region60
    $region59: #{bottleneck_forward.4} parent=5 // pred_region
      %s2399 = ssub.s32 %s15, 2
      // Predicated region
      $region61: #{bottleneck_forward.4} parent=59 // pred_check
        %p2400 = pneg %p217
      $region62: #{bottleneck_forward.4} parent=59 // pred_check_branch
        %2402 = sbr.rel (%p2400) target = $region64
      $region63: #{bottleneck_forward.4} parent=59 // pred_region
        %p2403 = scmp.lt.s32.totalorder %s26, 1
        %s2404 = scalar_select %p2403, %s26, 1
        %p2405 = scmp.lt.s32.totalorder %s27, 3
        %s2406 = scalar_select %p2405, %s27, 3
        %s2407 = smul.addr %s2406, 2
        %s2408 = smul.addr %s2404, 8
        %s2409 = sadd.s32 %s2407, %s2408
        %s2410 = smul.addr %s2409, 8
        %s2411 = scalar_lea.vmem %s6, %s2410
      $region64: #{bottleneck_forward.4} parent=59 // pred_fallthru
        _
      // Predicated region
      $region65: #{bottleneck_forward.4} parent=59 // pred_check
        %p2412 = pneg %p245
      $region66: #{bottleneck_forward.4} parent=59 // pred_check_branch
        %2414 = sbr.rel (%p2412) target = $region68
      $region67: #{bottleneck_forward.4} parent=59 // pred_region
        %p2415 = scmp.lt.s32.totalorder %s26, 1
        %s2416 = scalar_select %p2415, %s26, 1
        %p2417 = scmp.lt.s32.totalorder %s27, 3
        %s2418 = scalar_select %p2417, %s27, 3
        %s2419 = smul.addr %s2416, 4
        %s2420 = sadd.s32 %s2418, %s2419
        %s2421 = smul.addr %s2420, 8
        %s2422 = scalar_lea.vmem %s7, %s2421
      $region68: #{bottleneck_forward.4} parent=59 // pred_fallthru
        _
      // Predicated region
      $region69: #{bottleneck_forward.4} parent=59 // pred_check
        %p2423 = pneg %p273
      $region70: #{bottleneck_forward.4} parent=59 // pred_check_branch
        %2425 = sbr.rel (%p2423) target = $region72
      $region71: #{bottleneck_forward.4} parent=59 // pred_region
        %p2426 = scmp.lt.s32.totalorder %s26, 1
        %s2427 = scalar_select %p2426, %s26, 1
        %p2428 = scmp.lt.s32.totalorder %s27, 3
        %s2429 = scalar_select %p2428, %s27, 3
        %s2430 = smul.addr %s2427, 4
        %s2431 = sadd.s32 %s2429, %s2430
        %s2432 = smul.addr %s2431, 8
        %s2433 = scalar_lea.vmem %s8, %s2432
      $region72: #{bottleneck_forward.4} parent=59 // pred_fallthru
        _
    $region60: #{bottleneck_forward.4} parent=5 // pred_fallthru
      _
  $region6: #{bottleneck_forward.4} parent=0 // loop_footer
    %s19 = sadd.s32 1, %s15
  $region7: #{bottleneck_forward.4} parent=0 // loop_footer_branch
    %14 = sbr.rel target = $region3
  $region8: #{bottleneck_forward.4} parent=0 // loop_exit
    _

</llo_original>
